<compile_context>
chip_gen: v7x
topology: tpu7x:2x2x1
jax: 0.10.0
libtpu: 0.0.40
codegen_flags: <defaults>
</compile_context>

<pallas_src>
import functools

import jax
import jax.numpy as jnp
from jax import lax
from jax.experimental import pallas as pl
from jax.experimental.pallas import tpu as pltpu


# VMEM budget: size tiles assuming ~32 MiB usable (v7x scoped default; also the
# default on v6e). 512^2 f32 tiles are ~1 MiB each, x2 for double buffering.
_VMEM_LIMIT = 32 * 1024 * 1024
_TILE_CAP = 512


# ----------------------------------------------------------------------------
# Tiled linear (matmul) kernels
# ----------------------------------------------------------------------------
def _matmul_kernel(x_ref, w_ref, o_ref, acc_ref):
    @pl.when(pl.program_id(2) == 0)
    def _():
        acc_ref[...] = jnp.zeros_like(acc_ref)

    acc_ref[...] += jnp.dot(x_ref[...], w_ref[...],
                            preferred_element_type=jnp.float32)

    @pl.when(pl.program_id(2) == pl.num_programs(2) - 1)
    def _():
        o_ref[...] = acc_ref[...].astype(o_ref.dtype)


def _matmul_bias_kernel(x_ref, w_ref, b_ref, o_ref, acc_ref):
    @pl.when(pl.program_id(2) == 0)
    def _():
        acc_ref[...] = jnp.zeros_like(acc_ref)

    acc_ref[...] += jnp.dot(x_ref[...], w_ref[...],
                            preferred_element_type=jnp.float32)

    @pl.when(pl.program_id(2) == pl.num_programs(2) - 1)
    def _():
        o_ref[...] = (acc_ref[...] +
                      b_ref[...].astype(jnp.float32)).astype(o_ref.dtype)


def _pick_tile(dim, cap, align):
    """Largest multiple of `align` that divides `dim` and is <= cap, else dim."""
    if dim <= cap:
        return dim
    t = (cap // align) * align
    while t >= align:
        if dim % t == 0:
            return t
        t -= align
    return dim  # fall back to the full dim (always a legal block)


def pallas_linear(x2d, w, b=None):
    """out = x2d @ w (+ b).  x2d: (M, K), w: (K, Nout), b: (Nout,) or None."""
    M, K = x2d.shape
    _, Nout = w.shape
    tm = _pick_tile(M, _TILE_CAP, 8)
    tn = _pick_tile(Nout, _TILE_CAP, 128)
    tk = _pick_tile(K, _TILE_CAP, 128)
    grid = (M // tm, Nout // tn, K // tk)

    isize = jnp.dtype(x2d.dtype).itemsize
    cost = pl.CostEstimate(
        flops=2 * M * K * Nout,
        transcendentals=0,
        bytes_accessed=(M * K + K * Nout + M * Nout
                        + (0 if b is None else Nout)) * isize)

    in_specs = [
        pl.BlockSpec((tm, tk), lambda i, j, k: (i, k)),
        pl.BlockSpec((tk, tn), lambda i, j, k: (k, j)),
    ]
    args = (x2d, w)
    kernel = _matmul_kernel
    if b is not None:
        # Bias tile is (1, tn): resident per output tile, no full-row re-DMA.
        in_specs.append(pl.BlockSpec((1, tn), lambda i, j, k: (0, j)))
        args = (x2d, w, b.reshape(1, Nout))
        kernel = _matmul_bias_kernel

    return pl.pallas_call(
        kernel,
        out_shape=jax.ShapeDtypeStruct((M, Nout), x2d.dtype),
        grid=grid,
        in_specs=in_specs,
        out_specs=pl.BlockSpec((tm, tn), lambda i, j, k: (i, j)),
        scratch_shapes=[pltpu.VMEM((tm, tn), jnp.float32)],
        compiler_params=pltpu.CompilerParams(
            dimension_semantics=("parallel", "parallel", "arbitrary"),
            vmem_limit_bytes=_VMEM_LIMIT),
        cost_estimate=cost,
    )(*args)


# ----------------------------------------------------------------------------
# Attention core: softmax(scale * q k^T) v, reading q/k/v straight from the
# (B, N, 3C) qkv slab and writing the merged-head (B, N, C) output.
# ----------------------------------------------------------------------------
def _attention_kernel(q_ref, k_ref, v_ref, o_ref, *, scale, heads_per_blk,
                      head_dim):
    q_all = q_ref[...]          # (N, Hblk*hd), input dtype
    k_all = k_ref[...]
    v_all = v_ref[...]

    outs = []
    for h in range(heads_per_blk):          # static unrolled loop, Hblk small
        lo = h * head_dim
        hi = lo + head_dim
        q = q_all[:, lo:hi].astype(jnp.bfloat16)   # bf16 MXU operands
        k = k_all[:, lo:hi].astype(jnp.bfloat16)
        v = v_all[:, lo:hi].astype(jnp.bfloat16)

        # q @ k^T without materializing k.T: contract last dim vs last dim.
        s = lax.dot_general(
            q, k, dimension_numbers=(((1,), (1,)), ((), ())),
            preferred_element_type=jnp.float32)            # (N, N) f32
        s = s * scale                                      # f32 softmax math
        s = s - jnp.max(s, axis=-1, keepdims=True)
        p = jnp.exp(s)
        p = p * pl.reciprocal(jnp.sum(p, axis=-1, keepdims=True), approx=True)

        o = lax.dot_general(
            p.astype(jnp.bfloat16), v,
            dimension_numbers=(((1,), (0,)), ((), ())),
            preferred_element_type=jnp.float32)            # (N, hd) f32
        outs.append(o)

    # Lane-dense (N, Hblk*hd) store into the merged-head output slab.
    o_ref[...] = jnp.concatenate(outs, axis=-1).astype(o_ref.dtype)


def _heads_per_block(num_heads, head_dim):
    """Smallest head block whose width is a multiple of 128 lanes."""
    for hb in range(1, num_heads + 1):
        if num_heads % hb == 0 and (hb * head_dim) % 128 == 0:
            return hb
    return num_heads  # fallback: all heads at once (block width == C)


def multihead_attention_core(qkv, B, N, C, num_heads, scale):
    """qkv: (B, N, 3C), last dim laid out [q|k|v] x heads x head_dim.
    Returns (B, N, C) with heads merged (head split/merge done via index_maps).
    """
    head_dim = C // num_heads
    hblk = _heads_per_block(num_heads, head_dim)
    nhb = num_heads // hblk            # number of head blocks per q/k/v chunk
    bh = hblk * head_dim               # columns per head block

    q_spec = pl.BlockSpec((None, N, bh), lambda b, j: (b, 0, j))
    k_spec = pl.BlockSpec((None, N, bh), lambda b, j: (b, 0, nhb + j))
    v_spec = pl.BlockSpec((None, N, bh), lambda b, j: (b, 0, 2 * nhb + j))
    o_spec = pl.BlockSpec((None, N, bh), lambda b, j: (b, 0, j))

    kernel = functools.partial(_attention_kernel, scale=scale,
                               heads_per_blk=hblk, head_dim=head_dim)
    isize = jnp.dtype(qkv.dtype).itemsize
    cost = pl.CostEstimate(
        flops=4 * B * num_heads * N * N * head_dim,
        transcendentals=B * num_heads * N * N,
        bytes_accessed=(3 * B * N * C + B * N * C) * isize)

    return pl.pallas_call(
        kernel,
        out_shape=jax.ShapeDtypeStruct((B, N, C), qkv.dtype),
        grid=(B, nhb),
        in_specs=[q_spec, k_spec, v_spec],
        out_specs=o_spec,
        compiler_params=pltpu.CompilerParams(
            dimension_semantics=("parallel", "parallel"),
            vmem_limit_bytes=_VMEM_LIMIT),
        cost_estimate=cost,
    )(qkv, qkv, qkv)


# ----------------------------------------------------------------------------
# Full Attention module forward (Pallas-backed)
# ----------------------------------------------------------------------------
def attention_forward(x, params, num_heads):
    B, N, C = x.shape
    head_dim = C // num_heads
    scale = head_dim ** (-0.5)

    # qkv projection (tiled Pallas matmul, no bias).
    qkv = pallas_linear(x.reshape(B * N, C), params["w_qkv"])      # (B*N, 3C)
    qkv = qkv.reshape(B, N, 3 * C)                                  # free reshape

    # Per-head attention; head split/merge folded into BlockSpec index_maps.
    o = multihead_attention_core(qkv, B, N, C, num_heads, scale)    # (B, N, C)

    # Output projection (tiled Pallas matmul, with bias).
    out = pallas_linear(o.reshape(B * N, C), params["w_proj"],
                        params["b_proj"])                           # (B*N, C)
    return out.reshape(B, N, C)


# Pure-JAX (f32) reference for correctness checking.
def attention_reference(x, params, num_heads):
    B, N, C = x.shape
    hd = C // num_heads
    scale = hd ** (-0.5)
    qkv = x @ params["w_qkv"]
    qkv = qkv.reshape(B, N, 3, num_heads, hd).transpose(2, 0, 3, 1, 4)
    q, k, v = qkv[0], qkv[1], qkv[2]
    attn = jax.nn.softmax((q * scale) @ jnp.swapaxes(k, -2, -1), axis=-1)
    o = (attn @ v).transpose(0, 2, 1, 3).reshape(B, N, C)
    return o @ params["w_proj"] + params["b_proj"]


if __name__ == "__main__":
    # Small, tile-friendly shapes consistent with the module (dim % heads == 0).
    B, N, C = 2, 128, 256
    num_heads = 4                      # head_dim = 64 -> 2 heads per grid step

    key = jax.random.PRNGKey(0)
    kx, kqkv, kproj_w, kproj_b = jax.random.split(key, 4)

    x = jax.random.normal(kx, (B, N, C), dtype=jnp.float32)

    # Synthetic params (qkv has no bias; proj has bias), stored for `x @ W`.
    params = {
        "w_qkv": jax.random.normal(kqkv, (C, 3 * C), dtype=jnp.float32) * 0.05,
        "w_proj": jax.random.normal(kproj_w, (C, C), dtype=jnp.float32) * 0.05,
        "b_proj": jax.random.normal(kproj_b, (C,), dtype=jnp.float32) * 0.05,
    }

    out = jax.jit(attention_forward, static_argnums=2)(x, params, num_heads)
    out = jax.block_until_ready(out)

    ref = attention_reference(x, params, num_heads)
    assert out.shape == (B, N, C)
    # Tolerance reflects bf16 MXU operands inside the attention kernel
    # (f32 accumulation / f32 softmax), per the performance guidance.
    assert jnp.allclose(out, ref, atol=1e-2, rtol=2e-2), "mismatch vs reference"

    print("KERNEL_OK")
</pallas_src>

<mosaic_0001>
module attributes {stable_mosaic.version = 11 : i64} {
  func.func @_matmul_bias_kernel(%arg0: i32, %arg1: i32, %arg2: i32, %arg3: memref<256x256xf32, #tpu.memory_space<vmem>>, %arg4: memref<256x256xf32, #tpu.memory_space<vmem>>, %arg5: memref<1x256xf32, #tpu.memory_space<vmem>>, %arg6: memref<256x256xf32, #tpu.memory_space<vmem>>, %arg7: memref<256x256xf32, #tpu.memory_space<vmem>>) attributes {dimension_semantics = [#tpu.dimension_semantics<parallel>, #tpu.dimension_semantics<parallel>, #tpu.dimension_semantics<arbitrary>], iteration_bounds = array<i64: 1, 1, 1>, scalar_prefetch = 0 : i64, scratch_operands = 1 : i64, tpu.core_type = #tpu.core_type<tc>, window_params = [{transform_indices = @transform_0, window_bounds = array<i64: 256, 256>}, {transform_indices = @transform_1, window_bounds = array<i64: 256, 256>}, {transform_indices = @transform_2, window_bounds = array<i64: 1, 256>}, {transform_indices = @transform_3, window_bounds = array<i64: 256, 256>}]} {
    %c0_i32 = arith.constant 0 : i32
    %0 = arith.cmpi eq, %arg2, %c0_i32 : i32
    %1 = arith.extui %0 : i1 to i32
    %c0_i32_0 = arith.constant 0 : i32
    %2 = arith.cmpi ne, %1, %c0_i32_0 : i32
    scf.if %2 {
      %cst_10 = arith.constant 0.000000e+00 : f32
      %12 = vector.broadcast %cst_10 : f32 to vector<256x256xf32>
      %c0_11 = arith.constant 0 : index
      %c0_12 = arith.constant 0 : index
      %13 = vector.load %arg7[%c0_11, %c0_12] : memref<256x256xf32, #tpu.memory_space<vmem>>, vector<256x256xf32>
      tpu.vector_store %arg7[%c0_11, %c0_12], %12 {strides = array<i32>} : memref<256x256xf32, #tpu.memory_space<vmem>>, vector<256x256xf32>,
    } else {
    }
    %c0 = arith.constant 0 : index
    %c0_1 = arith.constant 0 : index
    %3 = vector.load %arg7[%c0, %c0_1] : memref<256x256xf32, #tpu.memory_space<vmem>>, vector<256x256xf32>
    %c0_2 = arith.constant 0 : index
    %c0_3 = arith.constant 0 : index
    %4 = vector.load %arg3[%c0_2, %c0_3] : memref<256x256xf32, #tpu.memory_space<vmem>>, vector<256x256xf32>
    %c0_4 = arith.constant 0 : index
    %c0_5 = arith.constant 0 : index
    %5 = vector.load %arg4[%c0_4, %c0_5] : memref<256x256xf32, #tpu.memory_space<vmem>>, vector<256x256xf32>
    %cst = arith.constant dense<0.000000e+00> : vector<256x256xf32>
    %6 = tpu.matmul %4, %5, %cst {dimension_numbers = #tpu.dot_dimension_numbers<[1], [0], [0], [1], [0, 0, 1, 1], [], []>} : vector<256x256xf32>, vector<256x256xf32>, vector<256x256xf32> -> vector<256x256xf32>
    %7 = arith.addf %3, %6 : vector<256x256xf32>
    %c0_6 = arith.constant 0 : index
    %c0_7 = arith.constant 0 : index
    %8 = vector.load %arg7[%c0_6, %c0_7] : memref<256x256xf32, #tpu.memory_space<vmem>>, vector<256x256xf32>
    tpu.vector_store %arg7[%c0_6, %c0_7], %7 {strides = array<i32>} : memref<256x256xf32, #tpu.memory_space<vmem>>, vector<256x256xf32>,
    %c0_i32_8 = arith.constant 0 : i32
    %9 = arith.cmpi eq, %arg2, %c0_i32_8 : i32
    %10 = arith.extui %9 : i1 to i32
    %c0_i32_9 = arith.constant 0 : i32
    %11 = arith.cmpi ne, %10, %c0_i32_9 : i32
    scf.if %11 {
      %c0_10 = arith.constant 0 : index
      %c0_11 = arith.constant 0 : index
      %12 = vector.load %arg7[%c0_10, %c0_11] : memref<256x256xf32, #tpu.memory_space<vmem>>, vector<256x256xf32>
      %c0_12 = arith.constant 0 : index
      %c0_13 = arith.constant 0 : index
      %13 = vector.load %arg5[%c0_12, %c0_13] : memref<1x256xf32, #tpu.memory_space<vmem>>, vector<1x256xf32>
      %14 = vector.broadcast %13 : vector<1x256xf32> to vector<256x256xf32>
      %15 = arith.addf %12, %14 : vector<256x256xf32>
      %c0_14 = arith.constant 0 : index
      %c0_15 = arith.constant 0 : index
      %16 = vector.load %arg6[%c0_14, %c0_15] : memref<256x256xf32, #tpu.memory_space<vmem>>, vector<256x256xf32>
      tpu.vector_store %arg6[%c0_14, %c0_15], %15 {strides = array<i32>} : memref<256x256xf32, #tpu.memory_space<vmem>>, vector<256x256xf32>,
    } else {
    }
    return
  }
  func.func @transform_0(%arg0: i32, %arg1: i32, %arg2: i32) -> (i32, i32) {
    %c0_i32 = arith.constant 0 : i32
    return %arg0, %arg2 : i32, i32
  }
  func.func @transform_1(%arg0: i32, %arg1: i32, %arg2: i32) -> (i32, i32) {
    %c0_i32 = arith.constant 0 : i32
    return %arg2, %arg1 : i32, i32
  }
  func.func @transform_2(%arg0: i32, %arg1: i32, %arg2: i32) -> (i32, i32) {
    %c0_i32 = arith.constant 0 : i32
    %c0_i32_0 = arith.constant 0 : i32
    return %c0_i32, %arg1 : i32, i32
  }
  func.func @transform_3(%arg0: i32, %arg1: i32, %arg2: i32) -> (i32, i32) {
    %c0_i32 = arith.constant 0 : i32
    return %arg0, %arg1 : i32, i32
  }
}

module attributes {stable_mosaic.version = 11 : i64} {
  func.func @_attention_kernel(%arg0: i32, %arg1: i32, %arg2: memref<1x128x128xf32, #tpu.memory_space<vmem>>, %arg3: memref<1x128x128xf32, #tpu.memory_space<vmem>>, %arg4: memref<1x128x128xf32, #tpu.memory_space<vmem>>, %arg5: memref<1x128x128xf32, #tpu.memory_space<vmem>>) attributes {dimension_semantics = [#tpu.dimension_semantics<parallel>, #tpu.dimension_semantics<parallel>], iteration_bounds = array<i64: 2, 2>, scalar_prefetch = 0 : i64, scratch_operands = 0 : i64, tpu.core_type = #tpu.core_type<tc>, window_params = [{transform_indices = @transform_0, window_bounds = array<i64: 1, 128, 128>}, {transform_indices = @transform_1, window_bounds = array<i64: 1, 128, 128>}, {transform_indices = @transform_2, window_bounds = array<i64: 1, 128, 128>}, {transform_indices = @transform_3, window_bounds = array<i64: 1, 128, 128>}]} {
    %c0 = arith.constant 0 : index
    %c0_0 = arith.constant 0 : index
    %c0_1 = arith.constant 0 : index
    %0 = vector.load %arg2[%c0, %c0_0, %c0_1] : memref<1x128x128xf32, #tpu.memory_space<vmem>>, vector<1x128x128xf32>
    %1 = vector.shape_cast %0 : vector<1x128x128xf32> to vector<128x128xf32>
    %c0_2 = arith.constant 0 : index
    %c0_3 = arith.constant 0 : index
    %c0_4 = arith.constant 0 : index
    %2 = vector.load %arg3[%c0_2, %c0_3, %c0_4] : memref<1x128x128xf32, #tpu.memory_space<vmem>>, vector<1x128x128xf32>
    %3 = vector.shape_cast %2 : vector<1x128x128xf32> to vector<128x128xf32>
    %c0_5 = arith.constant 0 : index
    %c0_6 = arith.constant 0 : index
    %c0_7 = arith.constant 0 : index
    %4 = vector.load %arg4[%c0_5, %c0_6, %c0_7] : memref<1x128x128xf32, #tpu.memory_space<vmem>>, vector<1x128x128xf32>
    %5 = vector.shape_cast %4 : vector<1x128x128xf32> to vector<128x128xf32>
    %6 = vector.extract_strided_slice %1 {offsets = [0, 0], sizes = [128, 64], strides = [1, 1]} : vector<128x128xf32> to vector<128x64xf32>
    %7 = arith.truncf %6 : vector<128x64xf32> to vector<128x64xbf16>
    %8 = vector.extract_strided_slice %3 {offsets = [0, 0], sizes = [128, 64], strides = [1, 1]} : vector<128x128xf32> to vector<128x64xf32>
    %9 = arith.truncf %8 : vector<128x64xf32> to vector<128x64xbf16>
    %10 = vector.extract_strided_slice %5 {offsets = [0, 0], sizes = [128, 64], strides = [1, 1]} : vector<128x128xf32> to vector<128x64xf32>
    %11 = arith.truncf %10 : vector<128x64xf32> to vector<128x64xbf16>
    %cst = arith.constant dense<0.000000e+00> : vector<128x128xf32>
    %12 = tpu.matmul %7, %9, %cst {dimension_numbers = #tpu.dot_dimension_numbers<[1], [1], [0], [0], [0, 0, 1, 0], [], []>} : vector<128x64xbf16>, vector<128x64xbf16>, vector<128x128xf32> -> vector<128x128xf32>
    %cst_8 = arith.constant 1.250000e-01 : f32
    %13 = vector.broadcast %cst_8 : f32 to vector<128x128xf32>
    %14 = arith.mulf %12, %13 : vector<128x128xf32>
    %cst_9 = arith.constant dense<0xFF800000> : vector<128xf32>
    %15 = vector.multi_reduction <maximumf>, %14, %cst_9 [1] : vector<128x128xf32> to vector<128xf32>
    %16 = vector.shape_cast %15 : vector<128xf32> to vector<128x1xf32>
    %17 = vector.broadcast %16 : vector<128x1xf32> to vector<128x128xf32>
    %18 = arith.subf %14, %17 : vector<128x128xf32>
    %19 = math.exp %18 : vector<128x128xf32>
    %cst_10 = arith.constant dense<0.000000e+00> : vector<128xf32>
    %20 = vector.multi_reduction <add>, %19, %cst_10 [1] : vector<128x128xf32> to vector<128xf32>
    %21 = vector.shape_cast %20 : vector<128xf32> to vector<128x1xf32>
    %22 = tpu.reciprocal %21 {approx = true} : vector<128x1xf32> -> vector<128x1xf32>
    %23 = vector.broadcast %22 : vector<128x1xf32> to vector<128x128xf32>
    %24 = arith.mulf %19, %23 : vector<128x128xf32>
    %25 = arith.truncf %24 : vector<128x128xf32> to vector<128x128xbf16>
    %cst_11 = arith.constant dense<0.000000e+00> : vector<128x64xf32>
    %26 = tpu.matmul %25, %11, %cst_11 {dimension_numbers = #tpu.dot_dimension_numbers<[1], [0], [0], [1], [0, 0, 1, 1], [], []>} : vector<128x128xbf16>, vector<128x64xbf16>, vector<128x64xf32> -> vector<128x64xf32>
    %27 = vector.extract_strided_slice %1 {offsets = [0, 64], sizes = [128, 64], strides = [1, 1]} : vector<128x128xf32> to vector<128x64xf32>
    %28 = arith.truncf %27 : vector<128x64xf32> to vector<128x64xbf16>
    %29 = vector.extract_strided_slice %3 {offsets = [0, 64], sizes = [128, 64], strides = [1, 1]} : vector<128x128xf32> to vector<128x64xf32>
    %30 = arith.truncf %29 : vector<128x64xf32> to vector<128x64xbf16>
    %31 = vector.extract_strided_slice %5 {offsets = [0, 64], sizes = [128, 64], strides = [1, 1]} : vector<128x128xf32> to vector<128x64xf32>
    %32 = arith.truncf %31 : vector<128x64xf32> to vector<128x64xbf16>
    %cst_12 = arith.constant dense<0.000000e+00> : vector<128x128xf32>
    %33 = tpu.matmul %28, %30, %cst_12 {dimension_numbers = #tpu.dot_dimension_numbers<[1], [1], [0], [0], [0, 0, 1, 0], [], []>} : vector<128x64xbf16>, vector<128x64xbf16>, vector<128x128xf32> -> vector<128x128xf32>
    %cst_13 = arith.constant 1.250000e-01 : f32
    %34 = vector.broadcast %cst_13 : f32 to vector<128x128xf32>
    %35 = arith.mulf %33, %34 : vector<128x128xf32>
    %cst_14 = arith.constant dense<0xFF800000> : vector<128xf32>
    %36 = vector.multi_reduction <maximumf>, %35, %cst_14 [1] : vector<128x128xf32> to vector<128xf32>
    %37 = vector.shape_cast %36 : vector<128xf32> to vector<128x1xf32>
    %38 = vector.broadcast %37 : vector<128x1xf32> to vector<128x128xf32>
    %39 = arith.subf %35, %38 : vector<128x128xf32>
    %40 = math.exp %39 : vector<128x128xf32>
    %cst_15 = arith.constant dense<0.000000e+00> : vector<128xf32>
    %41 = vector.multi_reduction <add>, %40, %cst_15 [1] : vector<128x128xf32> to vector<128xf32>
    %42 = vector.shape_cast %41 : vector<128xf32> to vector<128x1xf32>
    %43 = tpu.reciprocal %42 {approx = true} : vector<128x1xf32> -> vector<128x1xf32>
    %44 = vector.broadcast %43 : vector<128x1xf32> to vector<128x128xf32>
    %45 = arith.mulf %40, %44 : vector<128x128xf32>
    %46 = arith.truncf %45 : vector<128x128xf32> to vector<128x128xbf16>
    %cst_16 = arith.constant dense<0.000000e+00> : vector<128x64xf32>
    %47 = tpu.matmul %46, %32, %cst_16 {dimension_numbers = #tpu.dot_dimension_numbers<[1], [0], [0], [1], [0, 0, 1, 1], [], []>} : vector<128x128xbf16>, vector<128x64xbf16>, vector<128x64xf32> -> vector<128x64xf32>
    %48 = tpu.concatenate %26, %47 in 1 : vector<128x64xf32>, vector<128x64xf32> -> vector<128x128xf32>
    %c0_17 = arith.constant 0 : index
    %c0_18 = arith.constant 0 : index
    %c0_19 = arith.constant 0 : index
    %49 = vector.load %arg5[%c0_17, %c0_18, %c0_19] : memref<1x128x128xf32, #tpu.memory_space<vmem>>, vector<1x128x128xf32>
    %50 = vector.shape_cast %49 : vector<1x128x128xf32> to vector<128x128xf32>
    %51 = vector.shape_cast %48 : vector<128x128xf32> to vector<1x128x128xf32>
    tpu.vector_store %arg5[%c0_17, %c0_18, %c0_19], %51 {strides = array<i32>} : memref<1x128x128xf32, #tpu.memory_space<vmem>>, vector<1x128x128xf32>,
    return
  }
  func.func @transform_0(%arg0: i32, %arg1: i32) -> (i32, i32, i32) {
    %c0_i32 = arith.constant 0 : i32
    %c0_i32_0 = arith.constant 0 : i32
    return %arg0, %c0_i32, %arg1 : i32, i32, i32
  }
  func.func @transform_1(%arg0: i32, %arg1: i32) -> (i32, i32, i32) {
    %c2_i32 = arith.constant 2 : i32
    %0 = arith.addi %c2_i32, %arg1 : i32
    %c0_i32 = arith.constant 0 : i32
    %c0_i32_0 = arith.constant 0 : i32
    return %arg0, %c0_i32, %0 : i32, i32, i32
  }
  func.func @transform_2(%arg0: i32, %arg1: i32) -> (i32, i32, i32) {
    %c4_i32 = arith.constant 4 : i32
    %0 = arith.addi %c4_i32, %arg1 : i32
    %c0_i32 = arith.constant 0 : i32
    %c0_i32_0 = arith.constant 0 : i32
    return %arg0, %c0_i32, %0 : i32, i32, i32
  }
  func.func @transform_3(%arg0: i32, %arg1: i32) -> (i32, i32, i32) {
    %c0_i32 = arith.constant 0 : i32
    %c0_i32_0 = arith.constant 0 : i32
    return %arg0, %c0_i32, %arg1 : i32, i32, i32
  }
}

module attributes {stable_mosaic.version = 11 : i64} {
  func.func @_matmul_kernel(%arg0: i32, %arg1: i32, %arg2: i32, %arg3: memref<256x256xf32, #tpu.memory_space<vmem>>, %arg4: memref<256x384xf32, #tpu.memory_space<vmem>>, %arg5: memref<256x384xf32, #tpu.memory_space<vmem>>, %arg6: memref<256x384xf32, #tpu.memory_space<vmem>>) attributes {dimension_semantics = [#tpu.dimension_semantics<parallel>, #tpu.dimension_semantics<parallel>, #tpu.dimension_semantics<arbitrary>], iteration_bounds = array<i64: 1, 2, 1>, scalar_prefetch = 0 : i64, scratch_operands = 1 : i64, tpu.core_type = #tpu.core_type<tc>, window_params = [{transform_indices = @transform_0, window_bounds = array<i64: 256, 256>}, {transform_indices = @transform_1, window_bounds = array<i64: 256, 384>}, {transform_indices = @transform_2, window_bounds = array<i64: 256, 384>}]} {
    %c0_i32 = arith.constant 0 : i32
    %0 = arith.cmpi eq, %arg2, %c0_i32 : i32
    %1 = arith.extui %0 : i1 to i32
    %c0_i32_0 = arith.constant 0 : i32
    %2 = arith.cmpi ne, %1, %c0_i32_0 : i32
    scf.if %2 {
      %cst_10 = arith.constant 0.000000e+00 : f32
      %12 = vector.broadcast %cst_10 : f32 to vector<256x384xf32>
      %c0_11 = arith.constant 0 : index
      %c0_12 = arith.constant 0 : index
      %13 = vector.load %arg6[%c0_11, %c0_12] : memref<256x384xf32, #tpu.memory_space<vmem>>, vector<256x384xf32>
      tpu.vector_store %arg6[%c0_11, %c0_12], %12 {strides = array<i32>} : memref<256x384xf32, #tpu.memory_space<vmem>>, vector<256x384xf32>,
    } else {
    }
    %c0 = arith.constant 0 : index
    %c0_1 = arith.constant 0 : index
    %3 = vector.load %arg6[%c0, %c0_1] : memref<256x384xf32, #tpu.memory_space<vmem>>, vector<256x384xf32>
    %c0_2 = arith.constant 0 : index
    %c0_3 = arith.constant 0 : index
    %4 = vector.load %arg3[%c0_2, %c0_3] : memref<256x256xf32, #tpu.memory_space<vmem>>, vector<256x256xf32>
    %c0_4 = arith.constant 0 : index
    %c0_5 = arith.constant 0 : index
    %5 = vector.load %arg4[%c0_4, %c0_5] : memref<256x384xf32, #tpu.memory_space<vmem>>, vector<256x384xf32>
    %cst = arith.constant dense<0.000000e+00> : vector<256x384xf32>
    %6 = tpu.matmul %4, %5, %cst {dimension_numbers = #tpu.dot_dimension_numbers<[1], [0], [0], [1], [0, 0, 1, 1], [], []>} : vector<256x256xf32>, vector<256x384xf32>, vector<256x384xf32> -> vector<256x384xf32>
    %7 = arith.addf %3, %6 : vector<256x384xf32>
    %c0_6 = arith.constant 0 : index
    %c0_7 = arith.constant 0 : index
    %8 = vector.load %arg6[%c0_6, %c0_7] : memref<256x384xf32, #tpu.memory_space<vmem>>, vector<256x384xf32>
    tpu.vector_store %arg6[%c0_6, %c0_7], %7 {strides = array<i32>} : memref<256x384xf32, #tpu.memory_space<vmem>>, vector<256x384xf32>,
    %c0_i32_8 = arith.constant 0 : i32
    %9 = arith.cmpi eq, %arg2, %c0_i32_8 : i32
    %10 = arith.extui %9 : i1 to i32
    %c0_i32_9 = arith.constant 0 : i32
    %11 = arith.cmpi ne, %10, %c0_i32_9 : i32
    scf.if %11 {
      %c0_10 = arith.constant 0 : index
      %c0_11 = arith.constant 0 : index
      %12 = vector.load %arg6[%c0_10, %c0_11] : memref<256x384xf32, #tpu.memory_space<vmem>>, vector<256x384xf32>
      %c0_12 = arith.constant 0 : index
      %c0_13 = arith.constant 0 : index
      %13 = vector.load %arg5[%c0_12, %c0_13] : memref<256x384xf32, #tpu.memory_space<vmem>>, vector<256x384xf32>
      tpu.vector_store %arg5[%c0_12, %c0_13], %12 {strides = array<i32>} : memref<256x384xf32, #tpu.memory_space<vmem>>, vector<256x384xf32>,
    } else {
    }
    return
  }
  func.func @transform_0(%arg0: i32, %arg1: i32, %arg2: i32) -> (i32, i32) {
    %c0_i32 = arith.constant 0 : i32
    return %arg0, %arg2 : i32, i32
  }
  func.func @transform_1(%arg0: i32, %arg1: i32, %arg2: i32) -> (i32, i32) {
    %c0_i32 = arith.constant 0 : i32
    return %arg2, %arg1 : i32, i32
  }
  func.func @transform_2(%arg0: i32, %arg1: i32, %arg2: i32) -> (i32, i32) {
    %c0_i32 = arith.constant 0 : i32
    return %arg0, %arg1 : i32, i32
  }
}

</mosaic_0001>

<llo_original>
// kernel: attention_forward.4
$region0: #{attention_forward.4}
  #allocation0 [shape = 'u32[]', space=smem, size = 0x4, offset = 0x4, fixed_abs, tag = 'smem constant byte address 0x4 - core index']
  #allocation1 [shape = 'u32[144,128]{1,0:T(1,128)}', space=vmem, size = 0x12000, scoped, tag = 'internal scratch']
  %s0 = inlined_call_operand.vmem [shape: f32[2,128,768], index: 0, kind: input, shape index: {}, may-alias: {0,1,2}]
  %s1 = inlined_call_operand.vmem [shape: f32[2,128,768], index: 1, kind: input, shape index: {}, may-alias: {0,1,2}]
  %s2 = inlined_call_operand.vmem [shape: f32[2,128,768], index: 2, kind: input, shape index: {}, may-alias: {0,1,2}]
  %s3 = inlined_call_operand.vmem [shape: f32[2,128,256], index: 3, kind: output, shape index: {}]
  %s4 = sld [smem:[#allocation0]]
  $region193: #{attention_forward.4} parent=0
    _
  %s6 = ssub.s32 1, %s4
  %s7 = scalar_select 0, %s6, %s4
  $region1: #{attention_forward.4} parent=0
    #allocation2 [shape = 'u8[131072]{0}', space=vmem, size = 0x20000, scoped, tag = 'input window, operand 0']
    #allocation3 [shape = 'u8[131072]{0}', space=vmem, size = 0x20000, scoped, tag = 'input window, operand 1']
    #allocation4 [shape = 'u8[131072]{0}', space=vmem, size = 0x20000, scoped, tag = 'input window, operand 2']
    #allocation5 [shape = 'u8[131072]{0}', space=vmem, size = 0x20000, scoped, tag = 'output window, operand 0']
    loop: start=0, step=1, limit=6
    $region2: #{attention_forward.4} parent=1 // loop_pre_header
      _
    $region3: #{attention_forward.4} parent=1 // loop_header
      %s9 = sphi 0, %s13
      %p10 = scmp.ge.s32.totalorder %s9, 6
      %s16 = sphi 0, %s28
      %s17 = sphi 0, %s24
      %s18 = sphi 0, %s16
      %s19 = sphi 0, %s17
      %s20 = sphi 0, %s18
      %s21 = sphi 0, %s19
      %s33 = sphi 0, %s35
      %s36 = sphi 0, %s33
      %s37 = sphi 0, %s36
      %s53 = sphi 0, %s37
      %s63 = sphi 0, %s65
      %s66 = sphi 0, %s63
      %s67 = sphi 0, %s66
      %s83 = sphi 0, %s67
      %s93 = sphi 0, %s95
      %s96 = sphi 0, %s93
      %s97 = sphi 0, %s96
      %s113 = sphi 0, %s97
      %s121 = sphi 0, %s123
      %s124 = sphi 0, %s121
      %s125 = sphi 0, %s124
      %s141 = sphi 0, %s125
    $region4: #{attention_forward.4} parent=1 // loop_header_branch
      %12 = sbr.rel (%p10) target = $region8
    $region5: #{attention_forward.4} parent=1 // loop_body
      %s14 = ssub.s32 %s9, 1
      %s15 = ssub.s32 %s9, 2
      %s22 = sadd.s32 1, %s17
      %p23 = scmp.ge.s32.totalorder %s22, 2
      %s24 = scalar_select %p23, 0, %s22
      %s25 = sadd.s32 1, %s16
      %s26 = scalar_select %p23, %s25, %s16
      %p27 = scmp.ge.s32.totalorder %s26, 2
      %s28 = scalar_select %p27, 0, %s26
      %s29 = ssub.s32 %s16, %s28
      %s30 = ssub.s32 %s17, %s24
      %s31 = sor.u32 %s29, %s30
      %p32 = scmp.eq.s32.totalorder %s31, 0
      %s34 = sadd.s32 %s33, 1
      %s35 = scalar_select %p32, %s33, %s34
      %p38 = pneg %p32
      %p39 = scmp.eq.s32.totalorder %s9, 3
      %p40 = por %p38, %p39
      %p41 = scmp.ne.s32.totalorder %s33, %s36
      %p42 = scmp.eq.s32.totalorder %s9, 0
      %p43 = por %p41, %p42
      %p44 = scmp.ne.s32.totalorder %s33, %s36
      %p45 = scmp.eq.s32.totalorder %s14, 3
      %p46 = por %p44, %p45
      %p47 = scmp.ne.s32.totalorder %s36, %s37
      %p48 = scmp.eq.s32.totalorder %s14, 0
      %p49 = por %p47, %p48
      %p50 = scmp.ne.s32.totalorder %s36, %s37
      %p51 = scmp.eq.s32.totalorder %s15, 3
      %p52 = por %p50, %p51
      %p54 = scmp.ne.s32.totalorder %s37, %s53
      %p55 = scmp.eq.s32.totalorder %s15, 0
      %p56 = por %p54, %p55
      %s57 = sadd.s32 %s17, 2
      %s58 = sadd.s32 %s24, 2
      %s59 = ssub.s32 %s16, %s28
      %s60 = ssub.s32 %s57, %s58
      %s61 = sor.u32 %s59, %s60
      %p62 = scmp.eq.s32.totalorder %s61, 0
      %s64 = sadd.s32 %s63, 1
      %s65 = scalar_select %p62, %s63, %s64
      %p68 = pneg %p62
      %p69 = scmp.eq.s32.totalorder %s9, 3
      %p70 = por %p68, %p69
      %p71 = scmp.ne.s32.totalorder %s63, %s66
      %p72 = scmp.eq.s32.totalorder %s9, 0
      %p73 = por %p71, %p72
      %p74 = scmp.ne.s32.totalorder %s63, %s66
      %p75 = scmp.eq.s32.totalorder %s14, 3
      %p76 = por %p74, %p75
      %p77 = scmp.ne.s32.totalorder %s66, %s67
      %p78 = scmp.eq.s32.totalorder %s14, 0
      %p79 = por %p77, %p78
      %p80 = scmp.ne.s32.totalorder %s66, %s67
      %p81 = scmp.eq.s32.totalorder %s15, 3
      %p82 = por %p80, %p81
      %p84 = scmp.ne.s32.totalorder %s67, %s83
      %p85 = scmp.eq.s32.totalorder %s15, 0
      %p86 = por %p84, %p85
      %s87 = sadd.s32 %s17, 4
      %s88 = sadd.s32 %s24, 4
      %s89 = ssub.s32 %s16, %s28
      %s90 = ssub.s32 %s87, %s88
      %s91 = sor.u32 %s89, %s90
      %p92 = scmp.eq.s32.totalorder %s91, 0
      %s94 = sadd.s32 %s93, 1
      %s95 = scalar_select %p92, %s93, %s94
      %p98 = pneg %p92
      %p99 = scmp.eq.s32.totalorder %s9, 3
      %p100 = por %p98, %p99
      %p101 = scmp.ne.s32.totalorder %s93, %s96
      %p102 = scmp.eq.s32.totalorder %s9, 0
      %p103 = por %p101, %p102
      %p104 = scmp.ne.s32.totalorder %s93, %s96
      %p105 = scmp.eq.s32.totalorder %s14, 3
      %p106 = por %p104, %p105
      %p107 = scmp.ne.s32.totalorder %s96, %s97
      %p108 = scmp.eq.s32.totalorder %s14, 0
      %p109 = por %p107, %p108
      %p110 = scmp.ne.s32.totalorder %s96, %s97
      %p111 = scmp.eq.s32.totalorder %s15, 3
      %p112 = por %p110, %p111
      %p114 = scmp.ne.s32.totalorder %s97, %s113
      %p115 = scmp.eq.s32.totalorder %s15, 0
      %p116 = por %p114, %p115
      %s117 = ssub.s32 %s16, %s28
      %s118 = ssub.s32 %s17, %s24
      %s119 = sor.u32 %s117, %s118
      %p120 = scmp.eq.s32.totalorder %s119, 0
      %s122 = sadd.s32 %s121, 1
      %s123 = scalar_select %p120, %s121, %s122
      %p126 = pneg %p120
      %p127 = scmp.eq.s32.totalorder %s9, 3
      %p128 = por %p126, %p127
      %p129 = scmp.ne.s32.totalorder %s121, %s124
      %p130 = scmp.eq.s32.totalorder %s9, 0
      %p131 = por %p129, %p130
      %p132 = scmp.ne.s32.totalorder %s121, %s124
      %p133 = scmp.eq.s32.totalorder %s14, 3
      %p134 = por %p132, %p133
      %p135 = scmp.ne.s32.totalorder %s124, %s125
      %p136 = scmp.eq.s32.totalorder %s14, 0
      %p137 = por %p135, %p136
      %p138 = scmp.ne.s32.totalorder %s124, %s125
      %p139 = scmp.eq.s32.totalorder %s15, 3
      %p140 = por %p138, %p139
      %p142 = scmp.ne.s32.totalorder %s125, %s141
      %p143 = scmp.eq.s32.totalorder %s15, 0
      %p144 = por %p142, %p143
      %p145 = scmp.le.s32.totalorder 1, %s9
      %p146 = scmp.lt.s32.totalorder %s9, 5
      %p147 = pnand %p145, %p146
      %p148 = pneg %p147
      // Predicated region
      $region9: #{attention_forward.4} parent=5 // pred_check
        _
      $region10: #{attention_forward.4} parent=5 // pred_check_branch
        %150 = sbr.rel (%p147) target = $region12
      $region11: #{attention_forward.4} parent=5 // pred_region
        %s151 = ssub.s32 %s9, 1
      $region12: #{attention_forward.4} parent=5 // pred_fallthru
        _
      %p152 = scmp.lt.s32.totalorder %s9, 4
      // Predicated region
      $region13: #{attention_forward.4} parent=5 // pred_check
        %p153 = pneg %p152
      $region14: #{attention_forward.4} parent=5 // pred_check_branch
        %155 = sbr.rel (%p153) target = $region16
      $region15: #{attention_forward.4} parent=5 // pred_region
        // Predicated region
        $region17: #{attention_forward.4} parent=15 // pred_check
          %p156 = pneg %p43
        $region18: #{attention_forward.4} parent=15 // pred_check_branch
          %158 = sbr.rel (%p156) target = $region20
        $region19: #{attention_forward.4} parent=15 // pred_region
          %s159 = sand.u32 %s33, 1
          %s160 = sand.u32 %s33, 1
          %s161 = smul.addr %s160, 128
          %s162 = scalar_lea.vmem [#allocation2], %s161
          %s163 = smul.addr %s16, 96
          %s164 = sadd.s32 %s17, %s163
          %s165 = smul.addr %s164, 8
          %s166 = scalar_lea.vmem %s0, %s165
          // Predicated region
          $region21: #{attention_forward.4} parent=19 // pred_check
            _
          $region22: #{attention_forward.4} parent=19 // pred_check_branch
            %168 = sbr.rel (0) target = $region24
          $region23: #{attention_forward.4} parent=19 // pred_region
            // Predicated region
            $region25: #{attention_forward.4} parent=23 // pred_check
              _
            $region26: #{attention_forward.4} parent=23 // pred_check_branch
              %170 = sbr.rel (0) target = $region28
            $region27: #{attention_forward.4} parent=23 // pred_region
              // Predicated region
              $region40: #{attention_forward.4} parent=27 // pred_check
                _
              $region41: #{attention_forward.4} parent=27 // pred_check_branch
                %215 = sbr.rel (0) target = $region43
              $region42: #{attention_forward.4} parent=27 // pred_region
                loop: start=0, step=1, limit=1
                $region44: #{attention_forward.4} parent=42 // loop_pre_header
                  _
                $region45: #{attention_forward.4} parent=42 // loop_header
                  %s217 = sphi 0, %s221
                  %p218 = scmp.ge.s32.totalorder %s217, 1
                  %s222 = sphi %s166, %s166
                  %s223 = sphi %s162, %s162
                $region46: #{attention_forward.4} parent=42 // loop_header_branch
                  %220 = sbr.rel (%p218) target = $region50
                $region47: #{attention_forward.4} parent=42 // loop_body
                  %v224 = vld [vmem:[%s222] sm:$0xff]
                  %225 = vst [vmem:[%s223] sm:$0xff] %v224
                  %v226 = vld [vmem:[%s222 + $0x30] sm:$0xff]
                  %227 = vst [vmem:[%s223 + $0x8] sm:$0xff] %v226
                  %v228 = vld [vmem:[%s222 + $0x60] sm:$0xff]
                  %229 = vst [vmem:[%s223 + $0x10] sm:$0xff] %v228
                  %v230 = vld [vmem:[%s222 + $0x90] sm:$0xff]
                  %231 = vst [vmem:[%s223 + $0x18] sm:$0xff] %v230
                  %v232 = vld [vmem:[%s222 + $0xc0] sm:$0xff]
                  %233 = vst [vmem:[%s223 + $0x20] sm:$0xff] %v232
                  %v234 = vld [vmem:[%s222 + $0xf0] sm:$0xff]
                  %235 = vst [vmem:[%s223 + $0x28] sm:$0xff] %v234
                  %v236 = vld [vmem:[%s222 + $0x120] sm:$0xff]
                  %237 = vst [vmem:[%s223 + $0x30] sm:$0xff] %v236
                  %v238 = vld [vmem:[%s222 + $0x150] sm:$0xff]
                  %239 = vst [vmem:[%s223 + $0x38] sm:$0xff] %v238
                  %v240 = vld [vmem:[%s222 + $0x180] sm:$0xff]
                  %241 = vst [vmem:[%s223 + $0x40] sm:$0xff] %v240
                  %v242 = vld [vmem:[%s222 + $0x1b0] sm:$0xff]
                  %243 = vst [vmem:[%s223 + $0x48] sm:$0xff] %v242
                  %v244 = vld [vmem:[%s222 + $0x1e0] sm:$0xff]
                  %245 = vst [vmem:[%s223 + $0x50] sm:$0xff] %v244
                  %v246 = vld [vmem:[%s222 + $0x210] sm:$0xff]
                  %247 = vst [vmem:[%s223 + $0x58] sm:$0xff] %v246
                  %v248 = vld [vmem:[%s222 + $0x240] sm:$0xff]
                  %249 = vst [vmem:[%s223 + $0x60] sm:$0xff] %v248
                  %v250 = vld [vmem:[%s222 + $0x270] sm:$0xff]
                  %251 = vst [vmem:[%s223 + $0x68] sm:$0xff] %v250
                  %v252 = vld [vmem:[%s222 + $0x2a0] sm:$0xff]
                  %253 = vst [vmem:[%s223 + $0x70] sm:$0xff] %v252
                  %v254 = vld [vmem:[%s222 + $0x2d0] sm:$0xff]
                  %255 = vst [vmem:[%s223 + $0x78] sm:$0xff] %v254
                $region48: #{attention_forward.4} parent=42 // loop_footer
                  %s221 = sadd.s32 1, %s217
                $region49: #{attention_forward.4} parent=42 // loop_footer_branch
                  %216 = sbr.rel target = $region45
                $region50: #{attention_forward.4} parent=42 // loop_exit
                  _
              $region43: #{attention_forward.4} parent=27 // pred_fallthru
                _
              // Predicated region
              $region51: #{attention_forward.4} parent=27 // pred_check
                _
              $region52: #{attention_forward.4} parent=27 // pred_check_branch
                %257 = sbr.rel target = $region54
              $region53: #{attention_forward.4} parent=27 // pred_region
                _
              $region54: #{attention_forward.4} parent=27 // pred_fallthru
                _
            $region28: #{attention_forward.4} parent=23 // pred_fallthru
              _
            // Predicated region
            $region29: #{attention_forward.4} parent=23 // pred_check
              _
            $region30: #{attention_forward.4} parent=23 // pred_check_branch
              %172 = sbr.rel target = $region32
            $region31: #{attention_forward.4} parent=23 // pred_region
              loop: start=0, step=1, limit=1
              $region33: #{attention_forward.4} parent=31 // loop_pre_header
                _
              $region34: #{attention_forward.4} parent=31 // loop_header
                %s175 = sphi 0, %s179
                %p176 = scmp.ge.s32.totalorder %s175, 1
                %s180 = sphi %s166, %s166
                %s181 = sphi %s162, %s162
              $region35: #{attention_forward.4} parent=31 // loop_header_branch
                %178 = sbr.rel (%p176) target = $region39
              $region36: #{attention_forward.4} parent=31 // loop_body
                %v182 = vld [vmem:[%s180] sm:$0xff]
                %183 = vst [vmem:[%s181] sm:$0xff] %v182
                %v184 = vld [vmem:[%s180 + $0x30] sm:$0xff]
                %185 = vst [vmem:[%s181 + $0x8] sm:$0xff] %v184
                %v186 = vld [vmem:[%s180 + $0x60] sm:$0xff]
                %187 = vst [vmem:[%s181 + $0x10] sm:$0xff] %v186
                %v188 = vld [vmem:[%s180 + $0x90] sm:$0xff]
                %189 = vst [vmem:[%s181 + $0x18] sm:$0xff] %v188
                %v190 = vld [vmem:[%s180 + $0xc0] sm:$0xff]
                %191 = vst [vmem:[%s181 + $0x20] sm:$0xff] %v190
                %v192 = vld [vmem:[%s180 + $0xf0] sm:$0xff]
                %193 = vst [vmem:[%s181 + $0x28] sm:$0xff] %v192
                %v194 = vld [vmem:[%s180 + $0x120] sm:$0xff]
                %195 = vst [vmem:[%s181 + $0x30] sm:$0xff] %v194
                %v196 = vld [vmem:[%s180 + $0x150] sm:$0xff]
                %197 = vst [vmem:[%s181 + $0x38] sm:$0xff] %v196
                %v198 = vld [vmem:[%s180 + $0x180] sm:$0xff]
                %199 = vst [vmem:[%s181 + $0x40] sm:$0xff] %v198
                %v200 = vld [vmem:[%s180 + $0x1b0] sm:$0xff]
                %201 = vst [vmem:[%s181 + $0x48] sm:$0xff] %v200
                %v202 = vld [vmem:[%s180 + $0x1e0] sm:$0xff]
                %203 = vst [vmem:[%s181 + $0x50] sm:$0xff] %v202
                %v204 = vld [vmem:[%s180 + $0x210] sm:$0xff]
                %205 = vst [vmem:[%s181 + $0x58] sm:$0xff] %v204
                %v206 = vld [vmem:[%s180 + $0x240] sm:$0xff]
                %207 = vst [vmem:[%s181 + $0x60] sm:$0xff] %v206
                %v208 = vld [vmem:[%s180 + $0x270] sm:$0xff]
                %209 = vst [vmem:[%s181 + $0x68] sm:$0xff] %v208
                %v210 = vld [vmem:[%s180 + $0x2a0] sm:$0xff]
                %211 = vst [vmem:[%s181 + $0x70] sm:$0xff] %v210
                %v212 = vld [vmem:[%s180 + $0x2d0] sm:$0xff]
                %213 = vst [vmem:[%s181 + $0x78] sm:$0xff] %v212
              $region37: #{attention_forward.4} parent=31 // loop_footer
                %s179 = sadd.s32 1, %s175
              $region38: #{attention_forward.4} parent=31 // loop_footer_branch
                %174 = sbr.rel target = $region34
              $region39: #{attention_forward.4} parent=31 // loop_exit
                _
            $region32: #{attention_forward.4} parent=23 // pred_fallthru
              _
          $region24: #{attention_forward.4} parent=19 // pred_fallthru
            _
          %258 = vnop
        $region20: #{attention_forward.4} parent=15 // pred_fallthru
          _
        // Predicated region
        $region55: #{attention_forward.4} parent=15 // pred_check
          %p259 = pneg %p73
        $region56: #{attention_forward.4} parent=15 // pred_check_branch
          %261 = sbr.rel (%p259) target = $region58
        $region57: #{attention_forward.4} parent=15 // pred_region
          %s262 = sand.u32 %s63, 1
          %s263 = sand.u32 %s63, 1
          %s264 = smul.addr %s263, 128
          %s265 = scalar_lea.vmem [#allocation3], %s264
          %s266 = sadd.s32 %s17, 2
          %s267 = smul.addr %s16, 96
          %s268 = sadd.s32 %s266, %s267
          %s269 = smul.addr %s268, 8
          %s270 = scalar_lea.vmem %s1, %s269
          // Predicated region
          $region59: #{attention_forward.4} parent=57 // pred_check
            _
          $region60: #{attention_forward.4} parent=57 // pred_check_branch
            %272 = sbr.rel (0) target = $region62
          $region61: #{attention_forward.4} parent=57 // pred_region
            // Predicated region
            $region63: #{attention_forward.4} parent=61 // pred_check
              _
            $region64: #{attention_forward.4} parent=61 // pred_check_branch
              %274 = sbr.rel (0) target = $region66
            $region65: #{attention_forward.4} parent=61 // pred_region
              // Predicated region
              $region78: #{attention_forward.4} parent=65 // pred_check
                _
              $region79: #{attention_forward.4} parent=65 // pred_check_branch
                %319 = sbr.rel (0) target = $region81
              $region80: #{attention_forward.4} parent=65 // pred_region
                loop: start=0, step=1, limit=1
                $region82: #{attention_forward.4} parent=80 // loop_pre_header
                  _
                $region83: #{attention_forward.4} parent=80 // loop_header
                  %s321 = sphi 0, %s325
                  %p322 = scmp.ge.s32.totalorder %s321, 1
                  %s326 = sphi %s270, %s270
                  %s327 = sphi %s265, %s265
                $region84: #{attention_forward.4} parent=80 // loop_header_branch
                  %324 = sbr.rel (%p322) target = $region88
                $region85: #{attention_forward.4} parent=80 // loop_body
                  %v328 = vld [vmem:[%s326] sm:$0xff]
                  %329 = vst [vmem:[%s327] sm:$0xff] %v328
                  %v330 = vld [vmem:[%s326 + $0x30] sm:$0xff]
                  %331 = vst [vmem:[%s327 + $0x8] sm:$0xff] %v330
                  %v332 = vld [vmem:[%s326 + $0x60] sm:$0xff]
                  %333 = vst [vmem:[%s327 + $0x10] sm:$0xff] %v332
                  %v334 = vld [vmem:[%s326 + $0x90] sm:$0xff]
                  %335 = vst [vmem:[%s327 + $0x18] sm:$0xff] %v334
                  %v336 = vld [vmem:[%s326 + $0xc0] sm:$0xff]
                  %337 = vst [vmem:[%s327 + $0x20] sm:$0xff] %v336
                  %v338 = vld [vmem:[%s326 + $0xf0] sm:$0xff]
                  %339 = vst [vmem:[%s327 + $0x28] sm:$0xff] %v338
                  %v340 = vld [vmem:[%s326 + $0x120] sm:$0xff]
                  %341 = vst [vmem:[%s327 + $0x30] sm:$0xff] %v340
                  %v342 = vld [vmem:[%s326 + $0x150] sm:$0xff]
                  %343 = vst [vmem:[%s327 + $0x38] sm:$0xff] %v342
                  %v344 = vld [vmem:[%s326 + $0x180] sm:$0xff]
                  %345 = vst [vmem:[%s327 + $0x40] sm:$0xff] %v344
                  %v346 = vld [vmem:[%s326 + $0x1b0] sm:$0xff]
                  %347 = vst [vmem:[%s327 + $0x48] sm:$0xff] %v346
                  %v348 = vld [vmem:[%s326 + $0x1e0] sm:$0xff]
                  %349 = vst [vmem:[%s327 + $0x50] sm:$0xff] %v348
                  %v350 = vld [vmem:[%s326 + $0x210] sm:$0xff]
                  %351 = vst [vmem:[%s327 + $0x58] sm:$0xff] %v350
                  %v352 = vld [vmem:[%s326 + $0x240] sm:$0xff]
                  %353 = vst [vmem:[%s327 + $0x60] sm:$0xff] %v352
                  %v354 = vld [vmem:[%s326 + $0x270] sm:$0xff]
                  %355 = vst [vmem:[%s327 + $0x68] sm:$0xff] %v354
                  %v356 = vld [vmem:[%s326 + $0x2a0] sm:$0xff]
                  %357 = vst [vmem:[%s327 + $0x70] sm:$0xff] %v356
                  %v358 = vld [vmem:[%s326 + $0x2d0] sm:$0xff]
                  %359 = vst [vmem:[%s327 + $0x78] sm:$0xff] %v358
                $region86: #{attention_forward.4} parent=80 // loop_footer
                  %s325 = sadd.s32 1, %s321
                $region87: #{attention_forward.4} parent=80 // loop_footer_branch
                  %320 = sbr.rel target = $region83
                $region88: #{attention_forward.4} parent=80 // loop_exit
                  _
              $region81: #{attention_forward.4} parent=65 // pred_fallthru
                _
              // Predicated region
              $region89: #{attention_forward.4} parent=65 // pred_check
                _
              $region90: #{attention_forward.4} parent=65 // pred_check_branch
                %361 = sbr.rel target = $region92
              $region91: #{attention_forward.4} parent=65 // pred_region
                _
              $region92: #{attention_forward.4} parent=65 // pred_fallthru
                _
            $region66: #{attention_forward.4} parent=61 // pred_fallthru
              _
            // Predicated region
            $region67: #{attention_forward.4} parent=61 // pred_check
              _
            $region68: #{attention_forward.4} parent=61 // pred_check_branch
              %276 = sbr.rel target = $region70
            $region69: #{attention_forward.4} parent=61 // pred_region
              loop: start=0, step=1, limit=1
              $region71: #{attention_forward.4} parent=69 // loop_pre_header
                _
              $region72: #{attention_forward.4} parent=69 // loop_header
                %s279 = sphi 0, %s283
                %p280 = scmp.ge.s32.totalorder %s279, 1
                %s284 = sphi %s270, %s270
                %s285 = sphi %s265, %s265
              $region73: #{attention_forward.4} parent=69 // loop_header_branch
                %282 = sbr.rel (%p280) target = $region77
              $region74: #{attention_forward.4} parent=69 // loop_body
                %v286 = vld [vmem:[%s284] sm:$0xff]
                %287 = vst [vmem:[%s285] sm:$0xff] %v286
                %v288 = vld [vmem:[%s284 + $0x30] sm:$0xff]
                %289 = vst [vmem:[%s285 + $0x8] sm:$0xff] %v288
                %v290 = vld [vmem:[%s284 + $0x60] sm:$0xff]
                %291 = vst [vmem:[%s285 + $0x10] sm:$0xff] %v290
                %v292 = vld [vmem:[%s284 + $0x90] sm:$0xff]
                %293 = vst [vmem:[%s285 + $0x18] sm:$0xff] %v292
                %v294 = vld [vmem:[%s284 + $0xc0] sm:$0xff]
                %295 = vst [vmem:[%s285 + $0x20] sm:$0xff] %v294
                %v296 = vld [vmem:[%s284 + $0xf0] sm:$0xff]
                %297 = vst [vmem:[%s285 + $0x28] sm:$0xff] %v296
                %v298 = vld [vmem:[%s284 + $0x120] sm:$0xff]
                %299 = vst [vmem:[%s285 + $0x30] sm:$0xff] %v298
                %v300 = vld [vmem:[%s284 + $0x150] sm:$0xff]
                %301 = vst [vmem:[%s285 + $0x38] sm:$0xff] %v300
                %v302 = vld [vmem:[%s284 + $0x180] sm:$0xff]
                %303 = vst [vmem:[%s285 + $0x40] sm:$0xff] %v302
                %v304 = vld [vmem:[%s284 + $0x1b0] sm:$0xff]
                %305 = vst [vmem:[%s285 + $0x48] sm:$0xff] %v304
                %v306 = vld [vmem:[%s284 + $0x1e0] sm:$0xff]
                %307 = vst [vmem:[%s285 + $0x50] sm:$0xff] %v306
                %v308 = vld [vmem:[%s284 + $0x210] sm:$0xff]
                %309 = vst [vmem:[%s285 + $0x58] sm:$0xff] %v308
                %v310 = vld [vmem:[%s284 + $0x240] sm:$0xff]
                %311 = vst [vmem:[%s285 + $0x60] sm:$0xff] %v310
                %v312 = vld [vmem:[%s284 + $0x270] sm:$0xff]
                %313 = vst [vmem:[%s285 + $0x68] sm:$0xff] %v312
                %v314 = vld [vmem:[%s284 + $0x2a0] sm:$0xff]
                %315 = vst [vmem:[%s285 + $0x70] sm:$0xff] %v314
                %v316 = vld [vmem:[%s284 + $0x2d0] sm:$0xff]
                %317 = vst [vmem:[%s285 + $0x78] sm:$0xff] %v316
              $region75: #{attention_forward.4} parent=69 // loop_footer
                %s283 = sadd.s32 1, %s279
              $region76: #{attention_forward.4} parent=69 // loop_footer_branch
                %278 = sbr.rel target = $region72
              $region77: #{attention_forward.4} parent=69 // loop_exit
                _
            $region70: #{attention_forward.4} parent=61 // pred_fallthru
              _
          $region62: #{attention_forward.4} parent=57 // pred_fallthru
            _
          %362 = vnop
        $region58: #{attention_forward.4} parent=15 // pred_fallthru
          _
        // Predicated region
        $region93: #{attention_forward.4} parent=15 // pred_check
          %p363 = pneg %p103
        $region94: #{attention_forward.4} parent=15 // pred_check_branch
          %365 = sbr.rel (%p363) target = $region96
        $region95: #{attention_forward.4} parent=15 // pred_region
          %s366 = sand.u32 %s93, 1
          %s367 = sand.u32 %s93, 1
          %s368 = smul.addr %s367, 128
          %s369 = scalar_lea.vmem [#allocation4], %s368
          %s370 = sadd.s32 %s17, 4
          %s371 = smul.addr %s16, 96
          %s372 = sadd.s32 %s370, %s371
          %s373 = smul.addr %s372, 8
          %s374 = scalar_lea.vmem %s2, %s373
          // Predicated region
          $region97: #{attention_forward.4} parent=95 // pred_check
            _
          $region98: #{attention_forward.4} parent=95 // pred_check_branch
            %376 = sbr.rel (0) target = $region100
          $region99: #{attention_forward.4} parent=95 // pred_region
            // Predicated region
            $region101: #{attention_forward.4} parent=99 // pred_check
              _
            $region102: #{attention_forward.4} parent=99 // pred_check_branch
              %378 = sbr.rel (0) target = $region104
            $region103: #{attention_forward.4} parent=99 // pred_region
              // Predicated region
              $region116: #{attention_forward.4} parent=103 // pred_check
                _
              $region117: #{attention_forward.4} parent=103 // pred_check_branch
                %423 = sbr.rel (0) target = $region119
              $region118: #{attention_forward.4} parent=103 // pred_region
                loop: start=0, step=1, limit=1
                $region120: #{attention_forward.4} parent=118 // loop_pre_header
                  _
                $region121: #{attention_forward.4} parent=118 // loop_header
                  %s425 = sphi 0, %s429
                  %p426 = scmp.ge.s32.totalorder %s425, 1
                  %s430 = sphi %s374, %s374
                  %s431 = sphi %s369, %s369
                $region122: #{attention_forward.4} parent=118 // loop_header_branch
                  %428 = sbr.rel (%p426) target = $region126
                $region123: #{attention_forward.4} parent=118 // loop_body
                  %v432 = vld [vmem:[%s430] sm:$0xff]
                  %433 = vst [vmem:[%s431] sm:$0xff] %v432
                  %v434 = vld [vmem:[%s430 + $0x30] sm:$0xff]
                  %435 = vst [vmem:[%s431 + $0x8] sm:$0xff] %v434
                  %v436 = vld [vmem:[%s430 + $0x60] sm:$0xff]
                  %437 = vst [vmem:[%s431 + $0x10] sm:$0xff] %v436
                  %v438 = vld [vmem:[%s430 + $0x90] sm:$0xff]
                  %439 = vst [vmem:[%s431 + $0x18] sm:$0xff] %v438
                  %v440 = vld [vmem:[%s430 + $0xc0] sm:$0xff]
                  %441 = vst [vmem:[%s431 + $0x20] sm:$0xff] %v440
                  %v442 = vld [vmem:[%s430 + $0xf0] sm:$0xff]
                  %443 = vst [vmem:[%s431 + $0x28] sm:$0xff] %v442
                  %v444 = vld [vmem:[%s430 + $0x120] sm:$0xff]
                  %445 = vst [vmem:[%s431 + $0x30] sm:$0xff] %v444
                  %v446 = vld [vmem:[%s430 + $0x150] sm:$0xff]
                  %447 = vst [vmem:[%s431 + $0x38] sm:$0xff] %v446
                  %v448 = vld [vmem:[%s430 + $0x180] sm:$0xff]
                  %449 = vst [vmem:[%s431 + $0x40] sm:$0xff] %v448
                  %v450 = vld [vmem:[%s430 + $0x1b0] sm:$0xff]
                  %451 = vst [vmem:[%s431 + $0x48] sm:$0xff] %v450
                  %v452 = vld [vmem:[%s430 + $0x1e0] sm:$0xff]
                  %453 = vst [vmem:[%s431 + $0x50] sm:$0xff] %v452
                  %v454 = vld [vmem:[%s430 + $0x210] sm:$0xff]
                  %455 = vst [vmem:[%s431 + $0x58] sm:$0xff] %v454
                  %v456 = vld [vmem:[%s430 + $0x240] sm:$0xff]
                  %457 = vst [vmem:[%s431 + $0x60] sm:$0xff] %v456
                  %v458 = vld [vmem:[%s430 + $0x270] sm:$0xff]
                  %459 = vst [vmem:[%s431 + $0x68] sm:$0xff] %v458
                  %v460 = vld [vmem:[%s430 + $0x2a0] sm:$0xff]
                  %461 = vst [vmem:[%s431 + $0x70] sm:$0xff] %v460
                  %v462 = vld [vmem:[%s430 + $0x2d0] sm:$0xff]
                  %463 = vst [vmem:[%s431 + $0x78] sm:$0xff] %v462
                $region124: #{attention_forward.4} parent=118 // loop_footer
                  %s429 = sadd.s32 1, %s425
                $region125: #{attention_forward.4} parent=118 // loop_footer_branch
                  %424 = sbr.rel target = $region121
                $region126: #{attention_forward.4} parent=118 // loop_exit
                  _
              $region119: #{attention_forward.4} parent=103 // pred_fallthru
                _
              // Predicated region
              $region127: #{attention_forward.4} parent=103 // pred_check
                _
              $region128: #{attention_forward.4} parent=103 // pred_check_branch
                %465 = sbr.rel target = $region130
              $region129: #{attention_forward.4} parent=103 // pred_region
                _
              $region130: #{attention_forward.4} parent=103 // pred_fallthru
                _
            $region104: #{attention_forward.4} parent=99 // pred_fallthru
              _
            // Predicated region
            $region105: #{attention_forward.4} parent=99 // pred_check
              _
            $region106: #{attention_forward.4} parent=99 // pred_check_branch
              %380 = sbr.rel target = $region108
            $region107: #{attention_forward.4} parent=99 // pred_region
              loop: start=0, step=1, limit=1
              $region109: #{attention_forward.4} parent=107 // loop_pre_header
                _
              $region110: #{attention_forward.4} parent=107 // loop_header
                %s383 = sphi 0, %s387
                %p384 = scmp.ge.s32.totalorder %s383, 1
                %s388 = sphi %s374, %s374
                %s389 = sphi %s369, %s369
              $region111: #{attention_forward.4} parent=107 // loop_header_branch
                %386 = sbr.rel (%p384) target = $region115
              $region112: #{attention_forward.4} parent=107 // loop_body
                %v390 = vld [vmem:[%s388] sm:$0xff]
                %391 = vst [vmem:[%s389] sm:$0xff] %v390
                %v392 = vld [vmem:[%s388 + $0x30] sm:$0xff]
                %393 = vst [vmem:[%s389 + $0x8] sm:$0xff] %v392
                %v394 = vld [vmem:[%s388 + $0x60] sm:$0xff]
                %395 = vst [vmem:[%s389 + $0x10] sm:$0xff] %v394
                %v396 = vld [vmem:[%s388 + $0x90] sm:$0xff]
                %397 = vst [vmem:[%s389 + $0x18] sm:$0xff] %v396
                %v398 = vld [vmem:[%s388 + $0xc0] sm:$0xff]
                %399 = vst [vmem:[%s389 + $0x20] sm:$0xff] %v398
                %v400 = vld [vmem:[%s388 + $0xf0] sm:$0xff]
                %401 = vst [vmem:[%s389 + $0x28] sm:$0xff] %v400
                %v402 = vld [vmem:[%s388 + $0x120] sm:$0xff]
                %403 = vst [vmem:[%s389 + $0x30] sm:$0xff] %v402
                %v404 = vld [vmem:[%s388 + $0x150] sm:$0xff]
                %405 = vst [vmem:[%s389 + $0x38] sm:$0xff] %v404
                %v406 = vld [vmem:[%s388 + $0x180] sm:$0xff]
                %407 = vst [vmem:[%s389 + $0x40] sm:$0xff] %v406
                %v408 = vld [vmem:[%s388 + $0x1b0] sm:$0xff]
                %409 = vst [vmem:[%s389 + $0x48] sm:$0xff] %v408
                %v410 = vld [vmem:[%s388 + $0x1e0] sm:$0xff]
                %411 = vst [vmem:[%s389 + $0x50] sm:$0xff] %v410
                %v412 = vld [vmem:[%s388 + $0x210] sm:$0xff]
                %413 = vst [vmem:[%s389 + $0x58] sm:$0xff] %v412
                %v414 = vld [vmem:[%s388 + $0x240] sm:$0xff]
                %415 = vst [vmem:[%s389 + $0x60] sm:$0xff] %v414
                %v416 = vld [vmem:[%s388 + $0x270] sm:$0xff]
                %417 = vst [vmem:[%s389 + $0x68] sm:$0xff] %v416
                %v418 = vld [vmem:[%s388 + $0x2a0] sm:$0xff]
                %419 = vst [vmem:[%s389 + $0x70] sm:$0xff] %v418
                %v420 = vld [vmem:[%s388 + $0x2d0] sm:$0xff]
                %421 = vst [vmem:[%s389 + $0x78] sm:$0xff] %v420
              $region113: #{attention_forward.4} parent=107 // loop_footer
                %s387 = sadd.s32 1, %s383
              $region114: #{attention_forward.4} parent=107 // loop_footer_branch
                %382 = sbr.rel target = $region110
              $region115: #{attention_forward.4} parent=107 // loop_exit
                _
            $region108: #{attention_forward.4} parent=99 // pred_fallthru
              _
          $region100: #{attention_forward.4} parent=95 // pred_fallthru
            _
          %466 = vnop
        $region96: #{attention_forward.4} parent=15 // pred_fallthru
          _
      $region16: #{attention_forward.4} parent=5 // pred_fallthru
        _
      %p467 = scmp.le.s32.totalorder 1, %s9
      %p468 = scmp.lt.s32.totalorder %s9, 5
      %p469 = pnand %p467, %p468
      %p470 = pneg %p469
      // Predicated region
      $region131: #{attention_forward.4} parent=5 // pred_check
        _
      $region132: #{attention_forward.4} parent=5 // pred_check_branch
        %472 = sbr.rel (%p469) target = $region134
      $region133: #{attention_forward.4} parent=5 // pred_region
        %s473 = ssub.s32 %s9, 1
        %s474 = sand.u32 %s36, 1
        %s475 = sand.u32 %s36, 1
        %s476 = smul.addr %s475, 128
        %s477 = scalar_lea.vmem [#allocation2], %s476
        // Predicated region
        $region135: #{attention_forward.4} parent=133 // pred_check
          %p478 = pneg %p49
        $region136: #{attention_forward.4} parent=133 // pred_check_branch
          %480 = sbr.rel (%p478) target = $region138
        $region137: #{attention_forward.4} parent=133 // pred_region
          _
        $region138: #{attention_forward.4} parent=133 // pred_fallthru
          _
        %s481 = sand.u32 %s66, 1
        %s482 = sand.u32 %s66, 1
        %s483 = smul.addr %s482, 128
        %s484 = scalar_lea.vmem [#allocation3], %s483
        // Predicated region
        $region139: #{attention_forward.4} parent=133 // pred_check
          %p485 = pneg %p79
        $region140: #{attention_forward.4} parent=133 // pred_check_branch
          %487 = sbr.rel (%p485) target = $region142
        $region141: #{attention_forward.4} parent=133 // pred_region
          _
        $region142: #{attention_forward.4} parent=133 // pred_fallthru
          _
        %s488 = sand.u32 %s96, 1
        %s489 = sand.u32 %s96, 1
        %s490 = smul.addr %s489, 128
        %s491 = scalar_lea.vmem [#allocation4], %s490
        // Predicated region
        $region143: #{attention_forward.4} parent=133 // pred_check
          %p492 = pneg %p109
        $region144: #{attention_forward.4} parent=133 // pred_check_branch
          %494 = sbr.rel (%p492) target = $region146
        $region145: #{attention_forward.4} parent=133 // pred_region
          _
        $region146: #{attention_forward.4} parent=133 // pred_fallthru
          _
        %s495 = sand.u32 %s36, 1
        %s496 = sand.u32 %s36, 1
        %s497 = smul.addr %s496, 128
        %s498 = scalar_lea.vmem [#allocation2], %s497
        %p499 = pneg %p49
        %p500 = pneg %p46
        %s501 = sand.u32 %s66, 1
        %s502 = sand.u32 %s66, 1
        %s503 = smul.addr %s502, 128
        %s504 = scalar_lea.vmem [#allocation3], %s503
        %p505 = pneg %p79
        %p506 = pneg %p76
        %s507 = sand.u32 %s96, 1
        %s508 = sand.u32 %s96, 1
        %s509 = smul.addr %s508, 128
        %s510 = scalar_lea.vmem [#allocation4], %s509
        %p511 = pneg %p109
        %p512 = pneg %p106
        %p513 = pneg %p137
        %p514 = pneg %p134
        %s515 = sand.u32 %s124, 1
        %s516 = sand.u32 %s124, 1
        %s517 = smul.addr %s516, 128
        %s518 = scalar_lea.vmem [#allocation5], %s517
        %s519 = sadd.s32 %s19, 2
        %s520 = sadd.s32 %s19, 4
        %v522 = vld [vmem:[%s477] sm:$0xff]
        %v523 = vld [vmem:[%s477 + $0x8] sm:$0xff]
        %v524 = vld [vmem:[%s477 + $0x10] sm:$0xff]
        %v525 = vld [vmem:[%s477 + $0x18] sm:$0xff]
        %v526 = vld [vmem:[%s477 + $0x20] sm:$0xff]
        %v527 = vld [vmem:[%s477 + $0x28] sm:$0xff]
        %v528 = vld [vmem:[%s477 + $0x30] sm:$0xff]
        %v529 = vld [vmem:[%s477 + $0x38] sm:$0xff]
        %v530 = vld [vmem:[%s477 + $0x40] sm:$0xff]
        %v531 = vld [vmem:[%s477 + $0x48] sm:$0xff]
        %v532 = vld [vmem:[%s477 + $0x50] sm:$0xff]
        %v533 = vld [vmem:[%s477 + $0x58] sm:$0xff]
        %v534 = vld [vmem:[%s477 + $0x60] sm:$0xff]
        %v535 = vld [vmem:[%s477 + $0x68] sm:$0xff]
        %v536 = vld [vmem:[%s477 + $0x70] sm:$0xff]
        %v537 = vld [vmem:[%s477 + $0x78] sm:$0xff]
        %v538 = vld [vmem:[%s484] sm:$0xff]
        %v539 = vld [vmem:[%s484 + $0x8] sm:$0xff]
        %v540 = vld [vmem:[%s484 + $0x10] sm:$0xff]
        %v541 = vld [vmem:[%s484 + $0x18] sm:$0xff]
        %v542 = vld [vmem:[%s484 + $0x20] sm:$0xff]
        %v543 = vld [vmem:[%s484 + $0x28] sm:$0xff]
        %v544 = vld [vmem:[%s484 + $0x30] sm:$0xff]
        %v545 = vld [vmem:[%s484 + $0x38] sm:$0xff]
        %v546 = vld [vmem:[%s484 + $0x40] sm:$0xff]
        %v547 = vld [vmem:[%s484 + $0x48] sm:$0xff]
        %v548 = vld [vmem:[%s484 + $0x50] sm:$0xff]
        %v549 = vld [vmem:[%s484 + $0x58] sm:$0xff]
        %v550 = vld [vmem:[%s484 + $0x60] sm:$0xff]
        %v551 = vld [vmem:[%s484 + $0x68] sm:$0xff]
        %v552 = vld [vmem:[%s484 + $0x70] sm:$0xff]
        %v553 = vld [vmem:[%s484 + $0x78] sm:$0xff]
        %v554 = vld [vmem:[%s491] sm:$0xff]
        %v555 = vld [vmem:[%s491 + $0x8] sm:$0xff]
        %v556 = vld [vmem:[%s491 + $0x10] sm:$0xff]
        %v557 = vld [vmem:[%s491 + $0x18] sm:$0xff]
        %v558 = vld [vmem:[%s491 + $0x20] sm:$0xff]
        %v559 = vld [vmem:[%s491 + $0x28] sm:$0xff]
        %v560 = vld [vmem:[%s491 + $0x30] sm:$0xff]
        %v561 = vld [vmem:[%s491 + $0x38] sm:$0xff]
        %v562 = vld [vmem:[%s491 + $0x40] sm:$0xff]
        %v563 = vld [vmem:[%s491 + $0x48] sm:$0xff]
        %v564 = vld [vmem:[%s491 + $0x50] sm:$0xff]
        %v565 = vld [vmem:[%s491 + $0x58] sm:$0xff]
        %v566 = vld [vmem:[%s491 + $0x60] sm:$0xff]
        %v567 = vld [vmem:[%s491 + $0x68] sm:$0xff]
        %v568 = vld [vmem:[%s491 + $0x70] sm:$0xff]
        %v569 = vld [vmem:[%s491 + $0x78] sm:$0xff]
        %v570 = vpack.c.bf16 %v523, %v522
        %v571 = vpack.c.bf16 %v525, %v524
        %v572 = vpack.c.bf16 %v527, %v526
        %v573 = vpack.c.bf16 %v529, %v528
        %v574 = vpack.c.bf16 %v531, %v530
        %v575 = vpack.c.bf16 %v533, %v532
        %v576 = vpack.c.bf16 %v535, %v534
        %v577 = vpack.c.bf16 %v537, %v536
        %v578 = vpack.c.bf16 %v539, %v538
        %v579 = vpack.c.bf16 %v541, %v540
        %v580 = vpack.c.bf16 %v543, %v542
        %v581 = vpack.c.bf16 %v545, %v544
        %v582 = vpack.c.bf16 %v547, %v546
        %v583 = vpack.c.bf16 %v549, %v548
        %v584 = vpack.c.bf16 %v551, %v550
        %v585 = vpack.c.bf16 %v553, %v552
        %v586 = vpack.c.bf16 %v555, %v554
        %v587 = vpack.c.bf16 %v557, %v556
        %v588 = vpack.c.bf16 %v559, %v558
        %v589 = vpack.c.bf16 %v561, %v560
        %v590 = vpack.c.bf16 %v563, %v562
        %v591 = vpack.c.bf16 %v565, %v564
        %v592 = vpack.c.bf16 %v567, %v566
        %v593 = vpack.c.bf16 %v569, %v568
        %vm594 = vcmask 523264
        %v596 = vsel %vm594, %v570, 0
        %v599 = vsel %vm594, %v571, 0
        %v602 = vsel %vm594, %v572, 0
        %v605 = vsel %vm594, %v573, 0
        %v608 = vsel %vm594, %v574, 0
        %v611 = vsel %vm594, %v575, 0
        %v614 = vsel %vm594, %v576, 0
        %v617 = vsel %vm594, %v577, 0
        %v620 = vsel %vm594, %v578, 0
        %v623 = vsel %vm594, %v579, 0
        %v626 = vsel %vm594, %v580, 0
        %v629 = vsel %vm594, %v581, 0
        %v632 = vsel %vm594, %v582, 0
        %v635 = vsel %vm594, %v583, 0
        %v638 = vsel %vm594, %v584, 0
        %v641 = vsel %vm594, %v585, 0
        %643 = vmatprep.subr.bf16.mxu0 0
        %644 = vmatpush1.bf16.xpose.msra.mxu0 %v620
        %645 = vmatprep.subr.bf16.mxu0 0
        %646 = vmatpush1.bf16.xpose.msra.mxu0 %v623
        %647 = vmatprep.subr.bf16.mxu0 0
        %648 = vmatpush1.bf16.xpose.msra.mxu0 %v626
        %649 = vmatprep.subr.bf16.mxu0 0
        %650 = vmatpush1.bf16.xpose.msra.mxu0 %v629
        %651 = vmatprep.subr.bf16.mxu0 0
        %652 = vmatpush1.bf16.xpose.msra.mxu0 %v632
        %653 = vmatprep.subr.bf16.mxu0 0
        %654 = vmatpush1.bf16.xpose.msra.mxu0 %v635
        %655 = vmatprep.subr.bf16.mxu0 0
        %656 = vmatpush1.bf16.xpose.msra.mxu0 %v638
        %657 = vmatprep.subr.bf16.mxu0 0
        %658 = vmatpush1.bf16.xpose.msra.mxu0 %v641
        %659 = vmatprep.subr.bf16.mxu0 0
        %660 = vmatpush1.bf16.xpose.msra.mxu0 0
        %661 = vmatprep.subr.bf16.mxu0 0
        %662 = vmatpush1.bf16.xpose.msra.mxu0 0
        %663 = vmatprep.subr.bf16.mxu0 0
        %664 = vmatpush1.bf16.xpose.msra.mxu0 0
        %665 = vmatprep.subr.bf16.mxu0 0
        %666 = vmatpush1.bf16.xpose.msra.mxu0 0
        %667 = vmatprep.subr.bf16.mxu0 0
        %668 = vmatpush1.bf16.xpose.msra.mxu0 0
        %669 = vmatprep.subr.bf16.mxu0 0
        %670 = vmatpush1.bf16.xpose.msra.mxu0 0
        %671 = vmatprep.subr.bf16.mxu0 0
        %672 = vmatpush1.bf16.xpose.msra.mxu0 0
        %673 = vmatprep.subr.bf16.mxu0 0
        %674 = vmatpush1.bf16.xpose.msra.mxu0 0
        %675 = vmatprep.mubr.bf16.mxu0 0
        %676 = vmatmul.mubr.bf16.gmra.mrb[0].mxu0 %v596
        %v677 = vpop.f32.mrb[0].mxu0
        %v678 = vadd.f32 0.0, %v677
        %v679 = vpop.f32.mrb[0].mxu0
        %v680 = vpop.f32.mrb[0].mxu0
        %v681 = vadd.f32 0.0, %v680
        %v682 = vpop.f32.mrb[0].mxu0
        %683 = vmatprep.mubr.bf16.mxu0 0
        %684 = vmatmul.mubr.bf16.gmra.mrb[0].mxu0 %v599
        %v685 = vpop.f32.mrb[0].mxu0
        %v686 = vadd.f32 0.0, %v685
        %v687 = vpop.f32.mrb[0].mxu0
        %v688 = vpop.f32.mrb[0].mxu0
        %v689 = vadd.f32 0.0, %v688
        %v690 = vpop.f32.mrb[0].mxu0
        %691 = vmatprep.mubr.bf16.mxu0 0
        %692 = vmatmul.mubr.bf16.gmra.mrb[0].mxu0 %v602
        %v693 = vpop.f32.mrb[0].mxu0
        %v694 = vadd.f32 0.0, %v693
        %v695 = vpop.f32.mrb[0].mxu0
        %v696 = vpop.f32.mrb[0].mxu0
        %v697 = vadd.f32 0.0, %v696
        %v698 = vpop.f32.mrb[0].mxu0
        %699 = vmatprep.mubr.bf16.mxu0 0
        %700 = vmatmul.mubr.bf16.gmra.mrb[0].mxu0 %v605
        %v701 = vpop.f32.mrb[0].mxu0
        %v702 = vadd.f32 0.0, %v701
        %v703 = vpop.f32.mrb[0].mxu0
        %v704 = vpop.f32.mrb[0].mxu0
        %v705 = vadd.f32 0.0, %v704
        %v706 = vpop.f32.mrb[0].mxu0
        %707 = vmatprep.mubr.bf16.mxu0 0
        %708 = vmatmul.mubr.bf16.gmra.mrb[0].mxu0 %v608
        %v709 = vpop.f32.mrb[0].mxu0
        %v710 = vadd.f32 0.0, %v709
        %v711 = vpop.f32.mrb[0].mxu0
        %v712 = vpop.f32.mrb[0].mxu0
        %v713 = vadd.f32 0.0, %v712
        %v714 = vpop.f32.mrb[0].mxu0
        %715 = vmatprep.mubr.bf16.mxu0 0
        %716 = vmatmul.mubr.bf16.gmra.mrb[0].mxu0 %v611
        %v717 = vpop.f32.mrb[0].mxu0
        %v718 = vadd.f32 0.0, %v717
        %v719 = vpop.f32.mrb[0].mxu0
        %v720 = vpop.f32.mrb[0].mxu0
        %v721 = vadd.f32 0.0, %v720
        %v722 = vpop.f32.mrb[0].mxu0
        %723 = vmatprep.mubr.bf16.mxu0 0
        %724 = vmatmul.mubr.bf16.gmra.mrb[0].mxu0 %v614
        %v725 = vpop.f32.mrb[0].mxu0
        %v726 = vadd.f32 0.0, %v725
        %v727 = vpop.f32.mrb[0].mxu0
        %v728 = vpop.f32.mrb[0].mxu0
        %v729 = vadd.f32 0.0, %v728
        %v730 = vpop.f32.mrb[0].mxu0
        %731 = vmatprep.mubr.bf16.mxu0 0
        %732 = vmatmul.mubr.bf16.gmra.mrb[0].mxu0 %v617
        %v733 = vpop.f32.mrb[0].mxu0
        %v734 = vadd.f32 0.0, %v733
        %v735 = vpop.f32.mrb[0].mxu0
        %v736 = vpop.f32.mrb[0].mxu0
        %v737 = vadd.f32 0.0, %v736
        %v738 = vpop.f32.mrb[0].mxu0
        %739 = vdwg.mxu0
        %v740 = vmul.f32 %v678, 0.125
        %v741 = vmul.f32 %v681, 0.125
        %v742 = vmul.f32 %v686, 0.125
        %v743 = vmul.f32 %v689, 0.125
        %v744 = vmul.f32 %v694, 0.125
        %v745 = vmul.f32 %v697, 0.125
        %v746 = vmul.f32 %v702, 0.125
        %v747 = vmul.f32 %v705, 0.125
        %v748 = vmul.f32 %v710, 0.125
        %v749 = vmul.f32 %v713, 0.125
        %v750 = vmul.f32 %v718, 0.125
        %v751 = vmul.f32 %v721, 0.125
        %v752 = vmul.f32 %v726, 0.125
        %v753 = vmul.f32 %v729, 0.125
        %v754 = vmul.f32 %v734, 0.125
        %v755 = vmul.f32 %v737, 0.125
        %756 = vmax.xlane.f32.xlu0 %v740
        %v757 = vpop.xlane.xlu0 %756
        %758 = vmax.xlane.f32.xlu0 %v741
        %v759 = vpop.xlane.xlu0 %758
        %760 = vmax.xlane.f32.xlu0 %v742
        %v761 = vpop.xlane.xlu0 %760
        %762 = vmax.xlane.f32.xlu0 %v743
        %v763 = vpop.xlane.xlu0 %762
        %764 = vmax.xlane.f32.xlu0 %v744
        %v765 = vpop.xlane.xlu0 %764
        %766 = vmax.xlane.f32.xlu0 %v745
        %v767 = vpop.xlane.xlu0 %766
        %768 = vmax.xlane.f32.xlu0 %v746
        %v769 = vpop.xlane.xlu0 %768
        %770 = vmax.xlane.f32.xlu0 %v747
        %v771 = vpop.xlane.xlu0 %770
        %772 = vmax.xlane.f32.xlu0 %v748
        %v773 = vpop.xlane.xlu0 %772
        %774 = vmax.xlane.f32.xlu0 %v749
        %v775 = vpop.xlane.xlu0 %774
        %776 = vmax.xlane.f32.xlu0 %v750
        %v777 = vpop.xlane.xlu0 %776
        %778 = vmax.xlane.f32.xlu0 %v751
        %v779 = vpop.xlane.xlu0 %778
        %780 = vmax.xlane.f32.xlu0 %v752
        %v781 = vpop.xlane.xlu0 %780
        %782 = vmax.xlane.f32.xlu0 %v753
        %v783 = vpop.xlane.xlu0 %782
        %784 = vmax.xlane.f32.xlu0 %v754
        %v785 = vpop.xlane.xlu0 %784
        %786 = vmax.xlane.f32.xlu0 %v755
        %v787 = vpop.xlane.xlu0 %786
        %v788 = vsub.f32 %v740, %v757
        %v789 = vsub.f32 %v741, %v759
        %v790 = vsub.f32 %v742, %v761
        %v791 = vsub.f32 %v743, %v763
        %v792 = vsub.f32 %v744, %v765
        %v793 = vsub.f32 %v745, %v767
        %v794 = vsub.f32 %v746, %v769
        %v795 = vsub.f32 %v747, %v771
        %v796 = vsub.f32 %v748, %v773
        %v797 = vsub.f32 %v749, %v775
        %v798 = vsub.f32 %v750, %v777
        %v799 = vsub.f32 %v751, %v779
        %v800 = vsub.f32 %v752, %v781
        %v801 = vsub.f32 %v753, %v783
        %v802 = vsub.f32 %v754, %v785
        %v803 = vsub.f32 %v755, %v787
        %v804 = vmul.f32 %v788, 1.442695
        %v805 = vpow.pop %v804
        %v806 = vmul.f32 %v789, 1.442695
        %v807 = vpow.pop %v806
        %v808 = vmul.f32 %v790, 1.442695
        %v809 = vpow.pop %v808
        %v810 = vmul.f32 %v791, 1.442695
        %v811 = vpow.pop %v810
        %v812 = vmul.f32 %v792, 1.442695
        %v813 = vpow.pop %v812
        %v814 = vmul.f32 %v793, 1.442695
        %v815 = vpow.pop %v814
        %v816 = vmul.f32 %v794, 1.442695
        %v817 = vpow.pop %v816
        %v818 = vmul.f32 %v795, 1.442695
        %v819 = vpow.pop %v818
        %v820 = vmul.f32 %v796, 1.442695
        %v821 = vpow.pop %v820
        %v822 = vmul.f32 %v797, 1.442695
        %v823 = vpow.pop %v822
        %v824 = vmul.f32 %v798, 1.442695
        %v825 = vpow.pop %v824
        %v826 = vmul.f32 %v799, 1.442695
        %v827 = vpow.pop %v826
        %v828 = vmul.f32 %v800, 1.442695
        %v829 = vpow.pop %v828
        %v830 = vmul.f32 %v801, 1.442695
        %v831 = vpow.pop %v830
        %v832 = vmul.f32 %v802, 1.442695
        %v833 = vpow.pop %v832
        %v834 = vmul.f32 %v803, 1.442695
        %v835 = vpow.pop %v834
        %836 = vadd.xlane.f32.xlu0 %v805
        %v837 = vpop.xlane.xlu0 %836
        %838 = vadd.xlane.f32.xlu0 %v807
        %v839 = vpop.xlane.xlu0 %838
        %840 = vadd.xlane.f32.xlu0 %v809
        %v841 = vpop.xlane.xlu0 %840
        %842 = vadd.xlane.f32.xlu0 %v811
        %v843 = vpop.xlane.xlu0 %842
        %844 = vadd.xlane.f32.xlu0 %v813
        %v845 = vpop.xlane.xlu0 %844
        %846 = vadd.xlane.f32.xlu0 %v815
        %v847 = vpop.xlane.xlu0 %846
        %848 = vadd.xlane.f32.xlu0 %v817
        %v849 = vpop.xlane.xlu0 %848
        %850 = vadd.xlane.f32.xlu0 %v819
        %v851 = vpop.xlane.xlu0 %850
        %852 = vadd.xlane.f32.xlu0 %v821
        %v853 = vpop.xlane.xlu0 %852
        %854 = vadd.xlane.f32.xlu0 %v823
        %v855 = vpop.xlane.xlu0 %854
        %856 = vadd.xlane.f32.xlu0 %v825
        %v857 = vpop.xlane.xlu0 %856
        %858 = vadd.xlane.f32.xlu0 %v827
        %v859 = vpop.xlane.xlu0 %858
        %860 = vadd.xlane.f32.xlu0 %v829
        %v861 = vpop.xlane.xlu0 %860
        %862 = vadd.xlane.f32.xlu0 %v831
        %v863 = vpop.xlane.xlu0 %862
        %864 = vadd.xlane.f32.xlu0 %v833
        %v865 = vpop.xlane.xlu0 %864
        %866 = vadd.xlane.f32.xlu0 %v835
        %v867 = vpop.xlane.xlu0 %866
        %v868 = vrcp.pop %v837
        %v869 = vrcp.pop %v839
        %v870 = vrcp.pop %v841
        %v871 = vrcp.pop %v843
        %v872 = vrcp.pop %v845
        %v873 = vrcp.pop %v847
        %v874 = vrcp.pop %v849
        %v875 = vrcp.pop %v851
        %v876 = vrcp.pop %v853
        %v877 = vrcp.pop %v855
        %v878 = vrcp.pop %v857
        %v879 = vrcp.pop %v859
        %v880 = vrcp.pop %v861
        %v881 = vrcp.pop %v863
        %v882 = vrcp.pop %v865
        %v883 = vrcp.pop %v867
        %v884 = vmul.f32 %v805, %v868
        %v885 = vmul.f32 %v807, %v869
        %v886 = vmul.f32 %v809, %v870
        %v887 = vmul.f32 %v811, %v871
        %v888 = vmul.f32 %v813, %v872
        %v889 = vmul.f32 %v815, %v873
        %v890 = vmul.f32 %v817, %v874
        %v891 = vmul.f32 %v819, %v875
        %v892 = vmul.f32 %v821, %v876
        %v893 = vmul.f32 %v823, %v877
        %v894 = vmul.f32 %v825, %v878
        %v895 = vmul.f32 %v827, %v879
        %v896 = vmul.f32 %v829, %v880
        %v897 = vmul.f32 %v831, %v881
        %v898 = vmul.f32 %v833, %v882
        %v899 = vmul.f32 %v835, %v883
        %v900 = vpack.c.bf16 %v885, %v884
        %v901 = vpack.c.bf16 %v887, %v886
        %v902 = vpack.c.bf16 %v889, %v888
        %v903 = vpack.c.bf16 %v891, %v890
        %v904 = vpack.c.bf16 %v893, %v892
        %v905 = vpack.c.bf16 %v895, %v894
        %v906 = vpack.c.bf16 %v897, %v896
        %v907 = vpack.c.bf16 %v899, %v898
        %908 = vmatprep.subr.bf16.mxu0 0
        %909 = vmatpush1.bf16.msra.mxu0 %v586
        %910 = vmatprep.subr.bf16.mxu0 0
        %911 = vmatpush1.bf16.msra.mxu0 %v587
        %912 = vmatprep.subr.bf16.mxu0 0
        %913 = vmatpush1.bf16.msra.mxu0 %v588
        %914 = vmatprep.subr.bf16.mxu0 0
        %915 = vmatpush1.bf16.msra.mxu0 %v589
        %916 = vmatprep.subr.bf16.mxu0 0
        %917 = vmatpush1.bf16.msra.mxu0 %v590
        %918 = vmatprep.subr.bf16.mxu0 0
        %919 = vmatpush1.bf16.msra.mxu0 %v591
        %920 = vmatprep.subr.bf16.mxu0 0
        %921 = vmatpush1.bf16.msra.mxu0 %v592
        %922 = vmatprep.subr.bf16.mxu0 0
        %923 = vmatpush1.bf16.msra.mxu0 %v593
        %924 = vmatprep.subr.bf16.mxu0 0
        %925 = vmatpush1.bf16.msra.mxu0 0
        %926 = vmatprep.subr.bf16.mxu0 0
        %927 = vmatpush1.bf16.msra.mxu0 0
        %928 = vmatprep.subr.bf16.mxu0 0
        %929 = vmatpush1.bf16.msra.mxu0 0
        %930 = vmatprep.subr.bf16.mxu0 0
        %931 = vmatpush1.bf16.msra.mxu0 0
        %932 = vmatprep.subr.bf16.mxu0 0
        %933 = vmatpush1.bf16.msra.mxu0 0
        %934 = vmatprep.subr.bf16.mxu0 0
        %935 = vmatpush1.bf16.msra.mxu0 0
        %936 = vmatprep.subr.bf16.mxu0 0
        %937 = vmatpush1.bf16.msra.mxu0 0
        %938 = vmatprep.subr.bf16.mxu0 0
        %939 = vmatpush1.bf16.msra.mxu0 0
        %940 = vmatprep.mubr.bf16.mxu0 0
        %941 = vmatmul.mubr.bf16.gmra.mrb[0].mxu0 %v900
        %v942 = vpop.f32.mrb[0].mxu0
        %v943 = vadd.f32 0.0, %v942
        %v944 = vpop.f32.mrb[0].mxu0
        %v945 = vpop.f32.mrb[0].mxu0
        %v946 = vadd.f32 0.0, %v945
        %v947 = vpop.f32.mrb[0].mxu0
        %948 = vmatprep.mubr.bf16.mxu0 0
        %949 = vmatmul.mubr.bf16.gmra.mrb[0].mxu0 %v901
        %v950 = vpop.f32.mrb[0].mxu0
        %v951 = vadd.f32 0.0, %v950
        %v952 = vpop.f32.mrb[0].mxu0
        %v953 = vpop.f32.mrb[0].mxu0
        %v954 = vadd.f32 0.0, %v953
        %v955 = vpop.f32.mrb[0].mxu0
        %956 = vmatprep.mubr.bf16.mxu0 0
        %957 = vmatmul.mubr.bf16.gmra.mrb[0].mxu0 %v902
        %v958 = vpop.f32.mrb[0].mxu0
        %v959 = vadd.f32 0.0, %v958
        %v960 = vpop.f32.mrb[0].mxu0
        %v961 = vpop.f32.mrb[0].mxu0
        %v962 = vadd.f32 0.0, %v961
        %v963 = vpop.f32.mrb[0].mxu0
        %964 = vmatprep.mubr.bf16.mxu0 0
        %965 = vmatmul.mubr.bf16.gmra.mrb[0].mxu0 %v903
        %v966 = vpop.f32.mrb[0].mxu0
        %v967 = vadd.f32 0.0, %v966
        %v968 = vpop.f32.mrb[0].mxu0
        %v969 = vpop.f32.mrb[0].mxu0
        %v970 = vadd.f32 0.0, %v969
        %v971 = vpop.f32.mrb[0].mxu0
        %972 = vmatprep.mubr.bf16.mxu0 0
        %973 = vmatmul.mubr.bf16.gmra.mrb[0].mxu0 %v904
        %v974 = vpop.f32.mrb[0].mxu0
        %v975 = vadd.f32 0.0, %v974
        %v976 = vpop.f32.mrb[0].mxu0
        %v977 = vpop.f32.mrb[0].mxu0
        %v978 = vadd.f32 0.0, %v977
        %v979 = vpop.f32.mrb[0].mxu0
        %980 = vmatprep.mubr.bf16.mxu0 0
        %981 = vmatmul.mubr.bf16.gmra.mrb[0].mxu0 %v905
        %v982 = vpop.f32.mrb[0].mxu0
        %v983 = vadd.f32 0.0, %v982
        %v984 = vpop.f32.mrb[0].mxu0
        %v985 = vpop.f32.mrb[0].mxu0
        %v986 = vadd.f32 0.0, %v985
        %v987 = vpop.f32.mrb[0].mxu0
        %988 = vmatprep.mubr.bf16.mxu0 0
        %989 = vmatmul.mubr.bf16.gmra.mrb[0].mxu0 %v906
        %v990 = vpop.f32.mrb[0].mxu0
        %v991 = vadd.f32 0.0, %v990
        %v992 = vpop.f32.mrb[0].mxu0
        %v993 = vpop.f32.mrb[0].mxu0
        %v994 = vadd.f32 0.0, %v993
        %v995 = vpop.f32.mrb[0].mxu0
        %996 = vmatprep.mubr.bf16.mxu0 0
        %997 = vmatmul.mubr.bf16.gmra.mrb[0].mxu0 %v907
        %v998 = vpop.f32.mrb[0].mxu0
        %v999 = vadd.f32 0.0, %v998
        %v1000 = vpop.f32.mrb[0].mxu0
        %v1001 = vpop.f32.mrb[0].mxu0
        %v1002 = vadd.f32 0.0, %v1001
        %v1003 = vpop.f32.mrb[0].mxu0
        %1004 = vdwg.mxu0
        %1013 = vrot.lane.b32.xlu0 %v570, 64
        %v1014 = vpop.permute.xlu0 %1013
        %1015 = vrot.lane.b32.xlu0 %v571, 64
        %v1016 = vpop.permute.xlu0 %1015
        %1017 = vrot.lane.b32.xlu0 %v572, 64
        %v1018 = vpop.permute.xlu0 %1017
        %1019 = vrot.lane.b32.xlu0 %v573, 64
        %v1020 = vpop.permute.xlu0 %1019
        %1021 = vrot.lane.b32.xlu0 %v574, 64
        %v1022 = vpop.permute.xlu0 %1021
        %1023 = vrot.lane.b32.xlu0 %v575, 64
        %v1024 = vpop.permute.xlu0 %1023
        %1025 = vrot.lane.b32.xlu0 %v576, 64
        %v1026 = vpop.permute.xlu0 %1025
        %1027 = vrot.lane.b32.xlu0 %v577, 64
        %v1028 = vpop.permute.xlu0 %1027
        %1037 = vrot.lane.b32.xlu0 %v578, 64
        %v1038 = vpop.permute.xlu0 %1037
        %1039 = vrot.lane.b32.xlu0 %v579, 64
        %v1040 = vpop.permute.xlu0 %1039
        %1041 = vrot.lane.b32.xlu0 %v580, 64
        %v1042 = vpop.permute.xlu0 %1041
        %1043 = vrot.lane.b32.xlu0 %v581, 64
        %v1044 = vpop.permute.xlu0 %1043
        %1045 = vrot.lane.b32.xlu0 %v582, 64
        %v1046 = vpop.permute.xlu0 %1045
        %1047 = vrot.lane.b32.xlu0 %v583, 64
        %v1048 = vpop.permute.xlu0 %1047
        %1049 = vrot.lane.b32.xlu0 %v584, 64
        %v1050 = vpop.permute.xlu0 %1049
        %1051 = vrot.lane.b32.xlu0 %v585, 64
        %v1052 = vpop.permute.xlu0 %1051
        %v1054 = vsel %vm594, %v1014, 0
        %v1057 = vsel %vm594, %v1016, 0
        %v1060 = vsel %vm594, %v1018, 0
        %v1063 = vsel %vm594, %v1020, 0
        %v1066 = vsel %vm594, %v1022, 0
        %v1069 = vsel %vm594, %v1024, 0
        %v1072 = vsel %vm594, %v1026, 0
        %v1075 = vsel %vm594, %v1028, 0
        %v1078 = vsel %vm594, %v1038, 0
        %v1081 = vsel %vm594, %v1040, 0
        %v1084 = vsel %vm594, %v1042, 0
        %v1087 = vsel %vm594, %v1044, 0
        %v1090 = vsel %vm594, %v1046, 0
        %v1093 = vsel %vm594, %v1048, 0
        %v1096 = vsel %vm594, %v1050, 0
        %v1099 = vsel %vm594, %v1052, 0
        %1101 = vmatprep.subr.bf16.mxu0 0
        %1102 = vmatpush1.bf16.xpose.msra.mxu0 %v1078
        %1103 = vmatprep.subr.bf16.mxu0 0
        %1104 = vmatpush1.bf16.xpose.msra.mxu0 %v1081
        %1105 = vmatprep.subr.bf16.mxu0 0
        %1106 = vmatpush1.bf16.xpose.msra.mxu0 %v1084
        %1107 = vmatprep.subr.bf16.mxu0 0
        %1108 = vmatpush1.bf16.xpose.msra.mxu0 %v1087
        %1109 = vmatprep.subr.bf16.mxu0 0
        %1110 = vmatpush1.bf16.xpose.msra.mxu0 %v1090
        %1111 = vmatprep.subr.bf16.mxu0 0
        %1112 = vmatpush1.bf16.xpose.msra.mxu0 %v1093
        %1113 = vmatprep.subr.bf16.mxu0 0
        %1114 = vmatpush1.bf16.xpose.msra.mxu0 %v1096
        %1115 = vmatprep.subr.bf16.mxu0 0
        %1116 = vmatpush1.bf16.xpose.msra.mxu0 %v1099
        %1117 = vmatprep.subr.bf16.mxu0 0
        %1118 = vmatpush1.bf16.xpose.msra.mxu0 0
        %1119 = vmatprep.subr.bf16.mxu0 0
        %1120 = vmatpush1.bf16.xpose.msra.mxu0 0
        %1121 = vmatprep.subr.bf16.mxu0 0
        %1122 = vmatpush1.bf16.xpose.msra.mxu0 0
        %1123 = vmatprep.subr.bf16.mxu0 0
        %1124 = vmatpush1.bf16.xpose.msra.mxu0 0
        %1125 = vmatprep.subr.bf16.mxu0 0
        %1126 = vmatpush1.bf16.xpose.msra.mxu0 0
        %1127 = vmatprep.subr.bf16.mxu0 0
        %1128 = vmatpush1.bf16.xpose.msra.mxu0 0
        %1129 = vmatprep.subr.bf16.mxu0 0
        %1130 = vmatpush1.bf16.xpose.msra.mxu0 0
        %1131 = vmatprep.subr.bf16.mxu0 0
        %1132 = vmatpush1.bf16.xpose.msra.mxu0 0
        %1133 = vmatprep.mubr.bf16.mxu0 0
        %1134 = vmatmul.mubr.bf16.gmra.mrb[0].mxu0 %v1054
        %v1135 = vpop.f32.mrb[0].mxu0
        %v1136 = vadd.f32 0.0, %v1135
        %v1137 = vpop.f32.mrb[0].mxu0
        %v1138 = vpop.f32.mrb[0].mxu0
        %v1139 = vadd.f32 0.0, %v1138
        %v1140 = vpop.f32.mrb[0].mxu0
        %1141 = vmatprep.mubr.bf16.mxu0 0
        %1142 = vmatmul.mubr.bf16.gmra.mrb[0].mxu0 %v1057
        %v1143 = vpop.f32.mrb[0].mxu0
        %v1144 = vadd.f32 0.0, %v1143
        %v1145 = vpop.f32.mrb[0].mxu0
        %v1146 = vpop.f32.mrb[0].mxu0
        %v1147 = vadd.f32 0.0, %v1146
        %v1148 = vpop.f32.mrb[0].mxu0
        %1149 = vmatprep.mubr.bf16.mxu0 0
        %1150 = vmatmul.mubr.bf16.gmra.mrb[0].mxu0 %v1060
        %v1151 = vpop.f32.mrb[0].mxu0
        %v1152 = vadd.f32 0.0, %v1151
        %v1153 = vpop.f32.mrb[0].mxu0
        %v1154 = vpop.f32.mrb[0].mxu0
        %v1155 = vadd.f32 0.0, %v1154
        %v1156 = vpop.f32.mrb[0].mxu0
        %1157 = vmatprep.mubr.bf16.mxu0 0
        %1158 = vmatmul.mubr.bf16.gmra.mrb[0].mxu0 %v1063
        %v1159 = vpop.f32.mrb[0].mxu0
        %v1160 = vadd.f32 0.0, %v1159
        %v1161 = vpop.f32.mrb[0].mxu0
        %v1162 = vpop.f32.mrb[0].mxu0
        %v1163 = vadd.f32 0.0, %v1162
        %v1164 = vpop.f32.mrb[0].mxu0
        %1165 = vmatprep.mubr.bf16.mxu0 0
        %1166 = vmatmul.mubr.bf16.gmra.mrb[0].mxu0 %v1066
        %v1167 = vpop.f32.mrb[0].mxu0
        %v1168 = vadd.f32 0.0, %v1167
        %v1169 = vpop.f32.mrb[0].mxu0
        %v1170 = vpop.f32.mrb[0].mxu0
        %v1171 = vadd.f32 0.0, %v1170
        %v1172 = vpop.f32.mrb[0].mxu0
        %1173 = vmatprep.mubr.bf16.mxu0 0
        %1174 = vmatmul.mubr.bf16.gmra.mrb[0].mxu0 %v1069
        %v1175 = vpop.f32.mrb[0].mxu0
        %v1176 = vadd.f32 0.0, %v1175
        %v1177 = vpop.f32.mrb[0].mxu0
        %v1178 = vpop.f32.mrb[0].mxu0
        %v1179 = vadd.f32 0.0, %v1178
        %v1180 = vpop.f32.mrb[0].mxu0
        %1181 = vmatprep.mubr.bf16.mxu0 0
        %1182 = vmatmul.mubr.bf16.gmra.mrb[0].mxu0 %v1072
        %v1183 = vpop.f32.mrb[0].mxu0
        %v1184 = vadd.f32 0.0, %v1183
        %v1185 = vpop.f32.mrb[0].mxu0
        %v1186 = vpop.f32.mrb[0].mxu0
        %v1187 = vadd.f32 0.0, %v1186
        %v1188 = vpop.f32.mrb[0].mxu0
        %1189 = vmatprep.mubr.bf16.mxu0 0
        %1190 = vmatmul.mubr.bf16.gmra.mrb[0].mxu0 %v1075
        %v1191 = vpop.f32.mrb[0].mxu0
        %v1192 = vadd.f32 0.0, %v1191
        %v1193 = vpop.f32.mrb[0].mxu0
        %v1194 = vpop.f32.mrb[0].mxu0
        %v1195 = vadd.f32 0.0, %v1194
        %v1196 = vpop.f32.mrb[0].mxu0
        %1197 = vdwg.mxu0
        %v1198 = vmul.f32 %v1136, 0.125
        %v1199 = vmul.f32 %v1139, 0.125
        %v1200 = vmul.f32 %v1144, 0.125
        %v1201 = vmul.f32 %v1147, 0.125
        %v1202 = vmul.f32 %v1152, 0.125
        %v1203 = vmul.f32 %v1155, 0.125
        %v1204 = vmul.f32 %v1160, 0.125
        %v1205 = vmul.f32 %v1163, 0.125
        %v1206 = vmul.f32 %v1168, 0.125
        %v1207 = vmul.f32 %v1171, 0.125
        %v1208 = vmul.f32 %v1176, 0.125
        %v1209 = vmul.f32 %v1179, 0.125
        %v1210 = vmul.f32 %v1184, 0.125
        %v1211 = vmul.f32 %v1187, 0.125
        %v1212 = vmul.f32 %v1192, 0.125
        %v1213 = vmul.f32 %v1195, 0.125
        %1214 = vmax.xlane.f32.xlu0 %v1198
        %v1215 = vpop.xlane.xlu0 %1214
        %1216 = vmax.xlane.f32.xlu0 %v1199
        %v1217 = vpop.xlane.xlu0 %1216
        %1218 = vmax.xlane.f32.xlu0 %v1200
        %v1219 = vpop.xlane.xlu0 %1218
        %1220 = vmax.xlane.f32.xlu0 %v1201
        %v1221 = vpop.xlane.xlu0 %1220
        %1222 = vmax.xlane.f32.xlu0 %v1202
        %v1223 = vpop.xlane.xlu0 %1222
        %1224 = vmax.xlane.f32.xlu0 %v1203
        %v1225 = vpop.xlane.xlu0 %1224
        %1226 = vmax.xlane.f32.xlu0 %v1204
        %v1227 = vpop.xlane.xlu0 %1226
        %1228 = vmax.xlane.f32.xlu0 %v1205
        %v1229 = vpop.xlane.xlu0 %1228
        %1230 = vmax.xlane.f32.xlu0 %v1206
        %v1231 = vpop.xlane.xlu0 %1230
        %1232 = vmax.xlane.f32.xlu0 %v1207
        %v1233 = vpop.xlane.xlu0 %1232
        %1234 = vmax.xlane.f32.xlu0 %v1208
        %v1235 = vpop.xlane.xlu0 %1234
        %1236 = vmax.xlane.f32.xlu0 %v1209
        %v1237 = vpop.xlane.xlu0 %1236
        %1238 = vmax.xlane.f32.xlu0 %v1210
        %v1239 = vpop.xlane.xlu0 %1238
        %1240 = vmax.xlane.f32.xlu0 %v1211
        %v1241 = vpop.xlane.xlu0 %1240
        %1242 = vmax.xlane.f32.xlu0 %v1212
        %v1243 = vpop.xlane.xlu0 %1242
        %1244 = vmax.xlane.f32.xlu0 %v1213
        %v1245 = vpop.xlane.xlu0 %1244
        %v1246 = vsub.f32 %v1198, %v1215
        %v1247 = vsub.f32 %v1199, %v1217
        %v1248 = vsub.f32 %v1200, %v1219
        %v1249 = vsub.f32 %v1201, %v1221
        %v1250 = vsub.f32 %v1202, %v1223
        %v1251 = vsub.f32 %v1203, %v1225
        %v1252 = vsub.f32 %v1204, %v1227
        %v1253 = vsub.f32 %v1205, %v1229
        %v1254 = vsub.f32 %v1206, %v1231
        %v1255 = vsub.f32 %v1207, %v1233
        %v1256 = vsub.f32 %v1208, %v1235
        %v1257 = vsub.f32 %v1209, %v1237
        %v1258 = vsub.f32 %v1210, %v1239
        %v1259 = vsub.f32 %v1211, %v1241
        %v1260 = vsub.f32 %v1212, %v1243
        %v1261 = vsub.f32 %v1213, %v1245
        %v1262 = vmul.f32 %v1246, 1.442695
        %v1263 = vpow.pop %v1262
        %v1264 = vmul.f32 %v1247, 1.442695
        %v1265 = vpow.pop %v1264
        %v1266 = vmul.f32 %v1248, 1.442695
        %v1267 = vpow.pop %v1266
        %v1268 = vmul.f32 %v1249, 1.442695
        %v1269 = vpow.pop %v1268
        %v1270 = vmul.f32 %v1250, 1.442695
        %v1271 = vpow.pop %v1270
        %v1272 = vmul.f32 %v1251, 1.442695
        %v1273 = vpow.pop %v1272
        %v1274 = vmul.f32 %v1252, 1.442695
        %v1275 = vpow.pop %v1274
        %v1276 = vmul.f32 %v1253, 1.442695
        %v1277 = vpow.pop %v1276
        %v1278 = vmul.f32 %v1254, 1.442695
        %v1279 = vpow.pop %v1278
        %v1280 = vmul.f32 %v1255, 1.442695
        %v1281 = vpow.pop %v1280
        %v1282 = vmul.f32 %v1256, 1.442695
        %v1283 = vpow.pop %v1282
        %v1284 = vmul.f32 %v1257, 1.442695
        %v1285 = vpow.pop %v1284
        %v1286 = vmul.f32 %v1258, 1.442695
        %v1287 = vpow.pop %v1286
        %v1288 = vmul.f32 %v1259, 1.442695
        %v1289 = vpow.pop %v1288
        %v1290 = vmul.f32 %v1260, 1.442695
        %v1291 = vpow.pop %v1290
        %v1292 = vmul.f32 %v1261, 1.442695
        %v1293 = vpow.pop %v1292
        %1294 = vadd.xlane.f32.xlu0 %v1263
        %v1295 = vpop.xlane.xlu0 %1294
        %1296 = vadd.xlane.f32.xlu0 %v1265
        %v1297 = vpop.xlane.xlu0 %1296
        %1298 = vadd.xlane.f32.xlu0 %v1267
        %v1299 = vpop.xlane.xlu0 %1298
        %1300 = vadd.xlane.f32.xlu0 %v1269
        %v1301 = vpop.xlane.xlu0 %1300
        %1302 = vadd.xlane.f32.xlu0 %v1271
        %v1303 = vpop.xlane.xlu0 %1302
        %1304 = vadd.xlane.f32.xlu0 %v1273
        %v1305 = vpop.xlane.xlu0 %1304
        %1306 = vadd.xlane.f32.xlu0 %v1275
        %v1307 = vpop.xlane.xlu0 %1306
        %1308 = vadd.xlane.f32.xlu0 %v1277
        %v1309 = vpop.xlane.xlu0 %1308
        %1310 = vadd.xlane.f32.xlu0 %v1279
        %v1311 = vpop.xlane.xlu0 %1310
        %1312 = vadd.xlane.f32.xlu0 %v1281
        %v1313 = vpop.xlane.xlu0 %1312
        %1314 = vadd.xlane.f32.xlu0 %v1283
        %v1315 = vpop.xlane.xlu0 %1314
        %1316 = vadd.xlane.f32.xlu0 %v1285
        %v1317 = vpop.xlane.xlu0 %1316
        %1318 = vadd.xlane.f32.xlu0 %v1287
        %v1319 = vpop.xlane.xlu0 %1318
        %1320 = vadd.xlane.f32.xlu0 %v1289
        %v1321 = vpop.xlane.xlu0 %1320
        %1322 = vadd.xlane.f32.xlu0 %v1291
        %v1323 = vpop.xlane.xlu0 %1322
        %1324 = vadd.xlane.f32.xlu0 %v1293
        %v1325 = vpop.xlane.xlu0 %1324
        %v1326 = vrcp.pop %v1295
        %v1327 = vrcp.pop %v1297
        %v1328 = vrcp.pop %v1299
        %v1329 = vrcp.pop %v1301
        %v1330 = vrcp.pop %v1303
        %v1331 = vrcp.pop %v1305
        %v1332 = vrcp.pop %v1307
        %v1333 = vrcp.pop %v1309
        %v1334 = vrcp.pop %v1311
        %v1335 = vrcp.pop %v1313
        %v1336 = vrcp.pop %v1315
        %v1337 = vrcp.pop %v1317
        %v1338 = vrcp.pop %v1319
        %v1339 = vrcp.pop %v1321
        %v1340 = vrcp.pop %v1323
        %v1341 = vrcp.pop %v1325
        %v1342 = vmul.f32 %v1263, %v1326
        %v1343 = vmul.f32 %v1265, %v1327
        %v1344 = vmul.f32 %v1267, %v1328
        %v1345 = vmul.f32 %v1269, %v1329
        %v1346 = vmul.f32 %v1271, %v1330
        %v1347 = vmul.f32 %v1273, %v1331
        %v1348 = vmul.f32 %v1275, %v1332
        %v1349 = vmul.f32 %v1277, %v1333
        %v1350 = vmul.f32 %v1279, %v1334
        %v1351 = vmul.f32 %v1281, %v1335
        %v1352 = vmul.f32 %v1283, %v1336
        %v1353 = vmul.f32 %v1285, %v1337
        %v1354 = vmul.f32 %v1287, %v1338
        %v1355 = vmul.f32 %v1289, %v1339
        %v1356 = vmul.f32 %v1291, %v1340
        %v1357 = vmul.f32 %v1293, %v1341
        %v1358 = vpack.c.bf16 %v1343, %v1342
        %v1359 = vpack.c.bf16 %v1345, %v1344
        %v1360 = vpack.c.bf16 %v1347, %v1346
        %v1361 = vpack.c.bf16 %v1349, %v1348
        %v1362 = vpack.c.bf16 %v1351, %v1350
        %v1363 = vpack.c.bf16 %v1353, %v1352
        %v1364 = vpack.c.bf16 %v1355, %v1354
        %v1365 = vpack.c.bf16 %v1357, %v1356
        %1374 = vrot.lane.b32.xlu0 %v586, 64
        %v1375 = vpop.permute.xlu0 %1374
        %1376 = vrot.lane.b32.xlu0 %v587, 64
        %v1377 = vpop.permute.xlu0 %1376
        %1378 = vrot.lane.b32.xlu0 %v588, 64
        %v1379 = vpop.permute.xlu0 %1378
        %1380 = vrot.lane.b32.xlu0 %v589, 64
        %v1381 = vpop.permute.xlu0 %1380
        %1382 = vrot.lane.b32.xlu0 %v590, 64
        %v1383 = vpop.permute.xlu0 %1382
        %1384 = vrot.lane.b32.xlu0 %v591, 64
        %v1385 = vpop.permute.xlu0 %1384
        %1386 = vrot.lane.b32.xlu0 %v592, 64
        %v1387 = vpop.permute.xlu0 %1386
        %1388 = vrot.lane.b32.xlu0 %v593, 64
        %v1389 = vpop.permute.xlu0 %1388
        %1398 = vmatprep.subr.bf16.mxu0 0
        %1399 = vmatpush1.bf16.msra.mxu0 %v1375
        %1400 = vmatprep.subr.bf16.mxu0 0
        %1401 = vmatpush1.bf16.msra.mxu0 %v1377
        %1402 = vmatprep.subr.bf16.mxu0 0
        %1403 = vmatpush1.bf16.msra.mxu0 %v1379
        %1404 = vmatprep.subr.bf16.mxu0 0
        %1405 = vmatpush1.bf16.msra.mxu0 %v1381
        %1406 = vmatprep.subr.bf16.mxu0 0
        %1407 = vmatpush1.bf16.msra.mxu0 %v1383
        %1408 = vmatprep.subr.bf16.mxu0 0
        %1409 = vmatpush1.bf16.msra.mxu0 %v1385
        %1410 = vmatprep.subr.bf16.mxu0 0
        %1411 = vmatpush1.bf16.msra.mxu0 %v1387
        %1412 = vmatprep.subr.bf16.mxu0 0
        %1413 = vmatpush1.bf16.msra.mxu0 %v1389
        %1414 = vmatprep.subr.bf16.mxu0 0
        %1415 = vmatpush1.bf16.msra.mxu0 0
        %1416 = vmatprep.subr.bf16.mxu0 0
        %1417 = vmatpush1.bf16.msra.mxu0 0
        %1418 = vmatprep.subr.bf16.mxu0 0
        %1419 = vmatpush1.bf16.msra.mxu0 0
        %1420 = vmatprep.subr.bf16.mxu0 0
        %1421 = vmatpush1.bf16.msra.mxu0 0
        %1422 = vmatprep.subr.bf16.mxu0 0
        %1423 = vmatpush1.bf16.msra.mxu0 0
        %1424 = vmatprep.subr.bf16.mxu0 0
        %1425 = vmatpush1.bf16.msra.mxu0 0
        %1426 = vmatprep.subr.bf16.mxu0 0
        %1427 = vmatpush1.bf16.msra.mxu0 0
        %1428 = vmatprep.subr.bf16.mxu0 0
        %1429 = vmatpush1.bf16.msra.mxu0 0
        %1430 = vmatprep.mubr.bf16.mxu0 0
        %1431 = vmatmul.mubr.bf16.gmra.mrb[0].mxu0 %v1358
        %v1432 = vpop.f32.mrb[0].mxu0
        %v1433 = vadd.f32 0.0, %v1432
        %v1434 = vpop.f32.mrb[0].mxu0
        %v1435 = vpop.f32.mrb[0].mxu0
        %v1436 = vadd.f32 0.0, %v1435
        %v1437 = vpop.f32.mrb[0].mxu0
        %1438 = vmatprep.mubr.bf16.mxu0 0
        %1439 = vmatmul.mubr.bf16.gmra.mrb[0].mxu0 %v1359
        %v1440 = vpop.f32.mrb[0].mxu0
        %v1441 = vadd.f32 0.0, %v1440
        %v1442 = vpop.f32.mrb[0].mxu0
        %v1443 = vpop.f32.mrb[0].mxu0
        %v1444 = vadd.f32 0.0, %v1443
        %v1445 = vpop.f32.mrb[0].mxu0
        %1446 = vmatprep.mubr.bf16.mxu0 0
        %1447 = vmatmul.mubr.bf16.gmra.mrb[0].mxu0 %v1360
        %v1448 = vpop.f32.mrb[0].mxu0
        %v1449 = vadd.f32 0.0, %v1448
        %v1450 = vpop.f32.mrb[0].mxu0
        %v1451 = vpop.f32.mrb[0].mxu0
        %v1452 = vadd.f32 0.0, %v1451
        %v1453 = vpop.f32.mrb[0].mxu0
        %1454 = vmatprep.mubr.bf16.mxu0 0
        %1455 = vmatmul.mubr.bf16.gmra.mrb[0].mxu0 %v1361
        %v1456 = vpop.f32.mrb[0].mxu0
        %v1457 = vadd.f32 0.0, %v1456
        %v1458 = vpop.f32.mrb[0].mxu0
        %v1459 = vpop.f32.mrb[0].mxu0
        %v1460 = vadd.f32 0.0, %v1459
        %v1461 = vpop.f32.mrb[0].mxu0
        %1462 = vmatprep.mubr.bf16.mxu0 0
        %1463 = vmatmul.mubr.bf16.gmra.mrb[0].mxu0 %v1362
        %v1464 = vpop.f32.mrb[0].mxu0
        %v1465 = vadd.f32 0.0, %v1464
        %v1466 = vpop.f32.mrb[0].mxu0
        %v1467 = vpop.f32.mrb[0].mxu0
        %v1468 = vadd.f32 0.0, %v1467
        %v1469 = vpop.f32.mrb[0].mxu0
        %1470 = vmatprep.mubr.bf16.mxu0 0
        %1471 = vmatmul.mubr.bf16.gmra.mrb[0].mxu0 %v1363
        %v1472 = vpop.f32.mrb[0].mxu0
        %v1473 = vadd.f32 0.0, %v1472
        %v1474 = vpop.f32.mrb[0].mxu0
        %v1475 = vpop.f32.mrb[0].mxu0
        %v1476 = vadd.f32 0.0, %v1475
        %v1477 = vpop.f32.mrb[0].mxu0
        %1478 = vmatprep.mubr.bf16.mxu0 0
        %1479 = vmatmul.mubr.bf16.gmra.mrb[0].mxu0 %v1364
        %v1480 = vpop.f32.mrb[0].mxu0
        %v1481 = vadd.f32 0.0, %v1480
        %v1482 = vpop.f32.mrb[0].mxu0
        %v1483 = vpop.f32.mrb[0].mxu0
        %v1484 = vadd.f32 0.0, %v1483
        %v1485 = vpop.f32.mrb[0].mxu0
        %1486 = vmatprep.mubr.bf16.mxu0 0
        %1487 = vmatmul.mubr.bf16.gmra.mrb[0].mxu0 %v1365
        %v1488 = vpop.f32.mrb[0].mxu0
        %v1489 = vadd.f32 0.0, %v1488
        %v1490 = vpop.f32.mrb[0].mxu0
        %v1491 = vpop.f32.mrb[0].mxu0
        %v1492 = vadd.f32 0.0, %v1491
        %v1493 = vpop.f32.mrb[0].mxu0
        %1494 = vdwg.mxu0
        %1511 = vrot.lane.b32.xlu0 %v1433, 64
        %v1512 = vpop.permute.xlu0 %1511
        %1513 = vrot.lane.b32.xlu0 %v1436, 64
        %v1514 = vpop.permute.xlu0 %1513
        %1515 = vrot.lane.b32.xlu0 %v1441, 64
        %v1516 = vpop.permute.xlu0 %1515
        %1517 = vrot.lane.b32.xlu0 %v1444, 64
        %v1518 = vpop.permute.xlu0 %1517
        %1519 = vrot.lane.b32.xlu0 %v1449, 64
        %v1520 = vpop.permute.xlu0 %1519
        %1521 = vrot.lane.b32.xlu0 %v1452, 64
        %v1522 = vpop.permute.xlu0 %1521
        %1523 = vrot.lane.b32.xlu0 %v1457, 64
        %v1524 = vpop.permute.xlu0 %1523
        %1525 = vrot.lane.b32.xlu0 %v1460, 64
        %v1526 = vpop.permute.xlu0 %1525
        %1527 = vrot.lane.b32.xlu0 %v1465, 64
        %v1528 = vpop.permute.xlu0 %1527
        %1529 = vrot.lane.b32.xlu0 %v1468, 64
        %v1530 = vpop.permute.xlu0 %1529
        %1531 = vrot.lane.b32.xlu0 %v1473, 64
        %v1532 = vpop.permute.xlu0 %1531
        %1533 = vrot.lane.b32.xlu0 %v1476, 64
        %v1534 = vpop.permute.xlu0 %1533
        %1535 = vrot.lane.b32.xlu0 %v1481, 64
        %v1536 = vpop.permute.xlu0 %1535
        %1537 = vrot.lane.b32.xlu0 %v1484, 64
        %v1538 = vpop.permute.xlu0 %1537
        %1539 = vrot.lane.b32.xlu0 %v1489, 64
        %v1540 = vpop.permute.xlu0 %1539
        %1541 = vrot.lane.b32.xlu0 %v1492, 64
        %v1542 = vpop.permute.xlu0 %1541
        %v1559 = vsel %vm594, %v943, %v1512
        %v1560 = vsel %vm594, %v946, %v1514
        %v1561 = vsel %vm594, %v951, %v1516
        %v1562 = vsel %vm594, %v954, %v1518
        %v1563 = vsel %vm594, %v959, %v1520
        %v1564 = vsel %vm594, %v962, %v1522
        %v1565 = vsel %vm594, %v967, %v1524
        %v1566 = vsel %vm594, %v970, %v1526
        %v1567 = vsel %vm594, %v975, %v1528
        %v1568 = vsel %vm594, %v978, %v1530
        %v1569 = vsel %vm594, %v983, %v1532
        %v1570 = vsel %vm594, %v986, %v1534
        %v1571 = vsel %vm594, %v991, %v1536
        %v1572 = vsel %vm594, %v994, %v1538
        %v1573 = vsel %vm594, %v999, %v1540
        %v1574 = vsel %vm594, %v1002, %v1542
        %1575 = vst [vmem:[%s518] sm:$0xff] %v1559
        %1576 = vst [vmem:[%s518 + $0x8] sm:$0xff] %v1560
        %1577 = vst [vmem:[%s518 + $0x10] sm:$0xff] %v1561
        %1578 = vst [vmem:[%s518 + $0x18] sm:$0xff] %v1562
        %1579 = vst [vmem:[%s518 + $0x20] sm:$0xff] %v1563
        %1580 = vst [vmem:[%s518 + $0x28] sm:$0xff] %v1564
        %1581 = vst [vmem:[%s518 + $0x30] sm:$0xff] %v1565
        %1582 = vst [vmem:[%s518 + $0x38] sm:$0xff] %v1566
        %1583 = vst [vmem:[%s518 + $0x40] sm:$0xff] %v1567
        %1584 = vst [vmem:[%s518 + $0x48] sm:$0xff] %v1568
        %1585 = vst [vmem:[%s518 + $0x50] sm:$0xff] %v1569
        %1586 = vst [vmem:[%s518 + $0x58] sm:$0xff] %v1570
        %1587 = vst [vmem:[%s518 + $0x60] sm:$0xff] %v1571
        %1588 = vst [vmem:[%s518 + $0x68] sm:$0xff] %v1572
        %1589 = vst [vmem:[%s518 + $0x70] sm:$0xff] %v1573
        %1590 = vst [vmem:[%s518 + $0x78] sm:$0xff] %v1574
        %s1591 = sand.u32 %s124, 1
        %s1592 = sand.u32 %s124, 1
        %s1593 = smul.addr %s1592, 128
        %s1594 = scalar_lea.vmem [#allocation5], %s1593
        // Predicated region
        $region147: #{attention_forward.4} parent=133 // pred_check
          %p1595 = pneg %p134
        $region148: #{attention_forward.4} parent=133 // pred_check_branch
          %1597 = sbr.rel (%p1595) target = $region150
        $region149: #{attention_forward.4} parent=133 // pred_region
          %s1598 = smul.addr %s18, 32
          %s1599 = sadd.s32 %s19, %s1598
          %s1600 = smul.addr %s1599, 8
          %s1601 = scalar_lea.vmem %s3, %s1600
          // Predicated region
          $region151: #{attention_forward.4} parent=149 // pred_check
            _
          $region152: #{attention_forward.4} parent=149 // pred_check_branch
            %1603 = sbr.rel (0) target = $region154
          $region153: #{attention_forward.4} parent=149 // pred_region
            // Predicated region
            $region155: #{attention_forward.4} parent=153 // pred_check
              _
            $region156: #{attention_forward.4} parent=153 // pred_check_branch
              %1605 = sbr.rel (0) target = $region158
            $region157: #{attention_forward.4} parent=153 // pred_region
              // Predicated region
              $region170: #{attention_forward.4} parent=157 // pred_check
                _
              $region171: #{attention_forward.4} parent=157 // pred_check_branch
                %1650 = sbr.rel (0) target = $region173
              $region172: #{attention_forward.4} parent=157 // pred_region
                loop: start=0, step=1, limit=1
                $region174: #{attention_forward.4} parent=172 // loop_pre_header
                  _
                $region175: #{attention_forward.4} parent=172 // loop_header
                  %s1652 = sphi 0, %s1656
                  %p1653 = scmp.ge.s32.totalorder %s1652, 1
                  %s1657 = sphi %s1594, %s1594
                  %s1658 = sphi %s1601, %s1601
                $region176: #{attention_forward.4} parent=172 // loop_header_branch
                  %1655 = sbr.rel (%p1653) target = $region180
                $region177: #{attention_forward.4} parent=172 // loop_body
                  %v1659 = vld [vmem:[%s1657] sm:$0xff]
                  %1660 = vst [vmem:[%s1658] sm:$0xff] %v1659
                  %v1661 = vld [vmem:[%s1657 + $0x8] sm:$0xff]
                  %1662 = vst [vmem:[%s1658 + $0x10] sm:$0xff] %v1661
                  %v1663 = vld [vmem:[%s1657 + $0x10] sm:$0xff]
                  %1664 = vst [vmem:[%s1658 + $0x20] sm:$0xff] %v1663
                  %v1665 = vld [vmem:[%s1657 + $0x18] sm:$0xff]
                  %1666 = vst [vmem:[%s1658 + $0x30] sm:$0xff] %v1665
                  %v1667 = vld [vmem:[%s1657 + $0x20] sm:$0xff]
                  %1668 = vst [vmem:[%s1658 + $0x40] sm:$0xff] %v1667
                  %v1669 = vld [vmem:[%s1657 + $0x28] sm:$0xff]
                  %1670 = vst [vmem:[%s1658 + $0x50] sm:$0xff] %v1669
                  %v1671 = vld [vmem:[%s1657 + $0x30] sm:$0xff]
                  %1672 = vst [vmem:[%s1658 + $0x60] sm:$0xff] %v1671
                  %v1673 = vld [vmem:[%s1657 + $0x38] sm:$0xff]
                  %1674 = vst [vmem:[%s1658 + $0x70] sm:$0xff] %v1673
                  %v1675 = vld [vmem:[%s1657 + $0x40] sm:$0xff]
                  %1676 = vst [vmem:[%s1658 + $0x80] sm:$0xff] %v1675
                  %v1677 = vld [vmem:[%s1657 + $0x48] sm:$0xff]
                  %1678 = vst [vmem:[%s1658 + $0x90] sm:$0xff] %v1677
                  %v1679 = vld [vmem:[%s1657 + $0x50] sm:$0xff]
                  %1680 = vst [vmem:[%s1658 + $0xa0] sm:$0xff] %v1679
                  %v1681 = vld [vmem:[%s1657 + $0x58] sm:$0xff]
                  %1682 = vst [vmem:[%s1658 + $0xb0] sm:$0xff] %v1681
                  %v1683 = vld [vmem:[%s1657 + $0x60] sm:$0xff]
                  %1684 = vst [vmem:[%s1658 + $0xc0] sm:$0xff] %v1683
                  %v1685 = vld [vmem:[%s1657 + $0x68] sm:$0xff]
                  %1686 = vst [vmem:[%s1658 + $0xd0] sm:$0xff] %v1685
                  %v1687 = vld [vmem:[%s1657 + $0x70] sm:$0xff]
                  %1688 = vst [vmem:[%s1658 + $0xe0] sm:$0xff] %v1687
                  %v1689 = vld [vmem:[%s1657 + $0x78] sm:$0xff]
                  %1690 = vst [vmem:[%s1658 + $0xf0] sm:$0xff] %v1689
                $region178: #{attention_forward.4} parent=172 // loop_footer
                  %s1656 = sadd.s32 1, %s1652
                $region179: #{attention_forward.4} parent=172 // loop_footer_branch
                  %1651 = sbr.rel target = $region175
                $region180: #{attention_forward.4} parent=172 // loop_exit
                  _
              $region173: #{attention_forward.4} parent=157 // pred_fallthru
                _
              // Predicated region
              $region181: #{attention_forward.4} parent=157 // pred_check
                _
              $region182: #{attention_forward.4} parent=157 // pred_check_branch
                %1692 = sbr.rel target = $region184
              $region183: #{attention_forward.4} parent=157 // pred_region
                _
              $region184: #{attention_forward.4} parent=157 // pred_fallthru
                _
            $region158: #{attention_forward.4} parent=153 // pred_fallthru
              _
            // Predicated region
            $region159: #{attention_forward.4} parent=153 // pred_check
              _
            $region160: #{attention_forward.4} parent=153 // pred_check_branch
              %1607 = sbr.rel target = $region162
            $region161: #{attention_forward.4} parent=153 // pred_region
              loop: start=0, step=1, limit=1
              $region163: #{attention_forward.4} parent=161 // loop_pre_header
                _
              $region164: #{attention_forward.4} parent=161 // loop_header
                %s1610 = sphi 0, %s1614
                %p1611 = scmp.ge.s32.totalorder %s1610, 1
                %s1615 = sphi %s1594, %s1594
                %s1616 = sphi %s1601, %s1601
              $region165: #{attention_forward.4} parent=161 // loop_header_branch
                %1613 = sbr.rel (%p1611) target = $region169
              $region166: #{attention_forward.4} parent=161 // loop_body
                %v1617 = vld [vmem:[%s1615] sm:$0xff]
                %1618 = vst [vmem:[%s1616] sm:$0xff] %v1617
                %v1619 = vld [vmem:[%s1615 + $0x8] sm:$0xff]
                %1620 = vst [vmem:[%s1616 + $0x10] sm:$0xff] %v1619
                %v1621 = vld [vmem:[%s1615 + $0x10] sm:$0xff]
                %1622 = vst [vmem:[%s1616 + $0x20] sm:$0xff] %v1621
                %v1623 = vld [vmem:[%s1615 + $0x18] sm:$0xff]
                %1624 = vst [vmem:[%s1616 + $0x30] sm:$0xff] %v1623
                %v1625 = vld [vmem:[%s1615 + $0x20] sm:$0xff]
                %1626 = vst [vmem:[%s1616 + $0x40] sm:$0xff] %v1625
                %v1627 = vld [vmem:[%s1615 + $0x28] sm:$0xff]
                %1628 = vst [vmem:[%s1616 + $0x50] sm:$0xff] %v1627
                %v1629 = vld [vmem:[%s1615 + $0x30] sm:$0xff]
                %1630 = vst [vmem:[%s1616 + $0x60] sm:$0xff] %v1629
                %v1631 = vld [vmem:[%s1615 + $0x38] sm:$0xff]
                %1632 = vst [vmem:[%s1616 + $0x70] sm:$0xff] %v1631
                %v1633 = vld [vmem:[%s1615 + $0x40] sm:$0xff]
                %1634 = vst [vmem:[%s1616 + $0x80] sm:$0xff] %v1633
                %v1635 = vld [vmem:[%s1615 + $0x48] sm:$0xff]
                %1636 = vst [vmem:[%s1616 + $0x90] sm:$0xff] %v1635
                %v1637 = vld [vmem:[%s1615 + $0x50] sm:$0xff]
                %1638 = vst [vmem:[%s1616 + $0xa0] sm:$0xff] %v1637
                %v1639 = vld [vmem:[%s1615 + $0x58] sm:$0xff]
                %1640 = vst [vmem:[%s1616 + $0xb0] sm:$0xff] %v1639
                %v1641 = vld [vmem:[%s1615 + $0x60] sm:$0xff]
                %1642 = vst [vmem:[%s1616 + $0xc0] sm:$0xff] %v1641
                %v1643 = vld [vmem:[%s1615 + $0x68] sm:$0xff]
                %1644 = vst [vmem:[%s1616 + $0xd0] sm:$0xff] %v1643
                %v1645 = vld [vmem:[%s1615 + $0x70] sm:$0xff]
                %1646 = vst [vmem:[%s1616 + $0xe0] sm:$0xff] %v1645
                %v1647 = vld [vmem:[%s1615 + $0x78] sm:$0xff]
                %1648 = vst [vmem:[%s1616 + $0xf0] sm:$0xff] %v1647
              $region167: #{attention_forward.4} parent=161 // loop_footer
                %s1614 = sadd.s32 1, %s1610
              $region168: #{attention_forward.4} parent=161 // loop_footer_branch
                %1609 = sbr.rel target = $region164
              $region169: #{attention_forward.4} parent=161 // loop_exit
                _
            $region162: #{attention_forward.4} parent=153 // pred_fallthru
              _
          $region154: #{attention_forward.4} parent=149 // pred_fallthru
            _
          %1693 = vnop
        $region150: #{attention_forward.4} parent=133 // pred_fallthru
          _
      $region134: #{attention_forward.4} parent=5 // pred_fallthru
        _
      %p1694 = scmp.le.s32.totalorder 2, %s9
      // Predicated region
      $region185: #{attention_forward.4} parent=5 // pred_check
        %p1695 = pneg %p1694
      $region186: #{attention_forward.4} parent=5 // pred_check_branch
        %1697 = sbr.rel (%p1695) target = $region188
      $region187: #{attention_forward.4} parent=5 // pred_region
        %s1698 = ssub.s32 %s9, 2
        // Predicated region
        $region189: #{attention_forward.4} parent=187 // pred_check
          %p1699 = pneg %p140
        $region190: #{attention_forward.4} parent=187 // pred_check_branch
          %1701 = sbr.rel (%p1699) target = $region192
        $region191: #{attention_forward.4} parent=187 // pred_region
          %s1702 = sand.u32 %s125, 1
          %s1703 = sand.u32 %s125, 1
          %s1704 = smul.addr %s1703, 128
          %s1705 = scalar_lea.vmem [#allocation5], %s1704
        $region192: #{attention_forward.4} parent=187 // pred_fallthru
          _
      $region188: #{attention_forward.4} parent=5 // pred_fallthru
        _
    $region6: #{attention_forward.4} parent=1 // loop_footer
      %s13 = sadd.s32 1, %s9
    $region7: #{attention_forward.4} parent=1 // loop_footer_branch
      %8 = sbr.rel target = $region3
    $region8: #{attention_forward.4} parent=1 // loop_exit
      _

// kernel: attention_forward.5
$region0: #{attention_forward.5}
  #allocation0 [shape = 'u32[]', space=smem, size = 0x4, offset = 0x4, fixed_abs, tag = 'smem constant byte address 0x4 - core index']
  #allocation1 [shape = 'u32[144,128]{1,0:T(1,128)}', space=vmem, size = 0x12000, scoped, tag = 'internal scratch']
  #allocation2 [shape = 'f32[256,256]{1,0:T(8,128)}', space=vmem, size = 0x40000, scoped, tag = 'scratch operand']
  %s0 = inlined_call_operand.vmem [shape: f32[256,256], index: 0, kind: input, shape index: {}]
  %s1 = inlined_call_operand.vmem [shape: f32[256,256], index: 1, kind: input, shape index: {}]
  %s2 = inlined_call_operand.vmem [shape: f32[1,256], index: 2, kind: input, shape index: {}]
  %s3 = inlined_call_operand.hbm [shape: f32[256,256], index: 3, kind: output, shape index: {}]
  %s4 = sld [smem:[#allocation0]]
  $region30: #{attention_forward.5} parent=0
    _
  %s6 = ssub.s32 1, %s4
  %s7 = scalar_select 0, %s6, %s4
  $region1: #{attention_forward.5} parent=0
    #allocation3 [shape = 'u8[262144]{0}', space=vmem, size = 0x40000, scoped, tag = 'output window, operand 0, single buffered']
    #allocation4 [shape = 's32[1]{0}', space=sflag, size = 0x4, scoped, tag = 'scoped memory for attention_forward.5']
    %8 = vsyncpa [#allocation4], 0
    // Predicated region
    $region2: #{attention_forward.5} parent=1 // pred_check
      _
    $region3: #{attention_forward.5} parent=1 // pred_check_branch
      %10 = sbr.rel (0) target = $region5
    $region4: #{attention_forward.5} parent=1 // pred_region
      _
    $region5: #{attention_forward.5} parent=1 // pred_fallthru
      _
    // Predicated region
    $region6: #{attention_forward.5} parent=1 // pred_check
      _
    $region7: #{attention_forward.5} parent=1 // pred_check_branch
      %12 = sbr.rel (0) target = $region9
    $region8: #{attention_forward.5} parent=1 // pred_region
      _
    $region9: #{attention_forward.5} parent=1 // pred_fallthru
      _
    // Predicated region
    $region10: #{attention_forward.5} parent=1 // pred_check
      _
    $region11: #{attention_forward.5} parent=1 // pred_check_branch
      %14 = sbr.rel (0) target = $region13
    $region12: #{attention_forward.5} parent=1 // pred_region
      _
    $region13: #{attention_forward.5} parent=1 // pred_fallthru
      _
    %p15 = scmp.eq.s32.totalorder 0, 0
    // Predicated region
    $region14: #{attention_forward.5} parent=1 // pred_check
      %p16 = pneg %p15
    $region15: #{attention_forward.5} parent=1 // pred_check_branch
      %18 = sbr.rel (%p16) target = $region17
    $region16: #{attention_forward.5} parent=1 // pred_region
      %19 = vst [vmem:[#allocation2] sm:$0xff] 0.0
      %20 = vst [vmem:[#allocation2 + $0x8] sm:$0xff] 0.0
      %21 = vst [vmem:[#allocation2 + $0x10] sm:$0xff] 0.0
      %22 = vst [vmem:[#allocation2 + $0x18] sm:$0xff] 0.0
      %23 = vst [vmem:[#allocation2 + $0x20] sm:$0xff] 0.0
      %24 = vst [vmem:[#allocation2 + $0x28] sm:$0xff] 0.0
      %25 = vst [vmem:[#allocation2 + $0x30] sm:$0xff] 0.0
      %26 = vst [vmem:[#allocation2 + $0x38] sm:$0xff] 0.0
      %27 = vst [vmem:[#allocation2 + $0x40] sm:$0xff] 0.0
      %28 = vst [vmem:[#allocation2 + $0x48] sm:$0xff] 0.0
      %29 = vst [vmem:[#allocation2 + $0x50] sm:$0xff] 0.0
      %30 = vst [vmem:[#allocation2 + $0x58] sm:$0xff] 0.0
      %31 = vst [vmem:[#allocation2 + $0x60] sm:$0xff] 0.0
      %32 = vst [vmem:[#allocation2 + $0x68] sm:$0xff] 0.0
      %33 = vst [vmem:[#allocation2 + $0x70] sm:$0xff] 0.0
      %34 = vst [vmem:[#allocation2 + $0x78] sm:$0xff] 0.0
      %35 = vst [vmem:[#allocation2 + $0x80] sm:$0xff] 0.0
      %36 = vst [vmem:[#allocation2 + $0x88] sm:$0xff] 0.0
      %37 = vst [vmem:[#allocation2 + $0x90] sm:$0xff] 0.0
      %38 = vst [vmem:[#allocation2 + $0x98] sm:$0xff] 0.0
      %39 = vst [vmem:[#allocation2 + $0xa0] sm:$0xff] 0.0
      %40 = vst [vmem:[#allocation2 + $0xa8] sm:$0xff] 0.0
      %41 = vst [vmem:[#allocation2 + $0xb0] sm:$0xff] 0.0
      %42 = vst [vmem:[#allocation2 + $0xb8] sm:$0xff] 0.0
      %43 = vst [vmem:[#allocation2 + $0xc0] sm:$0xff] 0.0
      %44 = vst [vmem:[#allocation2 + $0xc8] sm:$0xff] 0.0
      %45 = vst [vmem:[#allocation2 + $0xd0] sm:$0xff] 0.0
      %46 = vst [vmem:[#allocation2 + $0xd8] sm:$0xff] 0.0
      %47 = vst [vmem:[#allocation2 + $0xe0] sm:$0xff] 0.0
      %48 = vst [vmem:[#allocation2 + $0xe8] sm:$0xff] 0.0
      %49 = vst [vmem:[#allocation2 + $0xf0] sm:$0xff] 0.0
      %50 = vst [vmem:[#allocation2 + $0xf8] sm:$0xff] 0.0
      %51 = vst [vmem:[#allocation2 + $0x100] sm:$0xff] 0.0
      %52 = vst [vmem:[#allocation2 + $0x108] sm:$0xff] 0.0
      %53 = vst [vmem:[#allocation2 + $0x110] sm:$0xff] 0.0
      %54 = vst [vmem:[#allocation2 + $0x118] sm:$0xff] 0.0
      %55 = vst [vmem:[#allocation2 + $0x120] sm:$0xff] 0.0
      %56 = vst [vmem:[#allocation2 + $0x128] sm:$0xff] 0.0
      %57 = vst [vmem:[#allocation2 + $0x130] sm:$0xff] 0.0
      %58 = vst [vmem:[#allocation2 + $0x138] sm:$0xff] 0.0
      %59 = vst [vmem:[#allocation2 + $0x140] sm:$0xff] 0.0
      %60 = vst [vmem:[#allocation2 + $0x148] sm:$0xff] 0.0
      %61 = vst [vmem:[#allocation2 + $0x150] sm:$0xff] 0.0
      %62 = vst [vmem:[#allocation2 + $0x158] sm:$0xff] 0.0
      %63 = vst [vmem:[#allocation2 + $0x160] sm:$0xff] 0.0
      %64 = vst [vmem:[#allocation2 + $0x168] sm:$0xff] 0.0
      %65 = vst [vmem:[#allocation2 + $0x170] sm:$0xff] 0.0
      %66 = vst [vmem:[#allocation2 + $0x178] sm:$0xff] 0.0
      %67 = vst [vmem:[#allocation2 + $0x180] sm:$0xff] 0.0
      %68 = vst [vmem:[#allocation2 + $0x188] sm:$0xff] 0.0
      %69 = vst [vmem:[#allocation2 + $0x190] sm:$0xff] 0.0
      %70 = vst [vmem:[#allocation2 + $0x198] sm:$0xff] 0.0
      %71 = vst [vmem:[#allocation2 + $0x1a0] sm:$0xff] 0.0
      %72 = vst [vmem:[#allocation2 + $0x1a8] sm:$0xff] 0.0
      %73 = vst [vmem:[#allocation2 + $0x1b0] sm:$0xff] 0.0
      %74 = vst [vmem:[#allocation2 + $0x1b8] sm:$0xff] 0.0
      %75 = vst [vmem:[#allocation2 + $0x1c0] sm:$0xff] 0.0
      %76 = vst [vmem:[#allocation2 + $0x1c8] sm:$0xff] 0.0
      %77 = vst [vmem:[#allocation2 + $0x1d0] sm:$0xff] 0.0
      %78 = vst [vmem:[#allocation2 + $0x1d8] sm:$0xff] 0.0
      %79 = vst [vmem:[#allocation2 + $0x1e0] sm:$0xff] 0.0
      %80 = vst [vmem:[#allocation2 + $0x1e8] sm:$0xff] 0.0
      %81 = vst [vmem:[#allocation2 + $0x1f0] sm:$0xff] 0.0
      %82 = vst [vmem:[#allocation2 + $0x1f8] sm:$0xff] 0.0
    $region17: #{attention_forward.5} parent=1 // pred_fallthru
      _
    %v83 = vld [vmem:[#allocation2] sm:$0xff]
    %v84 = vld [vmem:[#allocation2 + $0x8] sm:$0xff]
    %v85 = vld [vmem:[#allocation2 + $0x10] sm:$0xff]
    %v86 = vld [vmem:[#allocation2 + $0x18] sm:$0xff]
    %v87 = vld [vmem:[#allocation2 + $0x20] sm:$0xff]
    %v88 = vld [vmem:[#allocation2 + $0x28] sm:$0xff]
    %v89 = vld [vmem:[#allocation2 + $0x30] sm:$0xff]
    %v90 = vld [vmem:[#allocation2 + $0x38] sm:$0xff]
    %v91 = vld [vmem:[#allocation2 + $0x40] sm:$0xff]
    %v92 = vld [vmem:[#allocation2 + $0x48] sm:$0xff]
    %v93 = vld [vmem:[#allocation2 + $0x50] sm:$0xff]
    %v94 = vld [vmem:[#allocation2 + $0x58] sm:$0xff]
    %v95 = vld [vmem:[#allocation2 + $0x60] sm:$0xff]
    %v96 = vld [vmem:[#allocation2 + $0x68] sm:$0xff]
    %v97 = vld [vmem:[#allocation2 + $0x70] sm:$0xff]
    %v98 = vld [vmem:[#allocation2 + $0x78] sm:$0xff]
    %v99 = vld [vmem:[#allocation2 + $0x80] sm:$0xff]
    %v100 = vld [vmem:[#allocation2 + $0x88] sm:$0xff]
    %v101 = vld [vmem:[#allocation2 + $0x90] sm:$0xff]
    %v102 = vld [vmem:[#allocation2 + $0x98] sm:$0xff]
    %v103 = vld [vmem:[#allocation2 + $0xa0] sm:$0xff]
    %v104 = vld [vmem:[#allocation2 + $0xa8] sm:$0xff]
    %v105 = vld [vmem:[#allocation2 + $0xb0] sm:$0xff]
    %v106 = vld [vmem:[#allocation2 + $0xb8] sm:$0xff]
    %v107 = vld [vmem:[#allocation2 + $0xc0] sm:$0xff]
    %v108 = vld [vmem:[#allocation2 + $0xc8] sm:$0xff]
    %v109 = vld [vmem:[#allocation2 + $0xd0] sm:$0xff]
    %v110 = vld [vmem:[#allocation2 + $0xd8] sm:$0xff]
    %v111 = vld [vmem:[#allocation2 + $0xe0] sm:$0xff]
    %v112 = vld [vmem:[#allocation2 + $0xe8] sm:$0xff]
    %v113 = vld [vmem:[#allocation2 + $0xf0] sm:$0xff]
    %v114 = vld [vmem:[#allocation2 + $0xf8] sm:$0xff]
    %v115 = vld [vmem:[#allocation2 + $0x100] sm:$0xff]
    %v116 = vld [vmem:[#allocation2 + $0x108] sm:$0xff]
    %v117 = vld [vmem:[#allocation2 + $0x110] sm:$0xff]
    %v118 = vld [vmem:[#allocation2 + $0x118] sm:$0xff]
    %v119 = vld [vmem:[#allocation2 + $0x120] sm:$0xff]
    %v120 = vld [vmem:[#allocation2 + $0x128] sm:$0xff]
    %v121 = vld [vmem:[#allocation2 + $0x130] sm:$0xff]
    %v122 = vld [vmem:[#allocation2 + $0x138] sm:$0xff]
    %v123 = vld [vmem:[#allocation2 + $0x140] sm:$0xff]
    %v124 = vld [vmem:[#allocation2 + $0x148] sm:$0xff]
    %v125 = vld [vmem:[#allocation2 + $0x150] sm:$0xff]
    %v126 = vld [vmem:[#allocation2 + $0x158] sm:$0xff]
    %v127 = vld [vmem:[#allocation2 + $0x160] sm:$0xff]
    %v128 = vld [vmem:[#allocation2 + $0x168] sm:$0xff]
    %v129 = vld [vmem:[#allocation2 + $0x170] sm:$0xff]
    %v130 = vld [vmem:[#allocation2 + $0x178] sm:$0xff]
    %v131 = vld [vmem:[#allocation2 + $0x180] sm:$0xff]
    %v132 = vld [vmem:[#allocation2 + $0x188] sm:$0xff]
    %v133 = vld [vmem:[#allocation2 + $0x190] sm:$0xff]
    %v134 = vld [vmem:[#allocation2 + $0x198] sm:$0xff]
    %v135 = vld [vmem:[#allocation2 + $0x1a0] sm:$0xff]
    %v136 = vld [vmem:[#allocation2 + $0x1a8] sm:$0xff]
    %v137 = vld [vmem:[#allocation2 + $0x1b0] sm:$0xff]
    %v138 = vld [vmem:[#allocation2 + $0x1b8] sm:$0xff]
    %v139 = vld [vmem:[#allocation2 + $0x1c0] sm:$0xff]
    %v140 = vld [vmem:[#allocation2 + $0x1c8] sm:$0xff]
    %v141 = vld [vmem:[#allocation2 + $0x1d0] sm:$0xff]
    %v142 = vld [vmem:[#allocation2 + $0x1d8] sm:$0xff]
    %v143 = vld [vmem:[#allocation2 + $0x1e0] sm:$0xff]
    %v144 = vld [vmem:[#allocation2 + $0x1e8] sm:$0xff]
    %v145 = vld [vmem:[#allocation2 + $0x1f0] sm:$0xff]
    %v146 = vld [vmem:[#allocation2 + $0x1f8] sm:$0xff]
    %v147 = vld [vmem:[%s0] sm:$0xff]
    %v148 = vld [vmem:[%s0 + $0x8] sm:$0xff]
    %v149 = vld [vmem:[%s0 + $0x10] sm:$0xff]
    %v150 = vld [vmem:[%s0 + $0x18] sm:$0xff]
    %v151 = vld [vmem:[%s0 + $0x20] sm:$0xff]
    %v152 = vld [vmem:[%s0 + $0x28] sm:$0xff]
    %v153 = vld [vmem:[%s0 + $0x30] sm:$0xff]
    %v154 = vld [vmem:[%s0 + $0x38] sm:$0xff]
    %v155 = vld [vmem:[%s0 + $0x40] sm:$0xff]
    %v156 = vld [vmem:[%s0 + $0x48] sm:$0xff]
    %v157 = vld [vmem:[%s0 + $0x50] sm:$0xff]
    %v158 = vld [vmem:[%s0 + $0x58] sm:$0xff]
    %v159 = vld [vmem:[%s0 + $0x60] sm:$0xff]
    %v160 = vld [vmem:[%s0 + $0x68] sm:$0xff]
    %v161 = vld [vmem:[%s0 + $0x70] sm:$0xff]
    %v162 = vld [vmem:[%s0 + $0x78] sm:$0xff]
    %v163 = vld [vmem:[%s0 + $0x80] sm:$0xff]
    %v164 = vld [vmem:[%s0 + $0x88] sm:$0xff]
    %v165 = vld [vmem:[%s0 + $0x90] sm:$0xff]
    %v166 = vld [vmem:[%s0 + $0x98] sm:$0xff]
    %v167 = vld [vmem:[%s0 + $0xa0] sm:$0xff]
    %v168 = vld [vmem:[%s0 + $0xa8] sm:$0xff]
    %v169 = vld [vmem:[%s0 + $0xb0] sm:$0xff]
    %v170 = vld [vmem:[%s0 + $0xb8] sm:$0xff]
    %v171 = vld [vmem:[%s0 + $0xc0] sm:$0xff]
    %v172 = vld [vmem:[%s0 + $0xc8] sm:$0xff]
    %v173 = vld [vmem:[%s0 + $0xd0] sm:$0xff]
    %v174 = vld [vmem:[%s0 + $0xd8] sm:$0xff]
    %v175 = vld [vmem:[%s0 + $0xe0] sm:$0xff]
    %v176 = vld [vmem:[%s0 + $0xe8] sm:$0xff]
    %v177 = vld [vmem:[%s0 + $0xf0] sm:$0xff]
    %v178 = vld [vmem:[%s0 + $0xf8] sm:$0xff]
    %v179 = vld [vmem:[%s0 + $0x100] sm:$0xff]
    %v180 = vld [vmem:[%s0 + $0x108] sm:$0xff]
    %v181 = vld [vmem:[%s0 + $0x110] sm:$0xff]
    %v182 = vld [vmem:[%s0 + $0x118] sm:$0xff]
    %v183 = vld [vmem:[%s0 + $0x120] sm:$0xff]
    %v184 = vld [vmem:[%s0 + $0x128] sm:$0xff]
    %v185 = vld [vmem:[%s0 + $0x130] sm:$0xff]
    %v186 = vld [vmem:[%s0 + $0x138] sm:$0xff]
    %v187 = vld [vmem:[%s0 + $0x140] sm:$0xff]
    %v188 = vld [vmem:[%s0 + $0x148] sm:$0xff]
    %v189 = vld [vmem:[%s0 + $0x150] sm:$0xff]
    %v190 = vld [vmem:[%s0 + $0x158] sm:$0xff]
    %v191 = vld [vmem:[%s0 + $0x160] sm:$0xff]
    %v192 = vld [vmem:[%s0 + $0x168] sm:$0xff]
    %v193 = vld [vmem:[%s0 + $0x170] sm:$0xff]
    %v194 = vld [vmem:[%s0 + $0x178] sm:$0xff]
    %v195 = vld [vmem:[%s0 + $0x180] sm:$0xff]
    %v196 = vld [vmem:[%s0 + $0x188] sm:$0xff]
    %v197 = vld [vmem:[%s0 + $0x190] sm:$0xff]
    %v198 = vld [vmem:[%s0 + $0x198] sm:$0xff]
    %v199 = vld [vmem:[%s0 + $0x1a0] sm:$0xff]
    %v200 = vld [vmem:[%s0 + $0x1a8] sm:$0xff]
    %v201 = vld [vmem:[%s0 + $0x1b0] sm:$0xff]
    %v202 = vld [vmem:[%s0 + $0x1b8] sm:$0xff]
    %v203 = vld [vmem:[%s0 + $0x1c0] sm:$0xff]
    %v204 = vld [vmem:[%s0 + $0x1c8] sm:$0xff]
    %v205 = vld [vmem:[%s0 + $0x1d0] sm:$0xff]
    %v206 = vld [vmem:[%s0 + $0x1d8] sm:$0xff]
    %v207 = vld [vmem:[%s0 + $0x1e0] sm:$0xff]
    %v208 = vld [vmem:[%s0 + $0x1e8] sm:$0xff]
    %v209 = vld [vmem:[%s0 + $0x1f0] sm:$0xff]
    %v210 = vld [vmem:[%s0 + $0x1f8] sm:$0xff]
    %v211 = vld [vmem:[%s1] sm:$0xff]
    %v212 = vld [vmem:[%s1 + $0x8] sm:$0xff]
    %v213 = vld [vmem:[%s1 + $0x10] sm:$0xff]
    %v214 = vld [vmem:[%s1 + $0x18] sm:$0xff]
    %v215 = vld [vmem:[%s1 + $0x20] sm:$0xff]
    %v216 = vld [vmem:[%s1 + $0x28] sm:$0xff]
    %v217 = vld [vmem:[%s1 + $0x30] sm:$0xff]
    %v218 = vld [vmem:[%s1 + $0x38] sm:$0xff]
    %v219 = vld [vmem:[%s1 + $0x40] sm:$0xff]
    %v220 = vld [vmem:[%s1 + $0x48] sm:$0xff]
    %v221 = vld [vmem:[%s1 + $0x50] sm:$0xff]
    %v222 = vld [vmem:[%s1 + $0x58] sm:$0xff]
    %v223 = vld [vmem:[%s1 + $0x60] sm:$0xff]
    %v224 = vld [vmem:[%s1 + $0x68] sm:$0xff]
    %v225 = vld [vmem:[%s1 + $0x70] sm:$0xff]
    %v226 = vld [vmem:[%s1 + $0x78] sm:$0xff]
    %v227 = vld [vmem:[%s1 + $0x80] sm:$0xff]
    %v228 = vld [vmem:[%s1 + $0x88] sm:$0xff]
    %v229 = vld [vmem:[%s1 + $0x90] sm:$0xff]
    %v230 = vld [vmem:[%s1 + $0x98] sm:$0xff]
    %v231 = vld [vmem:[%s1 + $0xa0] sm:$0xff]
    %v232 = vld [vmem:[%s1 + $0xa8] sm:$0xff]
    %v233 = vld [vmem:[%s1 + $0xb0] sm:$0xff]
    %v234 = vld [vmem:[%s1 + $0xb8] sm:$0xff]
    %v235 = vld [vmem:[%s1 + $0xc0] sm:$0xff]
    %v236 = vld [vmem:[%s1 + $0xc8] sm:$0xff]
    %v237 = vld [vmem:[%s1 + $0xd0] sm:$0xff]
    %v238 = vld [vmem:[%s1 + $0xd8] sm:$0xff]
    %v239 = vld [vmem:[%s1 + $0xe0] sm:$0xff]
    %v240 = vld [vmem:[%s1 + $0xe8] sm:$0xff]
    %v241 = vld [vmem:[%s1 + $0xf0] sm:$0xff]
    %v242 = vld [vmem:[%s1 + $0xf8] sm:$0xff]
    %v243 = vld [vmem:[%s1 + $0x100] sm:$0xff]
    %v244 = vld [vmem:[%s1 + $0x108] sm:$0xff]
    %v245 = vld [vmem:[%s1 + $0x110] sm:$0xff]
    %v246 = vld [vmem:[%s1 + $0x118] sm:$0xff]
    %v247 = vld [vmem:[%s1 + $0x120] sm:$0xff]
    %v248 = vld [vmem:[%s1 + $0x128] sm:$0xff]
    %v249 = vld [vmem:[%s1 + $0x130] sm:$0xff]
    %v250 = vld [vmem:[%s1 + $0x138] sm:$0xff]
    %v251 = vld [vmem:[%s1 + $0x140] sm:$0xff]
    %v252 = vld [vmem:[%s1 + $0x148] sm:$0xff]
    %v253 = vld [vmem:[%s1 + $0x150] sm:$0xff]
    %v254 = vld [vmem:[%s1 + $0x158] sm:$0xff]
    %v255 = vld [vmem:[%s1 + $0x160] sm:$0xff]
    %v256 = vld [vmem:[%s1 + $0x168] sm:$0xff]
    %v257 = vld [vmem:[%s1 + $0x170] sm:$0xff]
    %v258 = vld [vmem:[%s1 + $0x178] sm:$0xff]
    %v259 = vld [vmem:[%s1 + $0x180] sm:$0xff]
    %v260 = vld [vmem:[%s1 + $0x188] sm:$0xff]
    %v261 = vld [vmem:[%s1 + $0x190] sm:$0xff]
    %v262 = vld [vmem:[%s1 + $0x198] sm:$0xff]
    %v263 = vld [vmem:[%s1 + $0x1a0] sm:$0xff]
    %v264 = vld [vmem:[%s1 + $0x1a8] sm:$0xff]
    %v265 = vld [vmem:[%s1 + $0x1b0] sm:$0xff]
    %v266 = vld [vmem:[%s1 + $0x1b8] sm:$0xff]
    %v267 = vld [vmem:[%s1 + $0x1c0] sm:$0xff]
    %v268 = vld [vmem:[%s1 + $0x1c8] sm:$0xff]
    %v269 = vld [vmem:[%s1 + $0x1d0] sm:$0xff]
    %v270 = vld [vmem:[%s1 + $0x1d8] sm:$0xff]
    %v271 = vld [vmem:[%s1 + $0x1e0] sm:$0xff]
    %v272 = vld [vmem:[%s1 + $0x1e8] sm:$0xff]
    %v273 = vld [vmem:[%s1 + $0x1f0] sm:$0xff]
    %v274 = vld [vmem:[%s1 + $0x1f8] sm:$0xff]
    %275 = vmatprep.subr.mxu0 %v212
    %276 = vmatpush1.msra.mxu0 %v211
    %277 = vmatprep.subr.mxu0 %v214
    %278 = vmatpush1.msra.mxu0 %v213
    %279 = vmatprep.subr.mxu0 %v216
    %280 = vmatpush1.msra.mxu0 %v215
    %281 = vmatprep.subr.mxu0 %v218
    %282 = vmatpush1.msra.mxu0 %v217
    %283 = vmatprep.subr.mxu0 %v220
    %284 = vmatpush1.msra.mxu0 %v219
    %285 = vmatprep.subr.mxu0 %v222
    %286 = vmatpush1.msra.mxu0 %v221
    %287 = vmatprep.subr.mxu0 %v224
    %288 = vmatpush1.msra.mxu0 %v223
    %289 = vmatprep.subr.mxu0 %v226
    %290 = vmatpush1.msra.mxu0 %v225
    %291 = vmatprep.subr.mxu0 %v228
    %292 = vmatpush1.msra.mxu0 %v227
    %293 = vmatprep.subr.mxu0 %v230
    %294 = vmatpush1.msra.mxu0 %v229
    %295 = vmatprep.subr.mxu0 %v232
    %296 = vmatpush1.msra.mxu0 %v231
    %297 = vmatprep.subr.mxu0 %v234
    %298 = vmatpush1.msra.mxu0 %v233
    %299 = vmatprep.subr.mxu0 %v236
    %300 = vmatpush1.msra.mxu0 %v235
    %301 = vmatprep.subr.mxu0 %v238
    %302 = vmatpush1.msra.mxu0 %v237
    %303 = vmatprep.subr.mxu0 %v240
    %304 = vmatpush1.msra.mxu0 %v239
    %305 = vmatprep.subr.mxu0 %v242
    %306 = vmatpush1.msra.mxu0 %v241
    %307 = vmatprep.subr.mxu0 %v244
    %308 = vmatpush1.msra.mxu0 %v243
    %309 = vmatprep.subr.mxu0 %v246
    %310 = vmatpush1.msra.mxu0 %v245
    %311 = vmatprep.subr.mxu0 %v248
    %312 = vmatpush1.msra.mxu0 %v247
    %313 = vmatprep.subr.mxu0 %v250
    %314 = vmatpush1.msra.mxu0 %v249
    %315 = vmatprep.subr.mxu0 %v252
    %316 = vmatpush1.msra.mxu0 %v251
    %317 = vmatprep.subr.mxu0 %v254
    %318 = vmatpush1.msra.mxu0 %v253
    %319 = vmatprep.subr.mxu0 %v256
    %320 = vmatpush1.msra.mxu0 %v255
    %321 = vmatprep.subr.mxu0 %v258
    %322 = vmatpush1.msra.mxu0 %v257
    %323 = vmatprep.subr.mxu0 %v260
    %324 = vmatpush1.msra.mxu0 %v259
    %325 = vmatprep.subr.mxu0 %v262
    %326 = vmatpush1.msra.mxu0 %v261
    %327 = vmatprep.subr.mxu0 %v264
    %328 = vmatpush1.msra.mxu0 %v263
    %329 = vmatprep.subr.mxu0 %v266
    %330 = vmatpush1.msra.mxu0 %v265
    %331 = vmatprep.subr.mxu0 %v268
    %332 = vmatpush1.msra.mxu0 %v267
    %333 = vmatprep.subr.mxu0 %v270
    %334 = vmatpush1.msra.mxu0 %v269
    %335 = vmatprep.subr.mxu0 %v272
    %336 = vmatpush1.msra.mxu0 %v271
    %337 = vmatprep.subr.mxu0 %v274
    %338 = vmatpush1.msra.mxu0 %v273
    %339 = vmatprep.mubr.f32.mxu0 %v148
    %340 = vmatmul.mubr.f32.gmra.mrb[0].mxu0 %v147
    %v341 = vpop.f32.mrb[0].mxu0
    %v342 = vadd.f32 0.0, %v341
    %v343 = vpop.f32.mrb[0].mxu0
    %v344 = vadd.f32 0.0, %v343
    %345 = vmatprep.mubr.f32.mxu0 %v150
    %346 = vmatmul.mubr.f32.gmra.mrb[0].mxu0 %v149
    %v347 = vpop.f32.mrb[0].mxu0
    %v348 = vadd.f32 0.0, %v347
    %v349 = vpop.f32.mrb[0].mxu0
    %v350 = vadd.f32 0.0, %v349
    %351 = vmatprep.mubr.f32.mxu0 %v152
    %352 = vmatmul.mubr.f32.gmra.mrb[0].mxu0 %v151
    %v353 = vpop.f32.mrb[0].mxu0
    %v354 = vadd.f32 0.0, %v353
    %v355 = vpop.f32.mrb[0].mxu0
    %v356 = vadd.f32 0.0, %v355
    %357 = vmatprep.mubr.f32.mxu0 %v154
    %358 = vmatmul.mubr.f32.gmra.mrb[0].mxu0 %v153
    %v359 = vpop.f32.mrb[0].mxu0
    %v360 = vadd.f32 0.0, %v359
    %v361 = vpop.f32.mrb[0].mxu0
    %v362 = vadd.f32 0.0, %v361
    %363 = vmatprep.mubr.f32.mxu0 %v156
    %364 = vmatmul.mubr.f32.gmra.mrb[0].mxu0 %v155
    %v365 = vpop.f32.mrb[0].mxu0
    %v366 = vadd.f32 0.0, %v365
    %v367 = vpop.f32.mrb[0].mxu0
    %v368 = vadd.f32 0.0, %v367
    %369 = vmatprep.mubr.f32.mxu0 %v158
    %370 = vmatmul.mubr.f32.gmra.mrb[0].mxu0 %v157
    %v371 = vpop.f32.mrb[0].mxu0
    %v372 = vadd.f32 0.0, %v371
    %v373 = vpop.f32.mrb[0].mxu0
    %v374 = vadd.f32 0.0, %v373
    %375 = vmatprep.mubr.f32.mxu0 %v160
    %376 = vmatmul.mubr.f32.gmra.mrb[0].mxu0 %v159
    %v377 = vpop.f32.mrb[0].mxu0
    %v378 = vadd.f32 0.0, %v377
    %v379 = vpop.f32.mrb[0].mxu0
    %v380 = vadd.f32 0.0, %v379
    %381 = vmatprep.mubr.f32.mxu0 %v162
    %382 = vmatmul.mubr.f32.gmra.mrb[0].mxu0 %v161
    %v383 = vpop.f32.mrb[0].mxu0
    %v384 = vadd.f32 0.0, %v383
    %v385 = vpop.f32.mrb[0].mxu0
    %v386 = vadd.f32 0.0, %v385
    %387 = vmatprep.mubr.f32.mxu0 %v164
    %388 = vmatmul.mubr.f32.gmra.mrb[0].mxu0 %v163
    %v389 = vpop.f32.mrb[0].mxu0
    %v390 = vadd.f32 0.0, %v389
    %v391 = vpop.f32.mrb[0].mxu0
    %v392 = vadd.f32 0.0, %v391
    %393 = vmatprep.mubr.f32.mxu0 %v166
    %394 = vmatmul.mubr.f32.gmra.mrb[0].mxu0 %v165
    %v395 = vpop.f32.mrb[0].mxu0
    %v396 = vadd.f32 0.0, %v395
    %v397 = vpop.f32.mrb[0].mxu0
    %v398 = vadd.f32 0.0, %v397
    %399 = vmatprep.mubr.f32.mxu0 %v168
    %400 = vmatmul.mubr.f32.gmra.mrb[0].mxu0 %v167
    %v401 = vpop.f32.mrb[0].mxu0
    %v402 = vadd.f32 0.0, %v401
    %v403 = vpop.f32.mrb[0].mxu0
    %v404 = vadd.f32 0.0, %v403
    %405 = vmatprep.mubr.f32.mxu0 %v170
    %406 = vmatmul.mubr.f32.gmra.mrb[0].mxu0 %v169
    %v407 = vpop.f32.mrb[0].mxu0
    %v408 = vadd.f32 0.0, %v407
    %v409 = vpop.f32.mrb[0].mxu0
    %v410 = vadd.f32 0.0, %v409
    %411 = vmatprep.mubr.f32.mxu0 %v172
    %412 = vmatmul.mubr.f32.gmra.mrb[0].mxu0 %v171
    %v413 = vpop.f32.mrb[0].mxu0
    %v414 = vadd.f32 0.0, %v413
    %v415 = vpop.f32.mrb[0].mxu0
    %v416 = vadd.f32 0.0, %v415
    %417 = vmatprep.mubr.f32.mxu0 %v174
    %418 = vmatmul.mubr.f32.gmra.mrb[0].mxu0 %v173
    %v419 = vpop.f32.mrb[0].mxu0
    %v420 = vadd.f32 0.0, %v419
    %v421 = vpop.f32.mrb[0].mxu0
    %v422 = vadd.f32 0.0, %v421
    %423 = vmatprep.mubr.f32.mxu0 %v176
    %424 = vmatmul.mubr.f32.gmra.mrb[0].mxu0 %v175
    %v425 = vpop.f32.mrb[0].mxu0
    %v426 = vadd.f32 0.0, %v425
    %v427 = vpop.f32.mrb[0].mxu0
    %v428 = vadd.f32 0.0, %v427
    %429 = vmatprep.mubr.f32.mxu0 %v178
    %430 = vmatmul.mubr.f32.gmra.mrb[0].mxu0 %v177
    %v431 = vpop.f32.mrb[0].mxu0
    %v432 = vadd.f32 0.0, %v431
    %v433 = vpop.f32.mrb[0].mxu0
    %v434 = vadd.f32 0.0, %v433
    %435 = vmatprep.mubr.f32.mxu0 %v180
    %436 = vmatmul.mubr.f32.gmra.mrb[0].mxu0 %v179
    %v437 = vpop.f32.mrb[0].mxu0
    %v438 = vadd.f32 0.0, %v437
    %v439 = vpop.f32.mrb[0].mxu0
    %v440 = vadd.f32 0.0, %v439
    %441 = vmatprep.mubr.f32.mxu0 %v182
    %442 = vmatmul.mubr.f32.gmra.mrb[0].mxu0 %v181
    %v443 = vpop.f32.mrb[0].mxu0
    %v444 = vadd.f32 0.0, %v443
    %v445 = vpop.f32.mrb[0].mxu0
    %v446 = vadd.f32 0.0, %v445
    %447 = vmatprep.mubr.f32.mxu0 %v184
    %448 = vmatmul.mubr.f32.gmra.mrb[0].mxu0 %v183
    %v449 = vpop.f32.mrb[0].mxu0
    %v450 = vadd.f32 0.0, %v449
    %v451 = vpop.f32.mrb[0].mxu0
    %v452 = vadd.f32 0.0, %v451
    %453 = vmatprep.mubr.f32.mxu0 %v186
    %454 = vmatmul.mubr.f32.gmra.mrb[0].mxu0 %v185
    %v455 = vpop.f32.mrb[0].mxu0
    %v456 = vadd.f32 0.0, %v455
    %v457 = vpop.f32.mrb[0].mxu0
    %v458 = vadd.f32 0.0, %v457
    %459 = vmatprep.mubr.f32.mxu0 %v188
    %460 = vmatmul.mubr.f32.gmra.mrb[0].mxu0 %v187
    %v461 = vpop.f32.mrb[0].mxu0
    %v462 = vadd.f32 0.0, %v461
    %v463 = vpop.f32.mrb[0].mxu0
    %v464 = vadd.f32 0.0, %v463
    %465 = vmatprep.mubr.f32.mxu0 %v190
    %466 = vmatmul.mubr.f32.gmra.mrb[0].mxu0 %v189
    %v467 = vpop.f32.mrb[0].mxu0
    %v468 = vadd.f32 0.0, %v467
    %v469 = vpop.f32.mrb[0].mxu0
    %v470 = vadd.f32 0.0, %v469
    %471 = vmatprep.mubr.f32.mxu0 %v192
    %472 = vmatmul.mubr.f32.gmra.mrb[0].mxu0 %v191
    %v473 = vpop.f32.mrb[0].mxu0
    %v474 = vadd.f32 0.0, %v473
    %v475 = vpop.f32.mrb[0].mxu0
    %v476 = vadd.f32 0.0, %v475
    %477 = vmatprep.mubr.f32.mxu0 %v194
    %478 = vmatmul.mubr.f32.gmra.mrb[0].mxu0 %v193
    %v479 = vpop.f32.mrb[0].mxu0
    %v480 = vadd.f32 0.0, %v479
    %v481 = vpop.f32.mrb[0].mxu0
    %v482 = vadd.f32 0.0, %v481
    %483 = vmatprep.mubr.f32.mxu0 %v196
    %484 = vmatmul.mubr.f32.gmra.mrb[0].mxu0 %v195
    %v485 = vpop.f32.mrb[0].mxu0
    %v486 = vadd.f32 0.0, %v485
    %v487 = vpop.f32.mrb[0].mxu0
    %v488 = vadd.f32 0.0, %v487
    %489 = vmatprep.mubr.f32.mxu0 %v198
    %490 = vmatmul.mubr.f32.gmra.mrb[0].mxu0 %v197
    %v491 = vpop.f32.mrb[0].mxu0
    %v492 = vadd.f32 0.0, %v491
    %v493 = vpop.f32.mrb[0].mxu0
    %v494 = vadd.f32 0.0, %v493
    %495 = vmatprep.mubr.f32.mxu0 %v200
    %496 = vmatmul.mubr.f32.gmra.mrb[0].mxu0 %v199
    %v497 = vpop.f32.mrb[0].mxu0
    %v498 = vadd.f32 0.0, %v497
    %v499 = vpop.f32.mrb[0].mxu0
    %v500 = vadd.f32 0.0, %v499
    %501 = vmatprep.mubr.f32.mxu0 %v202
    %502 = vmatmul.mubr.f32.gmra.mrb[0].mxu0 %v201
    %v503 = vpop.f32.mrb[0].mxu0
    %v504 = vadd.f32 0.0, %v503
    %v505 = vpop.f32.mrb[0].mxu0
    %v506 = vadd.f32 0.0, %v505
    %507 = vmatprep.mubr.f32.mxu0 %v204
    %508 = vmatmul.mubr.f32.gmra.mrb[0].mxu0 %v203
    %v509 = vpop.f32.mrb[0].mxu0
    %v510 = vadd.f32 0.0, %v509
    %v511 = vpop.f32.mrb[0].mxu0
    %v512 = vadd.f32 0.0, %v511
    %513 = vmatprep.mubr.f32.mxu0 %v206
    %514 = vmatmul.mubr.f32.gmra.mrb[0].mxu0 %v205
    %v515 = vpop.f32.mrb[0].mxu0
    %v516 = vadd.f32 0.0, %v515
    %v517 = vpop.f32.mrb[0].mxu0
    %v518 = vadd.f32 0.0, %v517
    %519 = vmatprep.mubr.f32.mxu0 %v208
    %520 = vmatmul.mubr.f32.gmra.mrb[0].mxu0 %v207
    %v521 = vpop.f32.mrb[0].mxu0
    %v522 = vadd.f32 0.0, %v521
    %v523 = vpop.f32.mrb[0].mxu0
    %v524 = vadd.f32 0.0, %v523
    %525 = vmatprep.mubr.f32.mxu0 %v210
    %526 = vmatmul.mubr.f32.gmra.mrb[0].mxu0 %v209
    %v527 = vpop.f32.mrb[0].mxu0
    %v528 = vadd.f32 0.0, %v527
    %v529 = vpop.f32.mrb[0].mxu0
    %v530 = vadd.f32 0.0, %v529
    %531 = vdwg.mxu0
    %v532 = vadd.f32 %v83, %v342
    %v533 = vadd.f32 %v84, %v344
    %v534 = vadd.f32 %v85, %v348
    %v535 = vadd.f32 %v86, %v350
    %v536 = vadd.f32 %v87, %v354
    %v537 = vadd.f32 %v88, %v356
    %v538 = vadd.f32 %v89, %v360
    %v539 = vadd.f32 %v90, %v362
    %v540 = vadd.f32 %v91, %v366
    %v541 = vadd.f32 %v92, %v368
    %v542 = vadd.f32 %v93, %v372
    %v543 = vadd.f32 %v94, %v374
    %v544 = vadd.f32 %v95, %v378
    %v545 = vadd.f32 %v96, %v380
    %v546 = vadd.f32 %v97, %v384
    %v547 = vadd.f32 %v98, %v386
    %v548 = vadd.f32 %v99, %v390
    %v549 = vadd.f32 %v100, %v392
    %v550 = vadd.f32 %v101, %v396
    %v551 = vadd.f32 %v102, %v398
    %v552 = vadd.f32 %v103, %v402
    %v553 = vadd.f32 %v104, %v404
    %v554 = vadd.f32 %v105, %v408
    %v555 = vadd.f32 %v106, %v410
    %v556 = vadd.f32 %v107, %v414
    %v557 = vadd.f32 %v108, %v416
    %v558 = vadd.f32 %v109, %v420
    %v559 = vadd.f32 %v110, %v422
    %v560 = vadd.f32 %v111, %v426
    %v561 = vadd.f32 %v112, %v428
    %v562 = vadd.f32 %v113, %v432
    %v563 = vadd.f32 %v114, %v434
    %v564 = vadd.f32 %v115, %v438
    %v565 = vadd.f32 %v116, %v440
    %v566 = vadd.f32 %v117, %v444
    %v567 = vadd.f32 %v118, %v446
    %v568 = vadd.f32 %v119, %v450
    %v569 = vadd.f32 %v120, %v452
    %v570 = vadd.f32 %v121, %v456
    %v571 = vadd.f32 %v122, %v458
    %v572 = vadd.f32 %v123, %v462
    %v573 = vadd.f32 %v124, %v464
    %v574 = vadd.f32 %v125, %v468
    %v575 = vadd.f32 %v126, %v470
    %v576 = vadd.f32 %v127, %v474
    %v577 = vadd.f32 %v128, %v476
    %v578 = vadd.f32 %v129, %v480
    %v579 = vadd.f32 %v130, %v482
    %v580 = vadd.f32 %v131, %v486
    %v581 = vadd.f32 %v132, %v488
    %v582 = vadd.f32 %v133, %v492
    %v583 = vadd.f32 %v134, %v494
    %v584 = vadd.f32 %v135, %v498
    %v585 = vadd.f32 %v136, %v500
    %v586 = vadd.f32 %v137, %v504
    %v587 = vadd.f32 %v138, %v506
    %v588 = vadd.f32 %v139, %v510
    %v589 = vadd.f32 %v140, %v512
    %v590 = vadd.f32 %v141, %v516
    %v591 = vadd.f32 %v142, %v518
    %v592 = vadd.f32 %v143, %v522
    %v593 = vadd.f32 %v144, %v524
    %v594 = vadd.f32 %v145, %v528
    %v595 = vadd.f32 %v146, %v530
    %596 = vst [vmem:[#allocation2] sm:$0xff] %v532
    %597 = vst [vmem:[#allocation2 + $0x8] sm:$0xff] %v533
    %598 = vst [vmem:[#allocation2 + $0x10] sm:$0xff] %v534
    %599 = vst [vmem:[#allocation2 + $0x18] sm:$0xff] %v535
    %600 = vst [vmem:[#allocation2 + $0x20] sm:$0xff] %v536
    %601 = vst [vmem:[#allocation2 + $0x28] sm:$0xff] %v537
    %602 = vst [vmem:[#allocation2 + $0x30] sm:$0xff] %v538
    %603 = vst [vmem:[#allocation2 + $0x38] sm:$0xff] %v539
    %604 = vst [vmem:[#allocation2 + $0x40] sm:$0xff] %v540
    %605 = vst [vmem:[#allocation2 + $0x48] sm:$0xff] %v541
    %606 = vst [vmem:[#allocation2 + $0x50] sm:$0xff] %v542
    %607 = vst [vmem:[#allocation2 + $0x58] sm:$0xff] %v543
    %608 = vst [vmem:[#allocation2 + $0x60] sm:$0xff] %v544
    %609 = vst [vmem:[#allocation2 + $0x68] sm:$0xff] %v545
    %610 = vst [vmem:[#allocation2 + $0x70] sm:$0xff] %v546
    %611 = vst [vmem:[#allocation2 + $0x78] sm:$0xff] %v547
    %612 = vst [vmem:[#allocation2 + $0x80] sm:$0xff] %v548
    %613 = vst [vmem:[#allocation2 + $0x88] sm:$0xff] %v549
    %614 = vst [vmem:[#allocation2 + $0x90] sm:$0xff] %v550
    %615 = vst [vmem:[#allocation2 + $0x98] sm:$0xff] %v551
    %616 = vst [vmem:[#allocation2 + $0xa0] sm:$0xff] %v552
    %617 = vst [vmem:[#allocation2 + $0xa8] sm:$0xff] %v553
    %618 = vst [vmem:[#allocation2 + $0xb0] sm:$0xff] %v554
    %619 = vst [vmem:[#allocation2 + $0xb8] sm:$0xff] %v555
    %620 = vst [vmem:[#allocation2 + $0xc0] sm:$0xff] %v556
    %621 = vst [vmem:[#allocation2 + $0xc8] sm:$0xff] %v557
    %622 = vst [vmem:[#allocation2 + $0xd0] sm:$0xff] %v558
    %623 = vst [vmem:[#allocation2 + $0xd8] sm:$0xff] %v559
    %624 = vst [vmem:[#allocation2 + $0xe0] sm:$0xff] %v560
    %625 = vst [vmem:[#allocation2 + $0xe8] sm:$0xff] %v561
    %626 = vst [vmem:[#allocation2 + $0xf0] sm:$0xff] %v562
    %627 = vst [vmem:[#allocation2 + $0xf8] sm:$0xff] %v563
    %628 = vst [vmem:[#allocation2 + $0x100] sm:$0xff] %v564
    %629 = vst [vmem:[#allocation2 + $0x108] sm:$0xff] %v565
    %630 = vst [vmem:[#allocation2 + $0x110] sm:$0xff] %v566
    %631 = vst [vmem:[#allocation2 + $0x118] sm:$0xff] %v567
    %632 = vst [vmem:[#allocation2 + $0x120] sm:$0xff] %v568
    %633 = vst [vmem:[#allocation2 + $0x128] sm:$0xff] %v569
    %634 = vst [vmem:[#allocation2 + $0x130] sm:$0xff] %v570
    %635 = vst [vmem:[#allocation2 + $0x138] sm:$0xff] %v571
    %636 = vst [vmem:[#allocation2 + $0x140] sm:$0xff] %v572
    %637 = vst [vmem:[#allocation2 + $0x148] sm:$0xff] %v573
    %638 = vst [vmem:[#allocation2 + $0x150] sm:$0xff] %v574
    %639 = vst [vmem:[#allocation2 + $0x158] sm:$0xff] %v575
    %640 = vst [vmem:[#allocation2 + $0x160] sm:$0xff] %v576
    %641 = vst [vmem:[#allocation2 + $0x168] sm:$0xff] %v577
    %642 = vst [vmem:[#allocation2 + $0x170] sm:$0xff] %v578
    %643 = vst [vmem:[#allocation2 + $0x178] sm:$0xff] %v579
    %644 = vst [vmem:[#allocation2 + $0x180] sm:$0xff] %v580
    %645 = vst [vmem:[#allocation2 + $0x188] sm:$0xff] %v581
    %646 = vst [vmem:[#allocation2 + $0x190] sm:$0xff] %v582
    %647 = vst [vmem:[#allocation2 + $0x198] sm:$0xff] %v583
    %648 = vst [vmem:[#allocation2 + $0x1a0] sm:$0xff] %v584
    %649 = vst [vmem:[#allocation2 + $0x1a8] sm:$0xff] %v585
    %650 = vst [vmem:[#allocation2 + $0x1b0] sm:$0xff] %v586
    %651 = vst [vmem:[#allocation2 + $0x1b8] sm:$0xff] %v587
    %652 = vst [vmem:[#allocation2 + $0x1c0] sm:$0xff] %v588
    %653 = vst [vmem:[#allocation2 + $0x1c8] sm:$0xff] %v589
    %654 = vst [vmem:[#allocation2 + $0x1d0] sm:$0xff] %v590
    %655 = vst [vmem:[#allocation2 + $0x1d8] sm:$0xff] %v591
    %656 = vst [vmem:[#allocation2 + $0x1e0] sm:$0xff] %v592
    %657 = vst [vmem:[#allocation2 + $0x1e8] sm:$0xff] %v593
    %658 = vst [vmem:[#allocation2 + $0x1f0] sm:$0xff] %v594
    %659 = vst [vmem:[#allocation2 + $0x1f8] sm:$0xff] %v595
    // Predicated region
    $region18: #{attention_forward.5} parent=1 // pred_check
      %p660 = pneg %p15
    $region19: #{attention_forward.5} parent=1 // pred_check_branch
      %662 = sbr.rel (%p660) target = $region21
    $region20: #{attention_forward.5} parent=1 // pred_region
      %v663 = vld [vmem:[#allocation2] sm:$0xff]
      %v664 = vld [vmem:[#allocation2 + $0x8] sm:$0xff]
      %v665 = vld [vmem:[#allocation2 + $0x10] sm:$0xff]
      %v666 = vld [vmem:[#allocation2 + $0x18] sm:$0xff]
      %v667 = vld [vmem:[#allocation2 + $0x20] sm:$0xff]
      %v668 = vld [vmem:[#allocation2 + $0x28] sm:$0xff]
      %v669 = vld [vmem:[#allocation2 + $0x30] sm:$0xff]
      %v670 = vld [vmem:[#allocation2 + $0x38] sm:$0xff]
      %v671 = vld [vmem:[#allocation2 + $0x40] sm:$0xff]
      %v672 = vld [vmem:[#allocation2 + $0x48] sm:$0xff]
      %v673 = vld [vmem:[#allocation2 + $0x50] sm:$0xff]
      %v674 = vld [vmem:[#allocation2 + $0x58] sm:$0xff]
      %v675 = vld [vmem:[#allocation2 + $0x60] sm:$0xff]
      %v676 = vld [vmem:[#allocation2 + $0x68] sm:$0xff]
      %v677 = vld [vmem:[#allocation2 + $0x70] sm:$0xff]
      %v678 = vld [vmem:[#allocation2 + $0x78] sm:$0xff]
      %v679 = vld [vmem:[#allocation2 + $0x80] sm:$0xff]
      %v680 = vld [vmem:[#allocation2 + $0x88] sm:$0xff]
      %v681 = vld [vmem:[#allocation2 + $0x90] sm:$0xff]
      %v682 = vld [vmem:[#allocation2 + $0x98] sm:$0xff]
      %v683 = vld [vmem:[#allocation2 + $0xa0] sm:$0xff]
      %v684 = vld [vmem:[#allocation2 + $0xa8] sm:$0xff]
      %v685 = vld [vmem:[#allocation2 + $0xb0] sm:$0xff]
      %v686 = vld [vmem:[#allocation2 + $0xb8] sm:$0xff]
      %v687 = vld [vmem:[#allocation2 + $0xc0] sm:$0xff]
      %v688 = vld [vmem:[#allocation2 + $0xc8] sm:$0xff]
      %v689 = vld [vmem:[#allocation2 + $0xd0] sm:$0xff]
      %v690 = vld [vmem:[#allocation2 + $0xd8] sm:$0xff]
      %v691 = vld [vmem:[#allocation2 + $0xe0] sm:$0xff]
      %v692 = vld [vmem:[#allocation2 + $0xe8] sm:$0xff]
      %v693 = vld [vmem:[#allocation2 + $0xf0] sm:$0xff]
      %v694 = vld [vmem:[#allocation2 + $0xf8] sm:$0xff]
      %v695 = vld [vmem:[#allocation2 + $0x100] sm:$0xff]
      %v696 = vld [vmem:[#allocation2 + $0x108] sm:$0xff]
      %v697 = vld [vmem:[#allocation2 + $0x110] sm:$0xff]
      %v698 = vld [vmem:[#allocation2 + $0x118] sm:$0xff]
      %v699 = vld [vmem:[#allocation2 + $0x120] sm:$0xff]
      %v700 = vld [vmem:[#allocation2 + $0x128] sm:$0xff]
      %v701 = vld [vmem:[#allocation2 + $0x130] sm:$0xff]
      %v702 = vld [vmem:[#allocation2 + $0x138] sm:$0xff]
      %v703 = vld [vmem:[#allocation2 + $0x140] sm:$0xff]
      %v704 = vld [vmem:[#allocation2 + $0x148] sm:$0xff]
      %v705 = vld [vmem:[#allocation2 + $0x150] sm:$0xff]
      %v706 = vld [vmem:[#allocation2 + $0x158] sm:$0xff]
      %v707 = vld [vmem:[#allocation2 + $0x160] sm:$0xff]
      %v708 = vld [vmem:[#allocation2 + $0x168] sm:$0xff]
      %v709 = vld [vmem:[#allocation2 + $0x170] sm:$0xff]
      %v710 = vld [vmem:[#allocation2 + $0x178] sm:$0xff]
      %v711 = vld [vmem:[#allocation2 + $0x180] sm:$0xff]
      %v712 = vld [vmem:[#allocation2 + $0x188] sm:$0xff]
      %v713 = vld [vmem:[#allocation2 + $0x190] sm:$0xff]
      %v714 = vld [vmem:[#allocation2 + $0x198] sm:$0xff]
      %v715 = vld [vmem:[#allocation2 + $0x1a0] sm:$0xff]
      %v716 = vld [vmem:[#allocation2 + $0x1a8] sm:$0xff]
      %v717 = vld [vmem:[#allocation2 + $0x1b0] sm:$0xff]
      %v718 = vld [vmem:[#allocation2 + $0x1b8] sm:$0xff]
      %v719 = vld [vmem:[#allocation2 + $0x1c0] sm:$0xff]
      %v720 = vld [vmem:[#allocation2 + $0x1c8] sm:$0xff]
      %v721 = vld [vmem:[#allocation2 + $0x1d0] sm:$0xff]
      %v722 = vld [vmem:[#allocation2 + $0x1d8] sm:$0xff]
      %v723 = vld [vmem:[#allocation2 + $0x1e0] sm:$0xff]
      %v724 = vld [vmem:[#allocation2 + $0x1e8] sm:$0xff]
      %v725 = vld [vmem:[#allocation2 + $0x1f0] sm:$0xff]
      %v726 = vld [vmem:[#allocation2 + $0x1f8] sm:$0xff]
      %v727 = vld [vmem:[%s2] sm:$0x3]
      %v729 = vlaneseq
      %v730 = vshrl.u32 %v729, 7
      %v731 = vsub.s32 0, %v730
      %v732 = vrot.slane %v727, %v731
      %v733 = vlaneseq
      %v734 = vshrl.u32 %v733, 7
      %v735 = vsub.s32 1, %v734
      %v736 = vrot.slane %v727, %v735
      %v739 = vadd.f32 %v663, %v732
      %v740 = vadd.f32 %v664, %v736
      %v741 = vadd.f32 %v665, %v732
      %v742 = vadd.f32 %v666, %v736
      %v743 = vadd.f32 %v667, %v732
      %v744 = vadd.f32 %v668, %v736
      %v745 = vadd.f32 %v669, %v732
      %v746 = vadd.f32 %v670, %v736
      %v747 = vadd.f32 %v671, %v732
      %v748 = vadd.f32 %v672, %v736
      %v749 = vadd.f32 %v673, %v732
      %v750 = vadd.f32 %v674, %v736
      %v751 = vadd.f32 %v675, %v732
      %v752 = vadd.f32 %v676, %v736
      %v753 = vadd.f32 %v677, %v732
      %v754 = vadd.f32 %v678, %v736
      %v755 = vadd.f32 %v679, %v732
      %v756 = vadd.f32 %v680, %v736
      %v757 = vadd.f32 %v681, %v732
      %v758 = vadd.f32 %v682, %v736
      %v759 = vadd.f32 %v683, %v732
      %v760 = vadd.f32 %v684, %v736
      %v761 = vadd.f32 %v685, %v732
      %v762 = vadd.f32 %v686, %v736
      %v763 = vadd.f32 %v687, %v732
      %v764 = vadd.f32 %v688, %v736
      %v765 = vadd.f32 %v689, %v732
      %v766 = vadd.f32 %v690, %v736
      %v767 = vadd.f32 %v691, %v732
      %v768 = vadd.f32 %v692, %v736
      %v769 = vadd.f32 %v693, %v732
      %v770 = vadd.f32 %v694, %v736
      %v771 = vadd.f32 %v695, %v732
      %v772 = vadd.f32 %v696, %v736
      %v773 = vadd.f32 %v697, %v732
      %v774 = vadd.f32 %v698, %v736
      %v775 = vadd.f32 %v699, %v732
      %v776 = vadd.f32 %v700, %v736
      %v777 = vadd.f32 %v701, %v732
      %v778 = vadd.f32 %v702, %v736
      %v779 = vadd.f32 %v703, %v732
      %v780 = vadd.f32 %v704, %v736
      %v781 = vadd.f32 %v705, %v732
      %v782 = vadd.f32 %v706, %v736
      %v783 = vadd.f32 %v707, %v732
      %v784 = vadd.f32 %v708, %v736
      %v785 = vadd.f32 %v709, %v732
      %v786 = vadd.f32 %v710, %v736
      %v787 = vadd.f32 %v711, %v732
      %v788 = vadd.f32 %v712, %v736
      %v789 = vadd.f32 %v713, %v732
      %v790 = vadd.f32 %v714, %v736
      %v791 = vadd.f32 %v715, %v732
      %v792 = vadd.f32 %v716, %v736
      %v793 = vadd.f32 %v717, %v732
      %v794 = vadd.f32 %v718, %v736
      %v795 = vadd.f32 %v719, %v732
      %v796 = vadd.f32 %v720, %v736
      %v797 = vadd.f32 %v721, %v732
      %v798 = vadd.f32 %v722, %v736
      %v799 = vadd.f32 %v723, %v732
      %v800 = vadd.f32 %v724, %v736
      %v801 = vadd.f32 %v725, %v732
      %v802 = vadd.f32 %v726, %v736
      %803 = vst [vmem:[#allocation3] sm:$0xff] %v739
      %804 = vst [vmem:[#allocation3 + $0x8] sm:$0xff] %v740
      %805 = vst [vmem:[#allocation3 + $0x10] sm:$0xff] %v741
      %806 = vst [vmem:[#allocation3 + $0x18] sm:$0xff] %v742
      %807 = vst [vmem:[#allocation3 + $0x20] sm:$0xff] %v743
      %808 = vst [vmem:[#allocation3 + $0x28] sm:$0xff] %v744
      %809 = vst [vmem:[#allocation3 + $0x30] sm:$0xff] %v745
      %810 = vst [vmem:[#allocation3 + $0x38] sm:$0xff] %v746
      %811 = vst [vmem:[#allocation3 + $0x40] sm:$0xff] %v747
      %812 = vst [vmem:[#allocation3 + $0x48] sm:$0xff] %v748
      %813 = vst [vmem:[#allocation3 + $0x50] sm:$0xff] %v749
      %814 = vst [vmem:[#allocation3 + $0x58] sm:$0xff] %v750
      %815 = vst [vmem:[#allocation3 + $0x60] sm:$0xff] %v751
      %816 = vst [vmem:[#allocation3 + $0x68] sm:$0xff] %v752
      %817 = vst [vmem:[#allocation3 + $0x70] sm:$0xff] %v753
      %818 = vst [vmem:[#allocation3 + $0x78] sm:$0xff] %v754
      %819 = vst [vmem:[#allocation3 + $0x80] sm:$0xff] %v755
      %820 = vst [vmem:[#allocation3 + $0x88] sm:$0xff] %v756
      %821 = vst [vmem:[#allocation3 + $0x90] sm:$0xff] %v757
      %822 = vst [vmem:[#allocation3 + $0x98] sm:$0xff] %v758
      %823 = vst [vmem:[#allocation3 + $0xa0] sm:$0xff] %v759
      %824 = vst [vmem:[#allocation3 + $0xa8] sm:$0xff] %v760
      %825 = vst [vmem:[#allocation3 + $0xb0] sm:$0xff] %v761
      %826 = vst [vmem:[#allocation3 + $0xb8] sm:$0xff] %v762
      %827 = vst [vmem:[#allocation3 + $0xc0] sm:$0xff] %v763
      %828 = vst [vmem:[#allocation3 + $0xc8] sm:$0xff] %v764
      %829 = vst [vmem:[#allocation3 + $0xd0] sm:$0xff] %v765
      %830 = vst [vmem:[#allocation3 + $0xd8] sm:$0xff] %v766
      %831 = vst [vmem:[#allocation3 + $0xe0] sm:$0xff] %v767
      %832 = vst [vmem:[#allocation3 + $0xe8] sm:$0xff] %v768
      %833 = vst [vmem:[#allocation3 + $0xf0] sm:$0xff] %v769
      %834 = vst [vmem:[#allocation3 + $0xf8] sm:$0xff] %v770
      %835 = vst [vmem:[#allocation3 + $0x100] sm:$0xff] %v771
      %836 = vst [vmem:[#allocation3 + $0x108] sm:$0xff] %v772
      %837 = vst [vmem:[#allocation3 + $0x110] sm:$0xff] %v773
      %838 = vst [vmem:[#allocation3 + $0x118] sm:$0xff] %v774
      %839 = vst [vmem:[#allocation3 + $0x120] sm:$0xff] %v775
      %840 = vst [vmem:[#allocation3 + $0x128] sm:$0xff] %v776
      %841 = vst [vmem:[#allocation3 + $0x130] sm:$0xff] %v777
      %842 = vst [vmem:[#allocation3 + $0x138] sm:$0xff] %v778
      %843 = vst [vmem:[#allocation3 + $0x140] sm:$0xff] %v779
      %844 = vst [vmem:[#allocation3 + $0x148] sm:$0xff] %v780
      %845 = vst [vmem:[#allocation3 + $0x150] sm:$0xff] %v781
      %846 = vst [vmem:[#allocation3 + $0x158] sm:$0xff] %v782
      %847 = vst [vmem:[#allocation3 + $0x160] sm:$0xff] %v783
      %848 = vst [vmem:[#allocation3 + $0x168] sm:$0xff] %v784
      %849 = vst [vmem:[#allocation3 + $0x170] sm:$0xff] %v785
      %850 = vst [vmem:[#allocation3 + $0x178] sm:$0xff] %v786
      %851 = vst [vmem:[#allocation3 + $0x180] sm:$0xff] %v787
      %852 = vst [vmem:[#allocation3 + $0x188] sm:$0xff] %v788
      %853 = vst [vmem:[#allocation3 + $0x190] sm:$0xff] %v789
      %854 = vst [vmem:[#allocation3 + $0x198] sm:$0xff] %v790
      %855 = vst [vmem:[#allocation3 + $0x1a0] sm:$0xff] %v791
      %856 = vst [vmem:[#allocation3 + $0x1a8] sm:$0xff] %v792
      %857 = vst [vmem:[#allocation3 + $0x1b0] sm:$0xff] %v793
      %858 = vst [vmem:[#allocation3 + $0x1b8] sm:$0xff] %v794
      %859 = vst [vmem:[#allocation3 + $0x1c0] sm:$0xff] %v795
      %860 = vst [vmem:[#allocation3 + $0x1c8] sm:$0xff] %v796
      %861 = vst [vmem:[#allocation3 + $0x1d0] sm:$0xff] %v797
      %862 = vst [vmem:[#allocation3 + $0x1d8] sm:$0xff] %v798
      %863 = vst [vmem:[#allocation3 + $0x1e0] sm:$0xff] %v799
      %864 = vst [vmem:[#allocation3 + $0x1e8] sm:$0xff] %v800
      %865 = vst [vmem:[#allocation3 + $0x1f0] sm:$0xff] %v801
      %866 = vst [vmem:[#allocation3 + $0x1f8] sm:$0xff] %v802
    $region21: #{attention_forward.5} parent=1 // pred_fallthru
      _
    // Predicated region
    $region22: #{attention_forward.5} parent=1 // pred_check
      _
    $region23: #{attention_forward.5} parent=1 // pred_check_branch
      %868 = sbr.rel (0) target = $region25
    $region24: #{attention_forward.5} parent=1 // pred_region
      %s870 = ssub.s32 8192, 8192
      %871 = vsyncadd [#allocation4], %s870
      %s872 = sshll.u32 [#allocation3], 4
      %s873 = int_to_ptr.vmem [resolvable:$true] %s872
      %878 = dma.vmem_to_hbm [thread:$0]  %s873, 8192, %s3, [#allocation4], 256, 256, 16
    $region25: #{attention_forward.5} parent=1 // pred_fallthru
      _
    // Predicated region
    $region26: #{attention_forward.5} parent=1 // pred_check
      _
    $region27: #{attention_forward.5} parent=1 // pred_check_branch
      %880 = sbr.rel (0) target = $region29
    $region28: #{attention_forward.5} parent=1 // pred_region
      %881 = dma.done [#allocation4], 8192
    $region29: #{attention_forward.5} parent=1 // pred_fallthru
      _
    %882 = vsyncpa [#allocation4], 1

// kernel: attention_forward.3
$region0: #{attention_forward.3}
  #allocation0 [shape = 'u32[]', space=smem, size = 0x4, offset = 0x4, fixed_abs, tag = 'smem constant byte address 0x4 - core index']
  #allocation1 [shape = 'u32[144,128]{1,0:T(1,128)}', space=vmem, size = 0x12000, scoped, tag = 'internal scratch']
  #allocation2 [shape = 'f32[256,384]{1,0:T(8,128)}', space=vmem, size = 0x60000, scoped, tag = 'scratch operand']
  %s0 = inlined_call_operand.hbm [shape: f32[256,256], index: 0, kind: input, shape index: {}]
  %s1 = inlined_call_operand.hbm [shape: f32[256,768], index: 1, kind: input, shape index: {}]
  %s2 = inlined_call_operand.vmem [shape: f32[256,768], index: 2, kind: output, shape index: {}]
  %s3 = sld [smem:[#allocation0]]
  $region76: #{attention_forward.3} parent=0
    _
  %s5 = ssub.s32 1, %s3
  %s6 = scalar_select 0, %s5, %s3
  $region1: #{attention_forward.3} parent=0
    #allocation3 [shape = 'u8[262144]{0}', space=vmem, size = 0x40000, scoped, tag = 'input window, operand 0, single buffered']
    #allocation4 [shape = 's32[2]{0}', space=sflag, size = 0x8, scoped, tag = 'scoped memory for attention_forward.3']
    #allocation5 [shape = 'u8[786432]{0}', space=vmem, size = 0xc0000, scoped, tag = 'input window, operand 1']
    #allocation6 [shape = 's32[2]{0}', space=sflag, size = 0x8, scoped, tag = 'scoped memory for attention_forward.3']
    #allocation7 [shape = 'u8[786432]{0}', space=vmem, size = 0xc0000, scoped, tag = 'output window, operand 0']
    %7 = vsyncpa [#allocation4], 0
    %8 = vsyncpa [#allocation6], 0
    %s9 = scalar_lea.sflag [#allocation6], 1
    %10 = vsyncpa %s9, 0
    loop: start=0, step=1, limit=4
    $region2: #{attention_forward.3} parent=1 // loop_pre_header
      _
    $region3: #{attention_forward.3} parent=1 // loop_header
      %s12 = sphi 0, %s16
      %p13 = scmp.ge.s32.totalorder %s12, 4
      %s19 = sphi 0, %s38
      %s20 = sphi 0, %s34
      %s21 = sphi 0, %s30
      %s22 = sphi 0, %s19
      %s23 = sphi 0, %s20
      %s24 = sphi 0, %s21
      %s25 = sphi 0, %s22
      %s26 = sphi 0, %s23
      %s27 = sphi 0, %s24
      %s43 = sphi 0, %s45
      %s46 = sphi 0, %s43
      %s47 = sphi 0, %s46
      %s63 = sphi 0, %s47
      %s71 = sphi 0, %s73
      %s74 = sphi 0, %s71
      %s75 = sphi 0, %s74
      %s91 = sphi 0, %s75
      %s99 = sphi 0, %s101
      %s102 = sphi 0, %s99
      %s103 = sphi 0, %s102
      %s119 = sphi 0, %s103
    $region4: #{attention_forward.3} parent=1 // loop_header_branch
      %15 = sbr.rel (%p13) target = $region8
    $region5: #{attention_forward.3} parent=1 // loop_body
      %s17 = ssub.s32 %s12, 1
      %s18 = ssub.s32 %s12, 2
      %s28 = sadd.s32 1, %s21
      %p29 = scmp.ge.s32.totalorder %s28, 1
      %s30 = scalar_select %p29, 0, %s28
      %s31 = sadd.s32 1, %s20
      %s32 = scalar_select %p29, %s31, %s20
      %p33 = scmp.ge.s32.totalorder %s32, 2
      %s34 = scalar_select %p33, 0, %s32
      %s35 = sadd.s32 1, %s19
      %s36 = scalar_select %p33, %s35, %s19
      %p37 = scmp.ge.s32.totalorder %s36, 1
      %s38 = scalar_select %p37, 0, %s36
      %s39 = ssub.s32 %s19, %s38
      %s40 = ssub.s32 %s21, %s30
      %s41 = sor.u32 %s39, %s40
      %p42 = scmp.eq.s32.totalorder %s41, 0
      %s44 = sadd.s32 %s43, 1
      %s45 = scalar_select %p42, %s43, %s44
      %p48 = pneg %p42
      %p49 = scmp.eq.s32.totalorder %s12, 1
      %p50 = por %p48, %p49
      %p51 = scmp.ne.s32.totalorder %s43, %s46
      %p52 = scmp.eq.s32.totalorder %s12, 0
      %p53 = por %p51, %p52
      %p54 = scmp.ne.s32.totalorder %s43, %s46
      %p55 = scmp.eq.s32.totalorder %s17, 1
      %p56 = por %p54, %p55
      %p57 = scmp.ne.s32.totalorder %s46, %s47
      %p58 = scmp.eq.s32.totalorder %s17, 0
      %p59 = por %p57, %p58
      %p60 = scmp.ne.s32.totalorder %s46, %s47
      %p61 = scmp.eq.s32.totalorder %s18, 1
      %p62 = por %p60, %p61
      %p64 = scmp.ne.s32.totalorder %s47, %s63
      %p65 = scmp.eq.s32.totalorder %s18, 0
      %p66 = por %p64, %p65
      %s67 = ssub.s32 %s21, %s30
      %s68 = ssub.s32 %s20, %s34
      %s69 = sor.u32 %s67, %s68
      %p70 = scmp.eq.s32.totalorder %s69, 0
      %s72 = sadd.s32 %s71, 1
      %s73 = scalar_select %p70, %s71, %s72
      %p76 = pneg %p70
      %p77 = scmp.eq.s32.totalorder %s12, 1
      %p78 = por %p76, %p77
      %p79 = scmp.ne.s32.totalorder %s71, %s74
      %p80 = scmp.eq.s32.totalorder %s12, 0
      %p81 = por %p79, %p80
      %p82 = scmp.ne.s32.totalorder %s71, %s74
      %p83 = scmp.eq.s32.totalorder %s17, 1
      %p84 = por %p82, %p83
      %p85 = scmp.ne.s32.totalorder %s74, %s75
      %p86 = scmp.eq.s32.totalorder %s17, 0
      %p87 = por %p85, %p86
      %p88 = scmp.ne.s32.totalorder %s74, %s75
      %p89 = scmp.eq.s32.totalorder %s18, 1
      %p90 = por %p88, %p89
      %p92 = scmp.ne.s32.totalorder %s75, %s91
      %p93 = scmp.eq.s32.totalorder %s18, 0
      %p94 = por %p92, %p93
      %s95 = ssub.s32 %s19, %s38
      %s96 = ssub.s32 %s20, %s34
      %s97 = sor.u32 %s95, %s96
      %p98 = scmp.eq.s32.totalorder %s97, 0
      %s100 = sadd.s32 %s99, 1
      %s101 = scalar_select %p98, %s99, %s100
      %p104 = pneg %p98
      %p105 = scmp.eq.s32.totalorder %s12, 1
      %p106 = por %p104, %p105
      %p107 = scmp.ne.s32.totalorder %s99, %s102
      %p108 = scmp.eq.s32.totalorder %s12, 0
      %p109 = por %p107, %p108
      %p110 = scmp.ne.s32.totalorder %s99, %s102
      %p111 = scmp.eq.s32.totalorder %s17, 1
      %p112 = por %p110, %p111
      %p113 = scmp.ne.s32.totalorder %s102, %s103
      %p114 = scmp.eq.s32.totalorder %s17, 0
      %p115 = por %p113, %p114
      %p116 = scmp.ne.s32.totalorder %s102, %s103
      %p117 = scmp.eq.s32.totalorder %s18, 1
      %p118 = por %p116, %p117
      %p120 = scmp.ne.s32.totalorder %s103, %s119
      %p121 = scmp.eq.s32.totalorder %s18, 0
      %p122 = por %p120, %p121
      %p123 = scmp.le.s32.totalorder 1, %s12
      %p124 = scmp.lt.s32.totalorder %s12, 3
      %p125 = pnand %p123, %p124
      %p126 = pneg %p125
      // Predicated region
      $region9: #{attention_forward.3} parent=5 // pred_check
        _
      $region10: #{attention_forward.3} parent=5 // pred_check_branch
        %128 = sbr.rel (%p125) target = $region12
      $region11: #{attention_forward.3} parent=5 // pred_region
        %s129 = ssub.s32 %s12, 1
        // Predicated region
        $region13: #{attention_forward.3} parent=11 // pred_check
          %p130 = pneg %p59
        $region14: #{attention_forward.3} parent=11 // pred_check_branch
          %132 = sbr.rel (%p130) target = $region16
        $region15: #{attention_forward.3} parent=11 // pred_region
          %s133 = smul.u32 32, %s22
          %s134 = smul.u32 2, %s24
          %s136 = ssub.s32 8192, 8192
          %137 = vsyncadd [#allocation4], %s136
          %s138 = smul.addr %s133, 2
          %s139 = sadd.s32 %s134, %s138
          %s140 = smul.addr %s139, 128
          %s141 = scalar_lea.hbm %s0, %s140
          %s142 = sshll.u32 [#allocation3], 4
          %s143 = int_to_ptr.vmem [resolvable:$true] %s142
          %148 = dma.hbm_to_vmem [thread:$0]  %s141, 8192, %s143, [#allocation4], 256, 256, 16
        $region16: #{attention_forward.3} parent=11 // pred_fallthru
          _
      $region12: #{attention_forward.3} parent=5 // pred_fallthru
        _
      %p149 = scmp.lt.s32.totalorder %s12, 2
      // Predicated region
      $region17: #{attention_forward.3} parent=5 // pred_check
        %p150 = pneg %p149
      $region18: #{attention_forward.3} parent=5 // pred_check_branch
        %152 = sbr.rel (%p150) target = $region20
      $region19: #{attention_forward.3} parent=5 // pred_region
        // Predicated region
        $region21: #{attention_forward.3} parent=19 // pred_check
          %p153 = pneg %p81
        $region22: #{attention_forward.3} parent=19 // pred_check_branch
          %155 = sbr.rel (%p153) target = $region24
        $region23: #{attention_forward.3} parent=19 // pred_region
          %s156 = sand.u32 %s71, 1
          %s157 = scalar_lea.sflag [#allocation6], %s156
          %s158 = sand.u32 %s71, 1
          %s159 = smul.addr %s158, 768
          %s160 = scalar_lea.vmem [#allocation5], %s159
          %s161 = smul.u32 32, %s21
          %s162 = smul.u32 3, %s20
          %s164 = ssub.s32 12288, 12288
          %165 = vsyncadd %s157, %s164
          %s166 = smul.addr %s161, 6
          %s167 = sadd.s32 %s162, %s166
          %s168 = smul.addr %s167, 128
          %s169 = scalar_lea.hbm %s1, %s168
          %s170 = sshll.u32 %s160, 4
          %s171 = int_to_ptr.vmem [resolvable:$true] %s170
          %176 = dma.hbm_to_vmem [thread:$0]  %s169, 12288, %s171, %s157, 768, 384, 24
        $region24: #{attention_forward.3} parent=19 // pred_fallthru
          _
      $region20: #{attention_forward.3} parent=5 // pred_fallthru
        _
      %p177 = scmp.le.s32.totalorder 1, %s12
      %p178 = scmp.lt.s32.totalorder %s12, 3
      %p179 = pnand %p177, %p178
      %p180 = pneg %p179
      // Predicated region
      $region25: #{attention_forward.3} parent=5 // pred_check
        _
      $region26: #{attention_forward.3} parent=5 // pred_check_branch
        %182 = sbr.rel (%p179) target = $region28
      $region27: #{attention_forward.3} parent=5 // pred_region
        %s183 = ssub.s32 %s12, 1
        // Predicated region
        $region29: #{attention_forward.3} parent=27 // pred_check
          %p184 = pneg %p59
        $region30: #{attention_forward.3} parent=27 // pred_check_branch
          %186 = sbr.rel (%p184) target = $region32
        $region31: #{attention_forward.3} parent=27 // pred_region
          %187 = dma.done [#allocation4], 8192
        $region32: #{attention_forward.3} parent=27 // pred_fallthru
          _
        %s188 = sand.u32 %s74, 1
        %s189 = scalar_lea.sflag [#allocation6], %s188
        %s190 = sand.u32 %s74, 1
        %s191 = smul.addr %s190, 768
        %s192 = scalar_lea.vmem [#allocation5], %s191
        // Predicated region
        $region33: #{attention_forward.3} parent=27 // pred_check
          %p193 = pneg %p87
        $region34: #{attention_forward.3} parent=27 // pred_check_branch
          %195 = sbr.rel (%p193) target = $region36
        $region35: #{attention_forward.3} parent=27 // pred_region
          %196 = dma.done %s189, 12288
        $region36: #{attention_forward.3} parent=27 // pred_fallthru
          _
        %p197 = pneg %p59
        %p198 = pneg %p56
        %s199 = sand.u32 %s74, 1
        %s200 = scalar_lea.sflag [#allocation6], %s199
        %s201 = sand.u32 %s74, 1
        %s202 = smul.addr %s201, 768
        %s203 = scalar_lea.vmem [#allocation5], %s202
        %p204 = pneg %p87
        %p205 = pneg %p84
        %p206 = pneg %p115
        %p207 = pneg %p112
        %s208 = sand.u32 %s102, 1
        %s209 = sand.u32 %s102, 1
        %s210 = smul.addr %s209, 768
        %s211 = scalar_lea.vmem [#allocation7], %s210
        %s212 = smul.u32 32, %s22
        %s213 = smul.u32 2, %s24
        %s214 = smul.u32 32, %s24
        %s215 = smul.u32 3, %s23
        %s216 = smul.u32 32, %s22
        %s217 = smul.u32 3, %s23
        %p218 = scmp.eq.s32.totalorder %s24, 0
        // Predicated region
        $region37: #{attention_forward.3} parent=27 // pred_check
          %p219 = pneg %p218
        $region38: #{attention_forward.3} parent=27 // pred_check_branch
          %221 = sbr.rel (%p219) target = $region40
        $region39: #{attention_forward.3} parent=27 // pred_region
          %222 = vst [vmem:[#allocation2] sm:$0xff] 0.0
          %223 = vst [vmem:[#allocation2 + $0x8] sm:$0xff] 0.0
          %224 = vst [vmem:[#allocation2 + $0x10] sm:$0xff] 0.0
          %225 = vst [vmem:[#allocation2 + $0x18] sm:$0xff] 0.0
          %226 = vst [vmem:[#allocation2 + $0x20] sm:$0xff] 0.0
          %227 = vst [vmem:[#allocation2 + $0x28] sm:$0xff] 0.0
          %228 = vst [vmem:[#allocation2 + $0x30] sm:$0xff] 0.0
          %229 = vst [vmem:[#allocation2 + $0x38] sm:$0xff] 0.0
          %230 = vst [vmem:[#allocation2 + $0x40] sm:$0xff] 0.0
          %231 = vst [vmem:[#allocation2 + $0x48] sm:$0xff] 0.0
          %232 = vst [vmem:[#allocation2 + $0x50] sm:$0xff] 0.0
          %233 = vst [vmem:[#allocation2 + $0x58] sm:$0xff] 0.0
          %234 = vst [vmem:[#allocation2 + $0x60] sm:$0xff] 0.0
          %235 = vst [vmem:[#allocation2 + $0x68] sm:$0xff] 0.0
          %236 = vst [vmem:[#allocation2 + $0x70] sm:$0xff] 0.0
          %237 = vst [vmem:[#allocation2 + $0x78] sm:$0xff] 0.0
          %238 = vst [vmem:[#allocation2 + $0x80] sm:$0xff] 0.0
          %239 = vst [vmem:[#allocation2 + $0x88] sm:$0xff] 0.0
          %240 = vst [vmem:[#allocation2 + $0x90] sm:$0xff] 0.0
          %241 = vst [vmem:[#allocation2 + $0x98] sm:$0xff] 0.0
          %242 = vst [vmem:[#allocation2 + $0xa0] sm:$0xff] 0.0
          %243 = vst [vmem:[#allocation2 + $0xa8] sm:$0xff] 0.0
          %244 = vst [vmem:[#allocation2 + $0xb0] sm:$0xff] 0.0
          %245 = vst [vmem:[#allocation2 + $0xb8] sm:$0xff] 0.0
          %246 = vst [vmem:[#allocation2 + $0xc0] sm:$0xff] 0.0
          %247 = vst [vmem:[#allocation2 + $0xc8] sm:$0xff] 0.0
          %248 = vst [vmem:[#allocation2 + $0xd0] sm:$0xff] 0.0
          %249 = vst [vmem:[#allocation2 + $0xd8] sm:$0xff] 0.0
          %250 = vst [vmem:[#allocation2 + $0xe0] sm:$0xff] 0.0
          %251 = vst [vmem:[#allocation2 + $0xe8] sm:$0xff] 0.0
          %252 = vst [vmem:[#allocation2 + $0xf0] sm:$0xff] 0.0
          %253 = vst [vmem:[#allocation2 + $0xf8] sm:$0xff] 0.0
          %254 = vst [vmem:[#allocation2 + $0x100] sm:$0xff] 0.0
          %255 = vst [vmem:[#allocation2 + $0x108] sm:$0xff] 0.0
          %256 = vst [vmem:[#allocation2 + $0x110] sm:$0xff] 0.0
          %257 = vst [vmem:[#allocation2 + $0x118] sm:$0xff] 0.0
          %258 = vst [vmem:[#allocation2 + $0x120] sm:$0xff] 0.0
          %259 = vst [vmem:[#allocation2 + $0x128] sm:$0xff] 0.0
          %260 = vst [vmem:[#allocation2 + $0x130] sm:$0xff] 0.0
          %261 = vst [vmem:[#allocation2 + $0x138] sm:$0xff] 0.0
          %262 = vst [vmem:[#allocation2 + $0x140] sm:$0xff] 0.0
          %263 = vst [vmem:[#allocation2 + $0x148] sm:$0xff] 0.0
          %264 = vst [vmem:[#allocation2 + $0x150] sm:$0xff] 0.0
          %265 = vst [vmem:[#allocation2 + $0x158] sm:$0xff] 0.0
          %266 = vst [vmem:[#allocation2 + $0x160] sm:$0xff] 0.0
          %267 = vst [vmem:[#allocation2 + $0x168] sm:$0xff] 0.0
          %268 = vst [vmem:[#allocation2 + $0x170] sm:$0xff] 0.0
          %269 = vst [vmem:[#allocation2 + $0x178] sm:$0xff] 0.0
          %270 = vst [vmem:[#allocation2 + $0x180] sm:$0xff] 0.0
          %271 = vst [vmem:[#allocation2 + $0x188] sm:$0xff] 0.0
          %272 = vst [vmem:[#allocation2 + $0x190] sm:$0xff] 0.0
          %273 = vst [vmem:[#allocation2 + $0x198] sm:$0xff] 0.0
          %274 = vst [vmem:[#allocation2 + $0x1a0] sm:$0xff] 0.0
          %275 = vst [vmem:[#allocation2 + $0x1a8] sm:$0xff] 0.0
          %276 = vst [vmem:[#allocation2 + $0x1b0] sm:$0xff] 0.0
          %277 = vst [vmem:[#allocation2 + $0x1b8] sm:$0xff] 0.0
          %278 = vst [vmem:[#allocation2 + $0x1c0] sm:$0xff] 0.0
          %279 = vst [vmem:[#allocation2 + $0x1c8] sm:$0xff] 0.0
          %280 = vst [vmem:[#allocation2 + $0x1d0] sm:$0xff] 0.0
          %281 = vst [vmem:[#allocation2 + $0x1d8] sm:$0xff] 0.0
          %282 = vst [vmem:[#allocation2 + $0x1e0] sm:$0xff] 0.0
          %283 = vst [vmem:[#allocation2 + $0x1e8] sm:$0xff] 0.0
          %284 = vst [vmem:[#allocation2 + $0x1f0] sm:$0xff] 0.0
          %285 = vst [vmem:[#allocation2 + $0x1f8] sm:$0xff] 0.0
          %286 = vst [vmem:[#allocation2 + $0x200] sm:$0xff] 0.0
          %287 = vst [vmem:[#allocation2 + $0x208] sm:$0xff] 0.0
          %288 = vst [vmem:[#allocation2 + $0x210] sm:$0xff] 0.0
          %289 = vst [vmem:[#allocation2 + $0x218] sm:$0xff] 0.0
          %290 = vst [vmem:[#allocation2 + $0x220] sm:$0xff] 0.0
          %291 = vst [vmem:[#allocation2 + $0x228] sm:$0xff] 0.0
          %292 = vst [vmem:[#allocation2 + $0x230] sm:$0xff] 0.0
          %293 = vst [vmem:[#allocation2 + $0x238] sm:$0xff] 0.0
          %294 = vst [vmem:[#allocation2 + $0x240] sm:$0xff] 0.0
          %295 = vst [vmem:[#allocation2 + $0x248] sm:$0xff] 0.0
          %296 = vst [vmem:[#allocation2 + $0x250] sm:$0xff] 0.0
          %297 = vst [vmem:[#allocation2 + $0x258] sm:$0xff] 0.0
          %298 = vst [vmem:[#allocation2 + $0x260] sm:$0xff] 0.0
          %299 = vst [vmem:[#allocation2 + $0x268] sm:$0xff] 0.0
          %300 = vst [vmem:[#allocation2 + $0x270] sm:$0xff] 0.0
          %301 = vst [vmem:[#allocation2 + $0x278] sm:$0xff] 0.0
          %302 = vst [vmem:[#allocation2 + $0x280] sm:$0xff] 0.0
          %303 = vst [vmem:[#allocation2 + $0x288] sm:$0xff] 0.0
          %304 = vst [vmem:[#allocation2 + $0x290] sm:$0xff] 0.0
          %305 = vst [vmem:[#allocation2 + $0x298] sm:$0xff] 0.0
          %306 = vst [vmem:[#allocation2 + $0x2a0] sm:$0xff] 0.0
          %307 = vst [vmem:[#allocation2 + $0x2a8] sm:$0xff] 0.0
          %308 = vst [vmem:[#allocation2 + $0x2b0] sm:$0xff] 0.0
          %309 = vst [vmem:[#allocation2 + $0x2b8] sm:$0xff] 0.0
          %310 = vst [vmem:[#allocation2 + $0x2c0] sm:$0xff] 0.0
          %311 = vst [vmem:[#allocation2 + $0x2c8] sm:$0xff] 0.0
          %312 = vst [vmem:[#allocation2 + $0x2d0] sm:$0xff] 0.0
          %313 = vst [vmem:[#allocation2 + $0x2d8] sm:$0xff] 0.0
          %314 = vst [vmem:[#allocation2 + $0x2e0] sm:$0xff] 0.0
          %315 = vst [vmem:[#allocation2 + $0x2e8] sm:$0xff] 0.0
          %316 = vst [vmem:[#allocation2 + $0x2f0] sm:$0xff] 0.0
          %317 = vst [vmem:[#allocation2 + $0x2f8] sm:$0xff] 0.0
        $region40: #{attention_forward.3} parent=27 // pred_fallthru
          _
        %v318 = vld [vmem:[#allocation2] sm:$0xff]
        %v319 = vld [vmem:[#allocation2 + $0x8] sm:$0xff]
        %v320 = vld [vmem:[#allocation2 + $0x10] sm:$0xff]
        %v321 = vld [vmem:[#allocation2 + $0x18] sm:$0xff]
        %v322 = vld [vmem:[#allocation2 + $0x20] sm:$0xff]
        %v323 = vld [vmem:[#allocation2 + $0x28] sm:$0xff]
        %v324 = vld [vmem:[#allocation2 + $0x30] sm:$0xff]
        %v325 = vld [vmem:[#allocation2 + $0x38] sm:$0xff]
        %v326 = vld [vmem:[#allocation2 + $0x40] sm:$0xff]
        %v327 = vld [vmem:[#allocation2 + $0x48] sm:$0xff]
        %v328 = vld [vmem:[#allocation2 + $0x50] sm:$0xff]
        %v329 = vld [vmem:[#allocation2 + $0x58] sm:$0xff]
        %v330 = vld [vmem:[#allocation2 + $0x60] sm:$0xff]
        %v331 = vld [vmem:[#allocation2 + $0x68] sm:$0xff]
        %v332 = vld [vmem:[#allocation2 + $0x70] sm:$0xff]
        %v333 = vld [vmem:[#allocation2 + $0x78] sm:$0xff]
        %v334 = vld [vmem:[#allocation2 + $0x80] sm:$0xff]
        %v335 = vld [vmem:[#allocation2 + $0x88] sm:$0xff]
        %v336 = vld [vmem:[#allocation2 + $0x90] sm:$0xff]
        %v337 = vld [vmem:[#allocation2 + $0x98] sm:$0xff]
        %v338 = vld [vmem:[#allocation2 + $0xa0] sm:$0xff]
        %v339 = vld [vmem:[#allocation2 + $0xa8] sm:$0xff]
        %v340 = vld [vmem:[#allocation2 + $0xb0] sm:$0xff]
        %v341 = vld [vmem:[#allocation2 + $0xb8] sm:$0xff]
        %v342 = vld [vmem:[#allocation2 + $0xc0] sm:$0xff]
        %v343 = vld [vmem:[#allocation2 + $0xc8] sm:$0xff]
        %v344 = vld [vmem:[#allocation2 + $0xd0] sm:$0xff]
        %v345 = vld [vmem:[#allocation2 + $0xd8] sm:$0xff]
        %v346 = vld [vmem:[#allocation2 + $0xe0] sm:$0xff]
        %v347 = vld [vmem:[#allocation2 + $0xe8] sm:$0xff]
        %v348 = vld [vmem:[#allocation2 + $0xf0] sm:$0xff]
        %v349 = vld [vmem:[#allocation2 + $0xf8] sm:$0xff]
        %v350 = vld [vmem:[#allocation2 + $0x100] sm:$0xff]
        %v351 = vld [vmem:[#allocation2 + $0x108] sm:$0xff]
        %v352 = vld [vmem:[#allocation2 + $0x110] sm:$0xff]
        %v353 = vld [vmem:[#allocation2 + $0x118] sm:$0xff]
        %v354 = vld [vmem:[#allocation2 + $0x120] sm:$0xff]
        %v355 = vld [vmem:[#allocation2 + $0x128] sm:$0xff]
        %v356 = vld [vmem:[#allocation2 + $0x130] sm:$0xff]
        %v357 = vld [vmem:[#allocation2 + $0x138] sm:$0xff]
        %v358 = vld [vmem:[#allocation2 + $0x140] sm:$0xff]
        %v359 = vld [vmem:[#allocation2 + $0x148] sm:$0xff]
        %v360 = vld [vmem:[#allocation2 + $0x150] sm:$0xff]
        %v361 = vld [vmem:[#allocation2 + $0x158] sm:$0xff]
        %v362 = vld [vmem:[#allocation2 + $0x160] sm:$0xff]
        %v363 = vld [vmem:[#allocation2 + $0x168] sm:$0xff]
        %v364 = vld [vmem:[#allocation2 + $0x170] sm:$0xff]
        %v365 = vld [vmem:[#allocation2 + $0x178] sm:$0xff]
        %v366 = vld [vmem:[#allocation2 + $0x180] sm:$0xff]
        %v367 = vld [vmem:[#allocation2 + $0x188] sm:$0xff]
        %v368 = vld [vmem:[#allocation2 + $0x190] sm:$0xff]
        %v369 = vld [vmem:[#allocation2 + $0x198] sm:$0xff]
        %v370 = vld [vmem:[#allocation2 + $0x1a0] sm:$0xff]
        %v371 = vld [vmem:[#allocation2 + $0x1a8] sm:$0xff]
        %v372 = vld [vmem:[#allocation2 + $0x1b0] sm:$0xff]
        %v373 = vld [vmem:[#allocation2 + $0x1b8] sm:$0xff]
        %v374 = vld [vmem:[#allocation2 + $0x1c0] sm:$0xff]
        %v375 = vld [vmem:[#allocation2 + $0x1c8] sm:$0xff]
        %v376 = vld [vmem:[#allocation2 + $0x1d0] sm:$0xff]
        %v377 = vld [vmem:[#allocation2 + $0x1d8] sm:$0xff]
        %v378 = vld [vmem:[#allocation2 + $0x1e0] sm:$0xff]
        %v379 = vld [vmem:[#allocation2 + $0x1e8] sm:$0xff]
        %v380 = vld [vmem:[#allocation2 + $0x1f0] sm:$0xff]
        %v381 = vld [vmem:[#allocation2 + $0x1f8] sm:$0xff]
        %v382 = vld [vmem:[#allocation2 + $0x200] sm:$0xff]
        %v383 = vld [vmem:[#allocation2 + $0x208] sm:$0xff]
        %v384 = vld [vmem:[#allocation2 + $0x210] sm:$0xff]
        %v385 = vld [vmem:[#allocation2 + $0x218] sm:$0xff]
        %v386 = vld [vmem:[#allocation2 + $0x220] sm:$0xff]
        %v387 = vld [vmem:[#allocation2 + $0x228] sm:$0xff]
        %v388 = vld [vmem:[#allocation2 + $0x230] sm:$0xff]
        %v389 = vld [vmem:[#allocation2 + $0x238] sm:$0xff]
        %v390 = vld [vmem:[#allocation2 + $0x240] sm:$0xff]
        %v391 = vld [vmem:[#allocation2 + $0x248] sm:$0xff]
        %v392 = vld [vmem:[#allocation2 + $0x250] sm:$0xff]
        %v393 = vld [vmem:[#allocation2 + $0x258] sm:$0xff]
        %v394 = vld [vmem:[#allocation2 + $0x260] sm:$0xff]
        %v395 = vld [vmem:[#allocation2 + $0x268] sm:$0xff]
        %v396 = vld [vmem:[#allocation2 + $0x270] sm:$0xff]
        %v397 = vld [vmem:[#allocation2 + $0x278] sm:$0xff]
        %v398 = vld [vmem:[#allocation2 + $0x280] sm:$0xff]
        %v399 = vld [vmem:[#allocation2 + $0x288] sm:$0xff]
        %v400 = vld [vmem:[#allocation2 + $0x290] sm:$0xff]
        %v401 = vld [vmem:[#allocation2 + $0x298] sm:$0xff]
        %v402 = vld [vmem:[#allocation2 + $0x2a0] sm:$0xff]
        %v403 = vld [vmem:[#allocation2 + $0x2a8] sm:$0xff]
        %v404 = vld [vmem:[#allocation2 + $0x2b0] sm:$0xff]
        %v405 = vld [vmem:[#allocation2 + $0x2b8] sm:$0xff]
        %v406 = vld [vmem:[#allocation2 + $0x2c0] sm:$0xff]
        %v407 = vld [vmem:[#allocation2 + $0x2c8] sm:$0xff]
        %v408 = vld [vmem:[#allocation2 + $0x2d0] sm:$0xff]
        %v409 = vld [vmem:[#allocation2 + $0x2d8] sm:$0xff]
        %v410 = vld [vmem:[#allocation2 + $0x2e0] sm:$0xff]
        %v411 = vld [vmem:[#allocation2 + $0x2e8] sm:$0xff]
        %v412 = vld [vmem:[#allocation2 + $0x2f0] sm:$0xff]
        %v413 = vld [vmem:[#allocation2 + $0x2f8] sm:$0xff]
        %v414 = vld [vmem:[#allocation3] sm:$0xff]
        %v415 = vld [vmem:[#allocation3 + $0x8] sm:$0xff]
        %v416 = vld [vmem:[#allocation3 + $0x10] sm:$0xff]
        %v417 = vld [vmem:[#allocation3 + $0x18] sm:$0xff]
        %v418 = vld [vmem:[#allocation3 + $0x20] sm:$0xff]
        %v419 = vld [vmem:[#allocation3 + $0x28] sm:$0xff]
        %v420 = vld [vmem:[#allocation3 + $0x30] sm:$0xff]
        %v421 = vld [vmem:[#allocation3 + $0x38] sm:$0xff]
        %v422 = vld [vmem:[#allocation3 + $0x40] sm:$0xff]
        %v423 = vld [vmem:[#allocation3 + $0x48] sm:$0xff]
        %v424 = vld [vmem:[#allocation3 + $0x50] sm:$0xff]
        %v425 = vld [vmem:[#allocation3 + $0x58] sm:$0xff]
        %v426 = vld [vmem:[#allocation3 + $0x60] sm:$0xff]
        %v427 = vld [vmem:[#allocation3 + $0x68] sm:$0xff]
        %v428 = vld [vmem:[#allocation3 + $0x70] sm:$0xff]
        %v429 = vld [vmem:[#allocation3 + $0x78] sm:$0xff]
        %v430 = vld [vmem:[#allocation3 + $0x80] sm:$0xff]
        %v431 = vld [vmem:[#allocation3 + $0x88] sm:$0xff]
        %v432 = vld [vmem:[#allocation3 + $0x90] sm:$0xff]
        %v433 = vld [vmem:[#allocation3 + $0x98] sm:$0xff]
        %v434 = vld [vmem:[#allocation3 + $0xa0] sm:$0xff]
        %v435 = vld [vmem:[#allocation3 + $0xa8] sm:$0xff]
        %v436 = vld [vmem:[#allocation3 + $0xb0] sm:$0xff]
        %v437 = vld [vmem:[#allocation3 + $0xb8] sm:$0xff]
        %v438 = vld [vmem:[#allocation3 + $0xc0] sm:$0xff]
        %v439 = vld [vmem:[#allocation3 + $0xc8] sm:$0xff]
        %v440 = vld [vmem:[#allocation3 + $0xd0] sm:$0xff]
        %v441 = vld [vmem:[#allocation3 + $0xd8] sm:$0xff]
        %v442 = vld [vmem:[#allocation3 + $0xe0] sm:$0xff]
        %v443 = vld [vmem:[#allocation3 + $0xe8] sm:$0xff]
        %v444 = vld [vmem:[#allocation3 + $0xf0] sm:$0xff]
        %v445 = vld [vmem:[#allocation3 + $0xf8] sm:$0xff]
        %v446 = vld [vmem:[#allocation3 + $0x100] sm:$0xff]
        %v447 = vld [vmem:[#allocation3 + $0x108] sm:$0xff]
        %v448 = vld [vmem:[#allocation3 + $0x110] sm:$0xff]
        %v449 = vld [vmem:[#allocation3 + $0x118] sm:$0xff]
        %v450 = vld [vmem:[#allocation3 + $0x120] sm:$0xff]
        %v451 = vld [vmem:[#allocation3 + $0x128] sm:$0xff]
        %v452 = vld [vmem:[#allocation3 + $0x130] sm:$0xff]
        %v453 = vld [vmem:[#allocation3 + $0x138] sm:$0xff]
        %v454 = vld [vmem:[#allocation3 + $0x140] sm:$0xff]
        %v455 = vld [vmem:[#allocation3 + $0x148] sm:$0xff]
        %v456 = vld [vmem:[#allocation3 + $0x150] sm:$0xff]
        %v457 = vld [vmem:[#allocation3 + $0x158] sm:$0xff]
        %v458 = vld [vmem:[#allocation3 + $0x160] sm:$0xff]
        %v459 = vld [vmem:[#allocation3 + $0x168] sm:$0xff]
        %v460 = vld [vmem:[#allocation3 + $0x170] sm:$0xff]
        %v461 = vld [vmem:[#allocation3 + $0x178] sm:$0xff]
        %v462 = vld [vmem:[#allocation3 + $0x180] sm:$0xff]
        %v463 = vld [vmem:[#allocation3 + $0x188] sm:$0xff]
        %v464 = vld [vmem:[#allocation3 + $0x190] sm:$0xff]
        %v465 = vld [vmem:[#allocation3 + $0x198] sm:$0xff]
        %v466 = vld [vmem:[#allocation3 + $0x1a0] sm:$0xff]
        %v467 = vld [vmem:[#allocation3 + $0x1a8] sm:$0xff]
        %v468 = vld [vmem:[#allocation3 + $0x1b0] sm:$0xff]
        %v469 = vld [vmem:[#allocation3 + $0x1b8] sm:$0xff]
        %v470 = vld [vmem:[#allocation3 + $0x1c0] sm:$0xff]
        %v471 = vld [vmem:[#allocation3 + $0x1c8] sm:$0xff]
        %v472 = vld [vmem:[#allocation3 + $0x1d0] sm:$0xff]
        %v473 = vld [vmem:[#allocation3 + $0x1d8] sm:$0xff]
        %v474 = vld [vmem:[#allocation3 + $0x1e0] sm:$0xff]
        %v475 = vld [vmem:[#allocation3 + $0x1e8] sm:$0xff]
        %v476 = vld [vmem:[#allocation3 + $0x1f0] sm:$0xff]
        %v477 = vld [vmem:[#allocation3 + $0x1f8] sm:$0xff]
        %v478 = vld [vmem:[%s192] sm:$0xff]
        %v479 = vld [vmem:[%s192 + $0x8] sm:$0xff]
        %v480 = vld [vmem:[%s192 + $0x10] sm:$0xff]
        %v481 = vld [vmem:[%s192 + $0x18] sm:$0xff]
        %v482 = vld [vmem:[%s192 + $0x20] sm:$0xff]
        %v483 = vld [vmem:[%s192 + $0x28] sm:$0xff]
        %v484 = vld [vmem:[%s192 + $0x30] sm:$0xff]
        %v485 = vld [vmem:[%s192 + $0x38] sm:$0xff]
        %v486 = vld [vmem:[%s192 + $0x40] sm:$0xff]
        %v487 = vld [vmem:[%s192 + $0x48] sm:$0xff]
        %v488 = vld [vmem:[%s192 + $0x50] sm:$0xff]
        %v489 = vld [vmem:[%s192 + $0x58] sm:$0xff]
        %v490 = vld [vmem:[%s192 + $0x60] sm:$0xff]
        %v491 = vld [vmem:[%s192 + $0x68] sm:$0xff]
        %v492 = vld [vmem:[%s192 + $0x70] sm:$0xff]
        %v493 = vld [vmem:[%s192 + $0x78] sm:$0xff]
        %v494 = vld [vmem:[%s192 + $0x80] sm:$0xff]
        %v495 = vld [vmem:[%s192 + $0x88] sm:$0xff]
        %v496 = vld [vmem:[%s192 + $0x90] sm:$0xff]
        %v497 = vld [vmem:[%s192 + $0x98] sm:$0xff]
        %v498 = vld [vmem:[%s192 + $0xa0] sm:$0xff]
        %v499 = vld [vmem:[%s192 + $0xa8] sm:$0xff]
        %v500 = vld [vmem:[%s192 + $0xb0] sm:$0xff]
        %v501 = vld [vmem:[%s192 + $0xb8] sm:$0xff]
        %v502 = vld [vmem:[%s192 + $0xc0] sm:$0xff]
        %v503 = vld [vmem:[%s192 + $0xc8] sm:$0xff]
        %v504 = vld [vmem:[%s192 + $0xd0] sm:$0xff]
        %v505 = vld [vmem:[%s192 + $0xd8] sm:$0xff]
        %v506 = vld [vmem:[%s192 + $0xe0] sm:$0xff]
        %v507 = vld [vmem:[%s192 + $0xe8] sm:$0xff]
        %v508 = vld [vmem:[%s192 + $0xf0] sm:$0xff]
        %v509 = vld [vmem:[%s192 + $0xf8] sm:$0xff]
        %v510 = vld [vmem:[%s192 + $0x100] sm:$0xff]
        %v511 = vld [vmem:[%s192 + $0x108] sm:$0xff]
        %v512 = vld [vmem:[%s192 + $0x110] sm:$0xff]
        %v513 = vld [vmem:[%s192 + $0x118] sm:$0xff]
        %v514 = vld [vmem:[%s192 + $0x120] sm:$0xff]
        %v515 = vld [vmem:[%s192 + $0x128] sm:$0xff]
        %v516 = vld [vmem:[%s192 + $0x130] sm:$0xff]
        %v517 = vld [vmem:[%s192 + $0x138] sm:$0xff]
        %v518 = vld [vmem:[%s192 + $0x140] sm:$0xff]
        %v519 = vld [vmem:[%s192 + $0x148] sm:$0xff]
        %v520 = vld [vmem:[%s192 + $0x150] sm:$0xff]
        %v521 = vld [vmem:[%s192 + $0x158] sm:$0xff]
        %v522 = vld [vmem:[%s192 + $0x160] sm:$0xff]
        %v523 = vld [vmem:[%s192 + $0x168] sm:$0xff]
        %v524 = vld [vmem:[%s192 + $0x170] sm:$0xff]
        %v525 = vld [vmem:[%s192 + $0x178] sm:$0xff]
        %v526 = vld [vmem:[%s192 + $0x180] sm:$0xff]
        %v527 = vld [vmem:[%s192 + $0x188] sm:$0xff]
        %v528 = vld [vmem:[%s192 + $0x190] sm:$0xff]
        %v529 = vld [vmem:[%s192 + $0x198] sm:$0xff]
        %v530 = vld [vmem:[%s192 + $0x1a0] sm:$0xff]
        %v531 = vld [vmem:[%s192 + $0x1a8] sm:$0xff]
        %v532 = vld [vmem:[%s192 + $0x1b0] sm:$0xff]
        %v533 = vld [vmem:[%s192 + $0x1b8] sm:$0xff]
        %v534 = vld [vmem:[%s192 + $0x1c0] sm:$0xff]
        %v535 = vld [vmem:[%s192 + $0x1c8] sm:$0xff]
        %v536 = vld [vmem:[%s192 + $0x1d0] sm:$0xff]
        %v537 = vld [vmem:[%s192 + $0x1d8] sm:$0xff]
        %v538 = vld [vmem:[%s192 + $0x1e0] sm:$0xff]
        %v539 = vld [vmem:[%s192 + $0x1e8] sm:$0xff]
        %v540 = vld [vmem:[%s192 + $0x1f0] sm:$0xff]
        %v541 = vld [vmem:[%s192 + $0x1f8] sm:$0xff]
        %v542 = vld [vmem:[%s192 + $0x200] sm:$0xff]
        %v543 = vld [vmem:[%s192 + $0x208] sm:$0xff]
        %v544 = vld [vmem:[%s192 + $0x210] sm:$0xff]
        %v545 = vld [vmem:[%s192 + $0x218] sm:$0xff]
        %v546 = vld [vmem:[%s192 + $0x220] sm:$0xff]
        %v547 = vld [vmem:[%s192 + $0x228] sm:$0xff]
        %v548 = vld [vmem:[%s192 + $0x230] sm:$0xff]
        %v549 = vld [vmem:[%s192 + $0x238] sm:$0xff]
        %v550 = vld [vmem:[%s192 + $0x240] sm:$0xff]
        %v551 = vld [vmem:[%s192 + $0x248] sm:$0xff]
        %v552 = vld [vmem:[%s192 + $0x250] sm:$0xff]
        %v553 = vld [vmem:[%s192 + $0x258] sm:$0xff]
        %v554 = vld [vmem:[%s192 + $0x260] sm:$0xff]
        %v555 = vld [vmem:[%s192 + $0x268] sm:$0xff]
        %v556 = vld [vmem:[%s192 + $0x270] sm:$0xff]
        %v557 = vld [vmem:[%s192 + $0x278] sm:$0xff]
        %v558 = vld [vmem:[%s192 + $0x280] sm:$0xff]
        %v559 = vld [vmem:[%s192 + $0x288] sm:$0xff]
        %v560 = vld [vmem:[%s192 + $0x290] sm:$0xff]
        %v561 = vld [vmem:[%s192 + $0x298] sm:$0xff]
        %v562 = vld [vmem:[%s192 + $0x2a0] sm:$0xff]
        %v563 = vld [vmem:[%s192 + $0x2a8] sm:$0xff]
        %v564 = vld [vmem:[%s192 + $0x2b0] sm:$0xff]
        %v565 = vld [vmem:[%s192 + $0x2b8] sm:$0xff]
        %v566 = vld [vmem:[%s192 + $0x2c0] sm:$0xff]
        %v567 = vld [vmem:[%s192 + $0x2c8] sm:$0xff]
        %v568 = vld [vmem:[%s192 + $0x2d0] sm:$0xff]
        %v569 = vld [vmem:[%s192 + $0x2d8] sm:$0xff]
        %v570 = vld [vmem:[%s192 + $0x2e0] sm:$0xff]
        %v571 = vld [vmem:[%s192 + $0x2e8] sm:$0xff]
        %v572 = vld [vmem:[%s192 + $0x2f0] sm:$0xff]
        %v573 = vld [vmem:[%s192 + $0x2f8] sm:$0xff]
        %574 = vmatprep.subr.mxu0 %v479
        %575 = vmatpush1.msra.mxu0 %v478
        %576 = vmatprep.subr.mxu0 %v482
        %577 = vmatpush1.msra.mxu0 %v481
        %578 = vmatprep.subr.mxu0 %v485
        %579 = vmatpush1.msra.mxu0 %v484
        %580 = vmatprep.subr.mxu0 %v488
        %581 = vmatpush1.msra.mxu0 %v487
        %582 = vmatprep.subr.mxu0 %v491
        %583 = vmatpush1.msra.mxu0 %v490
        %584 = vmatprep.subr.mxu0 %v494
        %585 = vmatpush1.msra.mxu0 %v493
        %586 = vmatprep.subr.mxu0 %v497
        %587 = vmatpush1.msra.mxu0 %v496
        %588 = vmatprep.subr.mxu0 %v500
        %589 = vmatpush1.msra.mxu0 %v499
        %590 = vmatprep.subr.mxu0 %v503
        %591 = vmatpush1.msra.mxu0 %v502
        %592 = vmatprep.subr.mxu0 %v506
        %593 = vmatpush1.msra.mxu0 %v505
        %594 = vmatprep.subr.mxu0 %v509
        %595 = vmatpush1.msra.mxu0 %v508
        %596 = vmatprep.subr.mxu0 %v512
        %597 = vmatpush1.msra.mxu0 %v511
        %598 = vmatprep.subr.mxu0 %v515
        %599 = vmatpush1.msra.mxu0 %v514
        %600 = vmatprep.subr.mxu0 %v518
        %601 = vmatpush1.msra.mxu0 %v517
        %602 = vmatprep.subr.mxu0 %v521
        %603 = vmatpush1.msra.mxu0 %v520
        %604 = vmatprep.subr.mxu0 %v524
        %605 = vmatpush1.msra.mxu0 %v523
        %606 = vmatprep.subr.mxu0 %v527
        %607 = vmatpush1.msra.mxu0 %v526
        %608 = vmatprep.subr.mxu0 %v530
        %609 = vmatpush1.msra.mxu0 %v529
        %610 = vmatprep.subr.mxu0 %v533
        %611 = vmatpush1.msra.mxu0 %v532
        %612 = vmatprep.subr.mxu0 %v536
        %613 = vmatpush1.msra.mxu0 %v535
        %614 = vmatprep.subr.mxu0 %v539
        %615 = vmatpush1.msra.mxu0 %v538
        %616 = vmatprep.subr.mxu0 %v542
        %617 = vmatpush1.msra.mxu0 %v541
        %618 = vmatprep.subr.mxu0 %v545
        %619 = vmatpush1.msra.mxu0 %v544
        %620 = vmatprep.subr.mxu0 %v548
        %621 = vmatpush1.msra.mxu0 %v547
        %622 = vmatprep.subr.mxu0 %v551
        %623 = vmatpush1.msra.mxu0 %v550
        %624 = vmatprep.subr.mxu0 %v554
        %625 = vmatpush1.msra.mxu0 %v553
        %626 = vmatprep.subr.mxu0 %v557
        %627 = vmatpush1.msra.mxu0 %v556
        %628 = vmatprep.subr.mxu0 %v560
        %629 = vmatpush1.msra.mxu0 %v559
        %630 = vmatprep.subr.mxu0 %v563
        %631 = vmatpush1.msra.mxu0 %v562
        %632 = vmatprep.subr.mxu0 %v566
        %633 = vmatpush1.msra.mxu0 %v565
        %634 = vmatprep.subr.mxu0 %v569
        %635 = vmatpush1.msra.mxu0 %v568
        %636 = vmatprep.subr.mxu0 %v572
        %637 = vmatpush1.msra.mxu0 %v571
        %638 = vmatprep.mubr.f32.mxu0 %v415
        %639 = vmatmul.mubr.f32.gmra.mrb[0].mxu0 %v414
        %v640 = vpop.f32.mrb[0].mxu0
        %v641 = vadd.f32 0.0, %v640
        %v642 = vpop.f32.mrb[0].mxu0
        %v643 = vadd.f32 0.0, %v642
        %644 = vmatprep.mubr.f32.mxu0 %v417
        %645 = vmatmul.mubr.f32.gmra.mrb[0].mxu0 %v416
        %v646 = vpop.f32.mrb[0].mxu0
        %v647 = vadd.f32 0.0, %v646
        %v648 = vpop.f32.mrb[0].mxu0
        %v649 = vadd.f32 0.0, %v648
        %650 = vmatprep.mubr.f32.mxu0 %v419
        %651 = vmatmul.mubr.f32.gmra.mrb[0].mxu0 %v418
        %v652 = vpop.f32.mrb[0].mxu0
        %v653 = vadd.f32 0.0, %v652
        %v654 = vpop.f32.mrb[0].mxu0
        %v655 = vadd.f32 0.0, %v654
        %656 = vmatprep.mubr.f32.mxu0 %v421
        %657 = vmatmul.mubr.f32.gmra.mrb[0].mxu0 %v420
        %v658 = vpop.f32.mrb[0].mxu0
        %v659 = vadd.f32 0.0, %v658
        %v660 = vpop.f32.mrb[0].mxu0
        %v661 = vadd.f32 0.0, %v660
        %662 = vmatprep.mubr.f32.mxu0 %v423
        %663 = vmatmul.mubr.f32.gmra.mrb[0].mxu0 %v422
        %v664 = vpop.f32.mrb[0].mxu0
        %v665 = vadd.f32 0.0, %v664
        %v666 = vpop.f32.mrb[0].mxu0
        %v667 = vadd.f32 0.0, %v666
        %668 = vmatprep.mubr.f32.mxu0 %v425
        %669 = vmatmul.mubr.f32.gmra.mrb[0].mxu0 %v424
        %v670 = vpop.f32.mrb[0].mxu0
        %v671 = vadd.f32 0.0, %v670
        %v672 = vpop.f32.mrb[0].mxu0
        %v673 = vadd.f32 0.0, %v672
        %674 = vmatprep.mubr.f32.mxu0 %v427
        %675 = vmatmul.mubr.f32.gmra.mrb[0].mxu0 %v426
        %v676 = vpop.f32.mrb[0].mxu0
        %v677 = vadd.f32 0.0, %v676
        %v678 = vpop.f32.mrb[0].mxu0
        %v679 = vadd.f32 0.0, %v678
        %680 = vmatprep.mubr.f32.mxu0 %v429
        %681 = vmatmul.mubr.f32.gmra.mrb[0].mxu0 %v428
        %v682 = vpop.f32.mrb[0].mxu0
        %v683 = vadd.f32 0.0, %v682
        %v684 = vpop.f32.mrb[0].mxu0
        %v685 = vadd.f32 0.0, %v684
        %686 = vmatprep.mubr.f32.mxu0 %v431
        %687 = vmatmul.mubr.f32.gmra.mrb[0].mxu0 %v430
        %v688 = vpop.f32.mrb[0].mxu0
        %v689 = vadd.f32 0.0, %v688
        %v690 = vpop.f32.mrb[0].mxu0
        %v691 = vadd.f32 0.0, %v690
        %692 = vmatprep.mubr.f32.mxu0 %v433
        %693 = vmatmul.mubr.f32.gmra.mrb[0].mxu0 %v432
        %v694 = vpop.f32.mrb[0].mxu0
        %v695 = vadd.f32 0.0, %v694
        %v696 = vpop.f32.mrb[0].mxu0
        %v697 = vadd.f32 0.0, %v696
        %698 = vmatprep.mubr.f32.mxu0 %v435
        %699 = vmatmul.mubr.f32.gmra.mrb[0].mxu0 %v434
        %v700 = vpop.f32.mrb[0].mxu0
        %v701 = vadd.f32 0.0, %v700
        %v702 = vpop.f32.mrb[0].mxu0
        %v703 = vadd.f32 0.0, %v702
        %704 = vmatprep.mubr.f32.mxu0 %v437
        %705 = vmatmul.mubr.f32.gmra.mrb[0].mxu0 %v436
        %v706 = vpop.f32.mrb[0].mxu0
        %v707 = vadd.f32 0.0, %v706
        %v708 = vpop.f32.mrb[0].mxu0
        %v709 = vadd.f32 0.0, %v708
        %710 = vmatprep.mubr.f32.mxu0 %v439
        %711 = vmatmul.mubr.f32.gmra.mrb[0].mxu0 %v438
        %v712 = vpop.f32.mrb[0].mxu0
        %v713 = vadd.f32 0.0, %v712
        %v714 = vpop.f32.mrb[0].mxu0
        %v715 = vadd.f32 0.0, %v714
        %716 = vmatprep.mubr.f32.mxu0 %v441
        %717 = vmatmul.mubr.f32.gmra.mrb[0].mxu0 %v440
        %v718 = vpop.f32.mrb[0].mxu0
        %v719 = vadd.f32 0.0, %v718
        %v720 = vpop.f32.mrb[0].mxu0
        %v721 = vadd.f32 0.0, %v720
        %722 = vmatprep.mubr.f32.mxu0 %v443
        %723 = vmatmul.mubr.f32.gmra.mrb[0].mxu0 %v442
        %v724 = vpop.f32.mrb[0].mxu0
        %v725 = vadd.f32 0.0, %v724
        %v726 = vpop.f32.mrb[0].mxu0
        %v727 = vadd.f32 0.0, %v726
        %728 = vmatprep.mubr.f32.mxu0 %v445
        %729 = vmatmul.mubr.f32.gmra.mrb[0].mxu0 %v444
        %v730 = vpop.f32.mrb[0].mxu0
        %v731 = vadd.f32 0.0, %v730
        %v732 = vpop.f32.mrb[0].mxu0
        %v733 = vadd.f32 0.0, %v732
        %734 = vmatprep.mubr.f32.mxu0 %v447
        %735 = vmatmul.mubr.f32.gmra.mrb[0].mxu0 %v446
        %v736 = vpop.f32.mrb[0].mxu0
        %v737 = vadd.f32 0.0, %v736
        %v738 = vpop.f32.mrb[0].mxu0
        %v739 = vadd.f32 0.0, %v738
        %740 = vmatprep.mubr.f32.mxu0 %v449
        %741 = vmatmul.mubr.f32.gmra.mrb[0].mxu0 %v448
        %v742 = vpop.f32.mrb[0].mxu0
        %v743 = vadd.f32 0.0, %v742
        %v744 = vpop.f32.mrb[0].mxu0
        %v745 = vadd.f32 0.0, %v744
        %746 = vmatprep.mubr.f32.mxu0 %v451
        %747 = vmatmul.mubr.f32.gmra.mrb[0].mxu0 %v450
        %v748 = vpop.f32.mrb[0].mxu0
        %v749 = vadd.f32 0.0, %v748
        %v750 = vpop.f32.mrb[0].mxu0
        %v751 = vadd.f32 0.0, %v750
        %752 = vmatprep.mubr.f32.mxu0 %v453
        %753 = vmatmul.mubr.f32.gmra.mrb[0].mxu0 %v452
        %v754 = vpop.f32.mrb[0].mxu0
        %v755 = vadd.f32 0.0, %v754
        %v756 = vpop.f32.mrb[0].mxu0
        %v757 = vadd.f32 0.0, %v756
        %758 = vmatprep.mubr.f32.mxu0 %v455
        %759 = vmatmul.mubr.f32.gmra.mrb[0].mxu0 %v454
        %v760 = vpop.f32.mrb[0].mxu0
        %v761 = vadd.f32 0.0, %v760
        %v762 = vpop.f32.mrb[0].mxu0
        %v763 = vadd.f32 0.0, %v762
        %764 = vmatprep.mubr.f32.mxu0 %v457
        %765 = vmatmul.mubr.f32.gmra.mrb[0].mxu0 %v456
        %v766 = vpop.f32.mrb[0].mxu0
        %v767 = vadd.f32 0.0, %v766
        %v768 = vpop.f32.mrb[0].mxu0
        %v769 = vadd.f32 0.0, %v768
        %770 = vmatprep.mubr.f32.mxu0 %v459
        %771 = vmatmul.mubr.f32.gmra.mrb[0].mxu0 %v458
        %v772 = vpop.f32.mrb[0].mxu0
        %v773 = vadd.f32 0.0, %v772
        %v774 = vpop.f32.mrb[0].mxu0
        %v775 = vadd.f32 0.0, %v774
        %776 = vmatprep.mubr.f32.mxu0 %v461
        %777 = vmatmul.mubr.f32.gmra.mrb[0].mxu0 %v460
        %v778 = vpop.f32.mrb[0].mxu0
        %v779 = vadd.f32 0.0, %v778
        %v780 = vpop.f32.mrb[0].mxu0
        %v781 = vadd.f32 0.0, %v780
        %782 = vmatprep.mubr.f32.mxu0 %v463
        %783 = vmatmul.mubr.f32.gmra.mrb[0].mxu0 %v462
        %v784 = vpop.f32.mrb[0].mxu0
        %v785 = vadd.f32 0.0, %v784
        %v786 = vpop.f32.mrb[0].mxu0
        %v787 = vadd.f32 0.0, %v786
        %788 = vmatprep.mubr.f32.mxu0 %v465
        %789 = vmatmul.mubr.f32.gmra.mrb[0].mxu0 %v464
        %v790 = vpop.f32.mrb[0].mxu0
        %v791 = vadd.f32 0.0, %v790
        %v792 = vpop.f32.mrb[0].mxu0
        %v793 = vadd.f32 0.0, %v792
        %794 = vmatprep.mubr.f32.mxu0 %v467
        %795 = vmatmul.mubr.f32.gmra.mrb[0].mxu0 %v466
        %v796 = vpop.f32.mrb[0].mxu0
        %v797 = vadd.f32 0.0, %v796
        %v798 = vpop.f32.mrb[0].mxu0
        %v799 = vadd.f32 0.0, %v798
        %800 = vmatprep.mubr.f32.mxu0 %v469
        %801 = vmatmul.mubr.f32.gmra.mrb[0].mxu0 %v468
        %v802 = vpop.f32.mrb[0].mxu0
        %v803 = vadd.f32 0.0, %v802
        %v804 = vpop.f32.mrb[0].mxu0
        %v805 = vadd.f32 0.0, %v804
        %806 = vmatprep.mubr.f32.mxu0 %v471
        %807 = vmatmul.mubr.f32.gmra.mrb[0].mxu0 %v470
        %v808 = vpop.f32.mrb[0].mxu0
        %v809 = vadd.f32 0.0, %v808
        %v810 = vpop.f32.mrb[0].mxu0
        %v811 = vadd.f32 0.0, %v810
        %812 = vmatprep.mubr.f32.mxu0 %v473
        %813 = vmatmul.mubr.f32.gmra.mrb[0].mxu0 %v472
        %v814 = vpop.f32.mrb[0].mxu0
        %v815 = vadd.f32 0.0, %v814
        %v816 = vpop.f32.mrb[0].mxu0
        %v817 = vadd.f32 0.0, %v816
        %818 = vmatprep.mubr.f32.mxu0 %v475
        %819 = vmatmul.mubr.f32.gmra.mrb[0].mxu0 %v474
        %v820 = vpop.f32.mrb[0].mxu0
        %v821 = vadd.f32 0.0, %v820
        %v822 = vpop.f32.mrb[0].mxu0
        %v823 = vadd.f32 0.0, %v822
        %824 = vmatprep.mubr.f32.mxu0 %v477
        %825 = vmatmul.mubr.f32.gmra.mrb[0].mxu0 %v476
        %v826 = vpop.f32.mrb[0].mxu0
        %v827 = vadd.f32 0.0, %v826
        %v828 = vpop.f32.mrb[0].mxu0
        %v829 = vadd.f32 0.0, %v828
        %830 = vdwg.mxu0
        %831 = vmatprep.subr.mxu0 0.0
        %832 = vmatpush1.msra.mxu0 %v480
        %833 = vmatprep.subr.mxu0 0.0
        %834 = vmatpush1.msra.mxu0 %v483
        %835 = vmatprep.subr.mxu0 0.0
        %836 = vmatpush1.msra.mxu0 %v486
        %837 = vmatprep.subr.mxu0 0.0
        %838 = vmatpush1.msra.mxu0 %v489
        %839 = vmatprep.subr.mxu0 0.0
        %840 = vmatpush1.msra.mxu0 %v492
        %841 = vmatprep.subr.mxu0 0.0
        %842 = vmatpush1.msra.mxu0 %v495
        %843 = vmatprep.subr.mxu0 0.0
        %844 = vmatpush1.msra.mxu0 %v498
        %845 = vmatprep.subr.mxu0 0.0
        %846 = vmatpush1.msra.mxu0 %v501
        %847 = vmatprep.subr.mxu0 0.0
        %848 = vmatpush1.msra.mxu0 %v504
        %849 = vmatprep.subr.mxu0 0.0
        %850 = vmatpush1.msra.mxu0 %v507
        %851 = vmatprep.subr.mxu0 0.0
        %852 = vmatpush1.msra.mxu0 %v510
        %853 = vmatprep.subr.mxu0 0.0
        %854 = vmatpush1.msra.mxu0 %v513
        %855 = vmatprep.subr.mxu0 0.0
        %856 = vmatpush1.msra.mxu0 %v516
        %857 = vmatprep.subr.mxu0 0.0
        %858 = vmatpush1.msra.mxu0 %v519
        %859 = vmatprep.subr.mxu0 0.0
        %860 = vmatpush1.msra.mxu0 %v522
        %861 = vmatprep.subr.mxu0 0.0
        %862 = vmatpush1.msra.mxu0 %v525
        %863 = vmatprep.subr.mxu0 0.0
        %864 = vmatpush1.msra.mxu0 %v528
        %865 = vmatprep.subr.mxu0 0.0
        %866 = vmatpush1.msra.mxu0 %v531
        %867 = vmatprep.subr.mxu0 0.0
        %868 = vmatpush1.msra.mxu0 %v534
        %869 = vmatprep.subr.mxu0 0.0
        %870 = vmatpush1.msra.mxu0 %v537
        %871 = vmatprep.subr.mxu0 0.0
        %872 = vmatpush1.msra.mxu0 %v540
        %873 = vmatprep.subr.mxu0 0.0
        %874 = vmatpush1.msra.mxu0 %v543
        %875 = vmatprep.subr.mxu0 0.0
        %876 = vmatpush1.msra.mxu0 %v546
        %877 = vmatprep.subr.mxu0 0.0
        %878 = vmatpush1.msra.mxu0 %v549
        %879 = vmatprep.subr.mxu0 0.0
        %880 = vmatpush1.msra.mxu0 %v552
        %881 = vmatprep.subr.mxu0 0.0
        %882 = vmatpush1.msra.mxu0 %v555
        %883 = vmatprep.subr.mxu0 0.0
        %884 = vmatpush1.msra.mxu0 %v558
        %885 = vmatprep.subr.mxu0 0.0
        %886 = vmatpush1.msra.mxu0 %v561
        %887 = vmatprep.subr.mxu0 0.0
        %888 = vmatpush1.msra.mxu0 %v564
        %889 = vmatprep.subr.mxu0 0.0
        %890 = vmatpush1.msra.mxu0 %v567
        %891 = vmatprep.subr.mxu0 0.0
        %892 = vmatpush1.msra.mxu0 %v570
        %893 = vmatprep.subr.mxu0 0.0
        %894 = vmatpush1.msra.mxu0 %v573
        %895 = vmatprep.mubr.f32.mxu0 %v415
        %896 = vmatmul.mubr.f32.gmra.mrb[0].mxu0 %v414
        %v897 = vpop.f32.mrb[0].mxu0
        %v898 = vadd.f32 0.0, %v897
        %v899 = vpop.f32.mrb[0].mxu0
        %900 = vmatprep.mubr.f32.mxu0 %v417
        %901 = vmatmul.mubr.f32.gmra.mrb[0].mxu0 %v416
        %v902 = vpop.f32.mrb[0].mxu0
        %v903 = vadd.f32 0.0, %v902
        %v904 = vpop.f32.mrb[0].mxu0
        %905 = vmatprep.mubr.f32.mxu0 %v419
        %906 = vmatmul.mubr.f32.gmra.mrb[0].mxu0 %v418
        %v907 = vpop.f32.mrb[0].mxu0
        %v908 = vadd.f32 0.0, %v907
        %v909 = vpop.f32.mrb[0].mxu0
        %910 = vmatprep.mubr.f32.mxu0 %v421
        %911 = vmatmul.mubr.f32.gmra.mrb[0].mxu0 %v420
        %v912 = vpop.f32.mrb[0].mxu0
        %v913 = vadd.f32 0.0, %v912
        %v914 = vpop.f32.mrb[0].mxu0
        %915 = vmatprep.mubr.f32.mxu0 %v423
        %916 = vmatmul.mubr.f32.gmra.mrb[0].mxu0 %v422
        %v917 = vpop.f32.mrb[0].mxu0
        %v918 = vadd.f32 0.0, %v917
        %v919 = vpop.f32.mrb[0].mxu0
        %920 = vmatprep.mubr.f32.mxu0 %v425
        %921 = vmatmul.mubr.f32.gmra.mrb[0].mxu0 %v424
        %v922 = vpop.f32.mrb[0].mxu0
        %v923 = vadd.f32 0.0, %v922
        %v924 = vpop.f32.mrb[0].mxu0
        %925 = vmatprep.mubr.f32.mxu0 %v427
        %926 = vmatmul.mubr.f32.gmra.mrb[0].mxu0 %v426
        %v927 = vpop.f32.mrb[0].mxu0
        %v928 = vadd.f32 0.0, %v927
        %v929 = vpop.f32.mrb[0].mxu0
        %930 = vmatprep.mubr.f32.mxu0 %v429
        %931 = vmatmul.mubr.f32.gmra.mrb[0].mxu0 %v428
        %v932 = vpop.f32.mrb[0].mxu0
        %v933 = vadd.f32 0.0, %v932
        %v934 = vpop.f32.mrb[0].mxu0
        %935 = vmatprep.mubr.f32.mxu0 %v431
        %936 = vmatmul.mubr.f32.gmra.mrb[0].mxu0 %v430
        %v937 = vpop.f32.mrb[0].mxu0
        %v938 = vadd.f32 0.0, %v937
        %v939 = vpop.f32.mrb[0].mxu0
        %940 = vmatprep.mubr.f32.mxu0 %v433
        %941 = vmatmul.mubr.f32.gmra.mrb[0].mxu0 %v432
        %v942 = vpop.f32.mrb[0].mxu0
        %v943 = vadd.f32 0.0, %v942
        %v944 = vpop.f32.mrb[0].mxu0
        %945 = vmatprep.mubr.f32.mxu0 %v435
        %946 = vmatmul.mubr.f32.gmra.mrb[0].mxu0 %v434
        %v947 = vpop.f32.mrb[0].mxu0
        %v948 = vadd.f32 0.0, %v947
        %v949 = vpop.f32.mrb[0].mxu0
        %950 = vmatprep.mubr.f32.mxu0 %v437
        %951 = vmatmul.mubr.f32.gmra.mrb[0].mxu0 %v436
        %v952 = vpop.f32.mrb[0].mxu0
        %v953 = vadd.f32 0.0, %v952
        %v954 = vpop.f32.mrb[0].mxu0
        %955 = vmatprep.mubr.f32.mxu0 %v439
        %956 = vmatmul.mubr.f32.gmra.mrb[0].mxu0 %v438
        %v957 = vpop.f32.mrb[0].mxu0
        %v958 = vadd.f32 0.0, %v957
        %v959 = vpop.f32.mrb[0].mxu0
        %960 = vmatprep.mubr.f32.mxu0 %v441
        %961 = vmatmul.mubr.f32.gmra.mrb[0].mxu0 %v440
        %v962 = vpop.f32.mrb[0].mxu0
        %v963 = vadd.f32 0.0, %v962
        %v964 = vpop.f32.mrb[0].mxu0
        %965 = vmatprep.mubr.f32.mxu0 %v443
        %966 = vmatmul.mubr.f32.gmra.mrb[0].mxu0 %v442
        %v967 = vpop.f32.mrb[0].mxu0
        %v968 = vadd.f32 0.0, %v967
        %v969 = vpop.f32.mrb[0].mxu0
        %970 = vmatprep.mubr.f32.mxu0 %v445
        %971 = vmatmul.mubr.f32.gmra.mrb[0].mxu0 %v444
        %v972 = vpop.f32.mrb[0].mxu0
        %v973 = vadd.f32 0.0, %v972
        %v974 = vpop.f32.mrb[0].mxu0
        %975 = vmatprep.mubr.f32.mxu0 %v447
        %976 = vmatmul.mubr.f32.gmra.mrb[0].mxu0 %v446
        %v977 = vpop.f32.mrb[0].mxu0
        %v978 = vadd.f32 0.0, %v977
        %v979 = vpop.f32.mrb[0].mxu0
        %980 = vmatprep.mubr.f32.mxu0 %v449
        %981 = vmatmul.mubr.f32.gmra.mrb[0].mxu0 %v448
        %v982 = vpop.f32.mrb[0].mxu0
        %v983 = vadd.f32 0.0, %v982
        %v984 = vpop.f32.mrb[0].mxu0
        %985 = vmatprep.mubr.f32.mxu0 %v451
        %986 = vmatmul.mubr.f32.gmra.mrb[0].mxu0 %v450
        %v987 = vpop.f32.mrb[0].mxu0
        %v988 = vadd.f32 0.0, %v987
        %v989 = vpop.f32.mrb[0].mxu0
        %990 = vmatprep.mubr.f32.mxu0 %v453
        %991 = vmatmul.mubr.f32.gmra.mrb[0].mxu0 %v452
        %v992 = vpop.f32.mrb[0].mxu0
        %v993 = vadd.f32 0.0, %v992
        %v994 = vpop.f32.mrb[0].mxu0
        %995 = vmatprep.mubr.f32.mxu0 %v455
        %996 = vmatmul.mubr.f32.gmra.mrb[0].mxu0 %v454
        %v997 = vpop.f32.mrb[0].mxu0
        %v998 = vadd.f32 0.0, %v997
        %v999 = vpop.f32.mrb[0].mxu0
        %1000 = vmatprep.mubr.f32.mxu0 %v457
        %1001 = vmatmul.mubr.f32.gmra.mrb[0].mxu0 %v456
        %v1002 = vpop.f32.mrb[0].mxu0
        %v1003 = vadd.f32 0.0, %v1002
        %v1004 = vpop.f32.mrb[0].mxu0
        %1005 = vmatprep.mubr.f32.mxu0 %v459
        %1006 = vmatmul.mubr.f32.gmra.mrb[0].mxu0 %v458
        %v1007 = vpop.f32.mrb[0].mxu0
        %v1008 = vadd.f32 0.0, %v1007
        %v1009 = vpop.f32.mrb[0].mxu0
        %1010 = vmatprep.mubr.f32.mxu0 %v461
        %1011 = vmatmul.mubr.f32.gmra.mrb[0].mxu0 %v460
        %v1012 = vpop.f32.mrb[0].mxu0
        %v1013 = vadd.f32 0.0, %v1012
        %v1014 = vpop.f32.mrb[0].mxu0
        %1015 = vmatprep.mubr.f32.mxu0 %v463
        %1016 = vmatmul.mubr.f32.gmra.mrb[0].mxu0 %v462
        %v1017 = vpop.f32.mrb[0].mxu0
        %v1018 = vadd.f32 0.0, %v1017
        %v1019 = vpop.f32.mrb[0].mxu0
        %1020 = vmatprep.mubr.f32.mxu0 %v465
        %1021 = vmatmul.mubr.f32.gmra.mrb[0].mxu0 %v464
        %v1022 = vpop.f32.mrb[0].mxu0
        %v1023 = vadd.f32 0.0, %v1022
        %v1024 = vpop.f32.mrb[0].mxu0
        %1025 = vmatprep.mubr.f32.mxu0 %v467
        %1026 = vmatmul.mubr.f32.gmra.mrb[0].mxu0 %v466
        %v1027 = vpop.f32.mrb[0].mxu0
        %v1028 = vadd.f32 0.0, %v1027
        %v1029 = vpop.f32.mrb[0].mxu0
        %1030 = vmatprep.mubr.f32.mxu0 %v469
        %1031 = vmatmul.mubr.f32.gmra.mrb[0].mxu0 %v468
        %v1032 = vpop.f32.mrb[0].mxu0
        %v1033 = vadd.f32 0.0, %v1032
        %v1034 = vpop.f32.mrb[0].mxu0
        %1035 = vmatprep.mubr.f32.mxu0 %v471
        %1036 = vmatmul.mubr.f32.gmra.mrb[0].mxu0 %v470
        %v1037 = vpop.f32.mrb[0].mxu0
        %v1038 = vadd.f32 0.0, %v1037
        %v1039 = vpop.f32.mrb[0].mxu0
        %1040 = vmatprep.mubr.f32.mxu0 %v473
        %1041 = vmatmul.mubr.f32.gmra.mrb[0].mxu0 %v472
        %v1042 = vpop.f32.mrb[0].mxu0
        %v1043 = vadd.f32 0.0, %v1042
        %v1044 = vpop.f32.mrb[0].mxu0
        %1045 = vmatprep.mubr.f32.mxu0 %v475
        %1046 = vmatmul.mubr.f32.gmra.mrb[0].mxu0 %v474
        %v1047 = vpop.f32.mrb[0].mxu0
        %v1048 = vadd.f32 0.0, %v1047
        %v1049 = vpop.f32.mrb[0].mxu0
        %1050 = vmatprep.mubr.f32.mxu0 %v477
        %1051 = vmatmul.mubr.f32.gmra.mrb[0].mxu0 %v476
        %v1052 = vpop.f32.mrb[0].mxu0
        %v1053 = vadd.f32 0.0, %v1052
        %v1054 = vpop.f32.mrb[0].mxu0
        %1055 = vdwg.mxu0
        %v1056 = vadd.f32 %v318, %v641
        %v1057 = vadd.f32 %v319, %v643
        %v1058 = vadd.f32 %v320, %v898
        %v1059 = vadd.f32 %v321, %v647
        %v1060 = vadd.f32 %v322, %v649
        %v1061 = vadd.f32 %v323, %v903
        %v1062 = vadd.f32 %v324, %v653
        %v1063 = vadd.f32 %v325, %v655
        %v1064 = vadd.f32 %v326, %v908
        %v1065 = vadd.f32 %v327, %v659
        %v1066 = vadd.f32 %v328, %v661
        %v1067 = vadd.f32 %v329, %v913
        %v1068 = vadd.f32 %v330, %v665
        %v1069 = vadd.f32 %v331, %v667
        %v1070 = vadd.f32 %v332, %v918
        %v1071 = vadd.f32 %v333, %v671
        %v1072 = vadd.f32 %v334, %v673
        %v1073 = vadd.f32 %v335, %v923
        %v1074 = vadd.f32 %v336, %v677
        %v1075 = vadd.f32 %v337, %v679
        %v1076 = vadd.f32 %v338, %v928
        %v1077 = vadd.f32 %v339, %v683
        %v1078 = vadd.f32 %v340, %v685
        %v1079 = vadd.f32 %v341, %v933
        %v1080 = vadd.f32 %v342, %v689
        %v1081 = vadd.f32 %v343, %v691
        %v1082 = vadd.f32 %v344, %v938
        %v1083 = vadd.f32 %v345, %v695
        %v1084 = vadd.f32 %v346, %v697
        %v1085 = vadd.f32 %v347, %v943
        %v1086 = vadd.f32 %v348, %v701
        %v1087 = vadd.f32 %v349, %v703
        %v1088 = vadd.f32 %v350, %v948
        %v1089 = vadd.f32 %v351, %v707
        %v1090 = vadd.f32 %v352, %v709
        %v1091 = vadd.f32 %v353, %v953
        %v1092 = vadd.f32 %v354, %v713
        %v1093 = vadd.f32 %v355, %v715
        %v1094 = vadd.f32 %v356, %v958
        %v1095 = vadd.f32 %v357, %v719
        %v1096 = vadd.f32 %v358, %v721
        %v1097 = vadd.f32 %v359, %v963
        %v1098 = vadd.f32 %v360, %v725
        %v1099 = vadd.f32 %v361, %v727
        %v1100 = vadd.f32 %v362, %v968
        %v1101 = vadd.f32 %v363, %v731
        %v1102 = vadd.f32 %v364, %v733
        %v1103 = vadd.f32 %v365, %v973
        %v1104 = vadd.f32 %v366, %v737
        %v1105 = vadd.f32 %v367, %v739
        %v1106 = vadd.f32 %v368, %v978
        %v1107 = vadd.f32 %v369, %v743
        %v1108 = vadd.f32 %v370, %v745
        %v1109 = vadd.f32 %v371, %v983
        %v1110 = vadd.f32 %v372, %v749
        %v1111 = vadd.f32 %v373, %v751
        %v1112 = vadd.f32 %v374, %v988
        %v1113 = vadd.f32 %v375, %v755
        %v1114 = vadd.f32 %v376, %v757
        %v1115 = vadd.f32 %v377, %v993
        %v1116 = vadd.f32 %v378, %v761
        %v1117 = vadd.f32 %v379, %v763
        %v1118 = vadd.f32 %v380, %v998
        %v1119 = vadd.f32 %v381, %v767
        %v1120 = vadd.f32 %v382, %v769
        %v1121 = vadd.f32 %v383, %v1003
        %v1122 = vadd.f32 %v384, %v773
        %v1123 = vadd.f32 %v385, %v775
        %v1124 = vadd.f32 %v386, %v1008
        %v1125 = vadd.f32 %v387, %v779
        %v1126 = vadd.f32 %v388, %v781
        %v1127 = vadd.f32 %v389, %v1013
        %v1128 = vadd.f32 %v390, %v785
        %v1129 = vadd.f32 %v391, %v787
        %v1130 = vadd.f32 %v392, %v1018
        %v1131 = vadd.f32 %v393, %v791
        %v1132 = vadd.f32 %v394, %v793
        %v1133 = vadd.f32 %v395, %v1023
        %v1134 = vadd.f32 %v396, %v797
        %v1135 = vadd.f32 %v397, %v799
        %v1136 = vadd.f32 %v398, %v1028
        %v1137 = vadd.f32 %v399, %v803
        %v1138 = vadd.f32 %v400, %v805
        %v1139 = vadd.f32 %v401, %v1033
        %v1140 = vadd.f32 %v402, %v809
        %v1141 = vadd.f32 %v403, %v811
        %v1142 = vadd.f32 %v404, %v1038
        %v1143 = vadd.f32 %v405, %v815
        %v1144 = vadd.f32 %v406, %v817
        %v1145 = vadd.f32 %v407, %v1043
        %v1146 = vadd.f32 %v408, %v821
        %v1147 = vadd.f32 %v409, %v823
        %v1148 = vadd.f32 %v410, %v1048
        %v1149 = vadd.f32 %v411, %v827
        %v1150 = vadd.f32 %v412, %v829
        %v1151 = vadd.f32 %v413, %v1053
        %1152 = vst [vmem:[#allocation2] sm:$0xff] %v1056
        %1153 = vst [vmem:[#allocation2 + $0x8] sm:$0xff] %v1057
        %1154 = vst [vmem:[#allocation2 + $0x10] sm:$0xff] %v1058
        %1155 = vst [vmem:[#allocation2 + $0x18] sm:$0xff] %v1059
        %1156 = vst [vmem:[#allocation2 + $0x20] sm:$0xff] %v1060
        %1157 = vst [vmem:[#allocation2 + $0x28] sm:$0xff] %v1061
        %1158 = vst [vmem:[#allocation2 + $0x30] sm:$0xff] %v1062
        %1159 = vst [vmem:[#allocation2 + $0x38] sm:$0xff] %v1063
        %1160 = vst [vmem:[#allocation2 + $0x40] sm:$0xff] %v1064
        %1161 = vst [vmem:[#allocation2 + $0x48] sm:$0xff] %v1065
        %1162 = vst [vmem:[#allocation2 + $0x50] sm:$0xff] %v1066
        %1163 = vst [vmem:[#allocation2 + $0x58] sm:$0xff] %v1067
        %1164 = vst [vmem:[#allocation2 + $0x60] sm:$0xff] %v1068
        %1165 = vst [vmem:[#allocation2 + $0x68] sm:$0xff] %v1069
        %1166 = vst [vmem:[#allocation2 + $0x70] sm:$0xff] %v1070
        %1167 = vst [vmem:[#allocation2 + $0x78] sm:$0xff] %v1071
        %1168 = vst [vmem:[#allocation2 + $0x80] sm:$0xff] %v1072
        %1169 = vst [vmem:[#allocation2 + $0x88] sm:$0xff] %v1073
        %1170 = vst [vmem:[#allocation2 + $0x90] sm:$0xff] %v1074
        %1171 = vst [vmem:[#allocation2 + $0x98] sm:$0xff] %v1075
        %1172 = vst [vmem:[#allocation2 + $0xa0] sm:$0xff] %v1076
        %1173 = vst [vmem:[#allocation2 + $0xa8] sm:$0xff] %v1077
        %1174 = vst [vmem:[#allocation2 + $0xb0] sm:$0xff] %v1078
        %1175 = vst [vmem:[#allocation2 + $0xb8] sm:$0xff] %v1079
        %1176 = vst [vmem:[#allocation2 + $0xc0] sm:$0xff] %v1080
        %1177 = vst [vmem:[#allocation2 + $0xc8] sm:$0xff] %v1081
        %1178 = vst [vmem:[#allocation2 + $0xd0] sm:$0xff] %v1082
        %1179 = vst [vmem:[#allocation2 + $0xd8] sm:$0xff] %v1083
        %1180 = vst [vmem:[#allocation2 + $0xe0] sm:$0xff] %v1084
        %1181 = vst [vmem:[#allocation2 + $0xe8] sm:$0xff] %v1085
        %1182 = vst [vmem:[#allocation2 + $0xf0] sm:$0xff] %v1086
        %1183 = vst [vmem:[#allocation2 + $0xf8] sm:$0xff] %v1087
        %1184 = vst [vmem:[#allocation2 + $0x100] sm:$0xff] %v1088
        %1185 = vst [vmem:[#allocation2 + $0x108] sm:$0xff] %v1089
        %1186 = vst [vmem:[#allocation2 + $0x110] sm:$0xff] %v1090
        %1187 = vst [vmem:[#allocation2 + $0x118] sm:$0xff] %v1091
        %1188 = vst [vmem:[#allocation2 + $0x120] sm:$0xff] %v1092
        %1189 = vst [vmem:[#allocation2 + $0x128] sm:$0xff] %v1093
        %1190 = vst [vmem:[#allocation2 + $0x130] sm:$0xff] %v1094
        %1191 = vst [vmem:[#allocation2 + $0x138] sm:$0xff] %v1095
        %1192 = vst [vmem:[#allocation2 + $0x140] sm:$0xff] %v1096
        %1193 = vst [vmem:[#allocation2 + $0x148] sm:$0xff] %v1097
        %1194 = vst [vmem:[#allocation2 + $0x150] sm:$0xff] %v1098
        %1195 = vst [vmem:[#allocation2 + $0x158] sm:$0xff] %v1099
        %1196 = vst [vmem:[#allocation2 + $0x160] sm:$0xff] %v1100
        %1197 = vst [vmem:[#allocation2 + $0x168] sm:$0xff] %v1101
        %1198 = vst [vmem:[#allocation2 + $0x170] sm:$0xff] %v1102
        %1199 = vst [vmem:[#allocation2 + $0x178] sm:$0xff] %v1103
        %1200 = vst [vmem:[#allocation2 + $0x180] sm:$0xff] %v1104
        %1201 = vst [vmem:[#allocation2 + $0x188] sm:$0xff] %v1105
        %1202 = vst [vmem:[#allocation2 + $0x190] sm:$0xff] %v1106
        %1203 = vst [vmem:[#allocation2 + $0x198] sm:$0xff] %v1107
        %1204 = vst [vmem:[#allocation2 + $0x1a0] sm:$0xff] %v1108
        %1205 = vst [vmem:[#allocation2 + $0x1a8] sm:$0xff] %v1109
        %1206 = vst [vmem:[#allocation2 + $0x1b0] sm:$0xff] %v1110
        %1207 = vst [vmem:[#allocation2 + $0x1b8] sm:$0xff] %v1111
        %1208 = vst [vmem:[#allocation2 + $0x1c0] sm:$0xff] %v1112
        %1209 = vst [vmem:[#allocation2 + $0x1c8] sm:$0xff] %v1113
        %1210 = vst [vmem:[#allocation2 + $0x1d0] sm:$0xff] %v1114
        %1211 = vst [vmem:[#allocation2 + $0x1d8] sm:$0xff] %v1115
        %1212 = vst [vmem:[#allocation2 + $0x1e0] sm:$0xff] %v1116
        %1213 = vst [vmem:[#allocation2 + $0x1e8] sm:$0xff] %v1117
        %1214 = vst [vmem:[#allocation2 + $0x1f0] sm:$0xff] %v1118
        %1215 = vst [vmem:[#allocation2 + $0x1f8] sm:$0xff] %v1119
        %1216 = vst [vmem:[#allocation2 + $0x200] sm:$0xff] %v1120
        %1217 = vst [vmem:[#allocation2 + $0x208] sm:$0xff] %v1121
        %1218 = vst [vmem:[#allocation2 + $0x210] sm:$0xff] %v1122
        %1219 = vst [vmem:[#allocation2 + $0x218] sm:$0xff] %v1123
        %1220 = vst [vmem:[#allocation2 + $0x220] sm:$0xff] %v1124
        %1221 = vst [vmem:[#allocation2 + $0x228] sm:$0xff] %v1125
        %1222 = vst [vmem:[#allocation2 + $0x230] sm:$0xff] %v1126
        %1223 = vst [vmem:[#allocation2 + $0x238] sm:$0xff] %v1127
        %1224 = vst [vmem:[#allocation2 + $0x240] sm:$0xff] %v1128
        %1225 = vst [vmem:[#allocation2 + $0x248] sm:$0xff] %v1129
        %1226 = vst [vmem:[#allocation2 + $0x250] sm:$0xff] %v1130
        %1227 = vst [vmem:[#allocation2 + $0x258] sm:$0xff] %v1131
        %1228 = vst [vmem:[#allocation2 + $0x260] sm:$0xff] %v1132
        %1229 = vst [vmem:[#allocation2 + $0x268] sm:$0xff] %v1133
        %1230 = vst [vmem:[#allocation2 + $0x270] sm:$0xff] %v1134
        %1231 = vst [vmem:[#allocation2 + $0x278] sm:$0xff] %v1135
        %1232 = vst [vmem:[#allocation2 + $0x280] sm:$0xff] %v1136
        %1233 = vst [vmem:[#allocation2 + $0x288] sm:$0xff] %v1137
        %1234 = vst [vmem:[#allocation2 + $0x290] sm:$0xff] %v1138
        %1235 = vst [vmem:[#allocation2 + $0x298] sm:$0xff] %v1139
        %1236 = vst [vmem:[#allocation2 + $0x2a0] sm:$0xff] %v1140
        %1237 = vst [vmem:[#allocation2 + $0x2a8] sm:$0xff] %v1141
        %1238 = vst [vmem:[#allocation2 + $0x2b0] sm:$0xff] %v1142
        %1239 = vst [vmem:[#allocation2 + $0x2b8] sm:$0xff] %v1143
        %1240 = vst [vmem:[#allocation2 + $0x2c0] sm:$0xff] %v1144
        %1241 = vst [vmem:[#allocation2 + $0x2c8] sm:$0xff] %v1145
        %1242 = vst [vmem:[#allocation2 + $0x2d0] sm:$0xff] %v1146
        %1243 = vst [vmem:[#allocation2 + $0x2d8] sm:$0xff] %v1147
        %1244 = vst [vmem:[#allocation2 + $0x2e0] sm:$0xff] %v1148
        %1245 = vst [vmem:[#allocation2 + $0x2e8] sm:$0xff] %v1149
        %1246 = vst [vmem:[#allocation2 + $0x2f0] sm:$0xff] %v1150
        %1247 = vst [vmem:[#allocation2 + $0x2f8] sm:$0xff] %v1151
        // Predicated region
        $region41: #{attention_forward.3} parent=27 // pred_check
          %p1248 = pneg %p218
        $region42: #{attention_forward.3} parent=27 // pred_check_branch
          %1250 = sbr.rel (%p1248) target = $region44
        $region43: #{attention_forward.3} parent=27 // pred_region
          %v1251 = vld [vmem:[#allocation2] sm:$0xff]
          %v1252 = vld [vmem:[#allocation2 + $0x8] sm:$0xff]
          %v1253 = vld [vmem:[#allocation2 + $0x10] sm:$0xff]
          %v1254 = vld [vmem:[#allocation2 + $0x18] sm:$0xff]
          %v1255 = vld [vmem:[#allocation2 + $0x20] sm:$0xff]
          %v1256 = vld [vmem:[#allocation2 + $0x28] sm:$0xff]
          %v1257 = vld [vmem:[#allocation2 + $0x30] sm:$0xff]
          %v1258 = vld [vmem:[#allocation2 + $0x38] sm:$0xff]
          %v1259 = vld [vmem:[#allocation2 + $0x40] sm:$0xff]
          %v1260 = vld [vmem:[#allocation2 + $0x48] sm:$0xff]
          %v1261 = vld [vmem:[#allocation2 + $0x50] sm:$0xff]
          %v1262 = vld [vmem:[#allocation2 + $0x58] sm:$0xff]
          %v1263 = vld [vmem:[#allocation2 + $0x60] sm:$0xff]
          %v1264 = vld [vmem:[#allocation2 + $0x68] sm:$0xff]
          %v1265 = vld [vmem:[#allocation2 + $0x70] sm:$0xff]
          %v1266 = vld [vmem:[#allocation2 + $0x78] sm:$0xff]
          %v1267 = vld [vmem:[#allocation2 + $0x80] sm:$0xff]
          %v1268 = vld [vmem:[#allocation2 + $0x88] sm:$0xff]
          %v1269 = vld [vmem:[#allocation2 + $0x90] sm:$0xff]
          %v1270 = vld [vmem:[#allocation2 + $0x98] sm:$0xff]
          %v1271 = vld [vmem:[#allocation2 + $0xa0] sm:$0xff]
          %v1272 = vld [vmem:[#allocation2 + $0xa8] sm:$0xff]
          %v1273 = vld [vmem:[#allocation2 + $0xb0] sm:$0xff]
          %v1274 = vld [vmem:[#allocation2 + $0xb8] sm:$0xff]
          %v1275 = vld [vmem:[#allocation2 + $0xc0] sm:$0xff]
          %v1276 = vld [vmem:[#allocation2 + $0xc8] sm:$0xff]
          %v1277 = vld [vmem:[#allocation2 + $0xd0] sm:$0xff]
          %v1278 = vld [vmem:[#allocation2 + $0xd8] sm:$0xff]
          %v1279 = vld [vmem:[#allocation2 + $0xe0] sm:$0xff]
          %v1280 = vld [vmem:[#allocation2 + $0xe8] sm:$0xff]
          %v1281 = vld [vmem:[#allocation2 + $0xf0] sm:$0xff]
          %v1282 = vld [vmem:[#allocation2 + $0xf8] sm:$0xff]
          %v1283 = vld [vmem:[#allocation2 + $0x100] sm:$0xff]
          %v1284 = vld [vmem:[#allocation2 + $0x108] sm:$0xff]
          %v1285 = vld [vmem:[#allocation2 + $0x110] sm:$0xff]
          %v1286 = vld [vmem:[#allocation2 + $0x118] sm:$0xff]
          %v1287 = vld [vmem:[#allocation2 + $0x120] sm:$0xff]
          %v1288 = vld [vmem:[#allocation2 + $0x128] sm:$0xff]
          %v1289 = vld [vmem:[#allocation2 + $0x130] sm:$0xff]
          %v1290 = vld [vmem:[#allocation2 + $0x138] sm:$0xff]
          %v1291 = vld [vmem:[#allocation2 + $0x140] sm:$0xff]
          %v1292 = vld [vmem:[#allocation2 + $0x148] sm:$0xff]
          %v1293 = vld [vmem:[#allocation2 + $0x150] sm:$0xff]
          %v1294 = vld [vmem:[#allocation2 + $0x158] sm:$0xff]
          %v1295 = vld [vmem:[#allocation2 + $0x160] sm:$0xff]
          %v1296 = vld [vmem:[#allocation2 + $0x168] sm:$0xff]
          %v1297 = vld [vmem:[#allocation2 + $0x170] sm:$0xff]
          %v1298 = vld [vmem:[#allocation2 + $0x178] sm:$0xff]
          %v1299 = vld [vmem:[#allocation2 + $0x180] sm:$0xff]
          %v1300 = vld [vmem:[#allocation2 + $0x188] sm:$0xff]
          %v1301 = vld [vmem:[#allocation2 + $0x190] sm:$0xff]
          %v1302 = vld [vmem:[#allocation2 + $0x198] sm:$0xff]
          %v1303 = vld [vmem:[#allocation2 + $0x1a0] sm:$0xff]
          %v1304 = vld [vmem:[#allocation2 + $0x1a8] sm:$0xff]
          %v1305 = vld [vmem:[#allocation2 + $0x1b0] sm:$0xff]
          %v1306 = vld [vmem:[#allocation2 + $0x1b8] sm:$0xff]
          %v1307 = vld [vmem:[#allocation2 + $0x1c0] sm:$0xff]
          %v1308 = vld [vmem:[#allocation2 + $0x1c8] sm:$0xff]
          %v1309 = vld [vmem:[#allocation2 + $0x1d0] sm:$0xff]
          %v1310 = vld [vmem:[#allocation2 + $0x1d8] sm:$0xff]
          %v1311 = vld [vmem:[#allocation2 + $0x1e0] sm:$0xff]
          %v1312 = vld [vmem:[#allocation2 + $0x1e8] sm:$0xff]
          %v1313 = vld [vmem:[#allocation2 + $0x1f0] sm:$0xff]
          %v1314 = vld [vmem:[#allocation2 + $0x1f8] sm:$0xff]
          %v1315 = vld [vmem:[#allocation2 + $0x200] sm:$0xff]
          %v1316 = vld [vmem:[#allocation2 + $0x208] sm:$0xff]
          %v1317 = vld [vmem:[#allocation2 + $0x210] sm:$0xff]
          %v1318 = vld [vmem:[#allocation2 + $0x218] sm:$0xff]
          %v1319 = vld [vmem:[#allocation2 + $0x220] sm:$0xff]
          %v1320 = vld [vmem:[#allocation2 + $0x228] sm:$0xff]
          %v1321 = vld [vmem:[#allocation2 + $0x230] sm:$0xff]
          %v1322 = vld [vmem:[#allocation2 + $0x238] sm:$0xff]
          %v1323 = vld [vmem:[#allocation2 + $0x240] sm:$0xff]
          %v1324 = vld [vmem:[#allocation2 + $0x248] sm:$0xff]
          %v1325 = vld [vmem:[#allocation2 + $0x250] sm:$0xff]
          %v1326 = vld [vmem:[#allocation2 + $0x258] sm:$0xff]
          %v1327 = vld [vmem:[#allocation2 + $0x260] sm:$0xff]
          %v1328 = vld [vmem:[#allocation2 + $0x268] sm:$0xff]
          %v1329 = vld [vmem:[#allocation2 + $0x270] sm:$0xff]
          %v1330 = vld [vmem:[#allocation2 + $0x278] sm:$0xff]
          %v1331 = vld [vmem:[#allocation2 + $0x280] sm:$0xff]
          %v1332 = vld [vmem:[#allocation2 + $0x288] sm:$0xff]
          %v1333 = vld [vmem:[#allocation2 + $0x290] sm:$0xff]
          %v1334 = vld [vmem:[#allocation2 + $0x298] sm:$0xff]
          %v1335 = vld [vmem:[#allocation2 + $0x2a0] sm:$0xff]
          %v1336 = vld [vmem:[#allocation2 + $0x2a8] sm:$0xff]
          %v1337 = vld [vmem:[#allocation2 + $0x2b0] sm:$0xff]
          %v1338 = vld [vmem:[#allocation2 + $0x2b8] sm:$0xff]
          %v1339 = vld [vmem:[#allocation2 + $0x2c0] sm:$0xff]
          %v1340 = vld [vmem:[#allocation2 + $0x2c8] sm:$0xff]
          %v1341 = vld [vmem:[#allocation2 + $0x2d0] sm:$0xff]
          %v1342 = vld [vmem:[#allocation2 + $0x2d8] sm:$0xff]
          %v1343 = vld [vmem:[#allocation2 + $0x2e0] sm:$0xff]
          %v1344 = vld [vmem:[#allocation2 + $0x2e8] sm:$0xff]
          %v1345 = vld [vmem:[#allocation2 + $0x2f0] sm:$0xff]
          %v1346 = vld [vmem:[#allocation2 + $0x2f8] sm:$0xff]
          %1347 = vst [vmem:[%s211] sm:$0xff] %v1251
          %1348 = vst [vmem:[%s211 + $0x8] sm:$0xff] %v1252
          %1349 = vst [vmem:[%s211 + $0x10] sm:$0xff] %v1253
          %1350 = vst [vmem:[%s211 + $0x18] sm:$0xff] %v1254
          %1351 = vst [vmem:[%s211 + $0x20] sm:$0xff] %v1255
          %1352 = vst [vmem:[%s211 + $0x28] sm:$0xff] %v1256
          %1353 = vst [vmem:[%s211 + $0x30] sm:$0xff] %v1257
          %1354 = vst [vmem:[%s211 + $0x38] sm:$0xff] %v1258
          %1355 = vst [vmem:[%s211 + $0x40] sm:$0xff] %v1259
          %1356 = vst [vmem:[%s211 + $0x48] sm:$0xff] %v1260
          %1357 = vst [vmem:[%s211 + $0x50] sm:$0xff] %v1261
          %1358 = vst [vmem:[%s211 + $0x58] sm:$0xff] %v1262
          %1359 = vst [vmem:[%s211 + $0x60] sm:$0xff] %v1263
          %1360 = vst [vmem:[%s211 + $0x68] sm:$0xff] %v1264
          %1361 = vst [vmem:[%s211 + $0x70] sm:$0xff] %v1265
          %1362 = vst [vmem:[%s211 + $0x78] sm:$0xff] %v1266
          %1363 = vst [vmem:[%s211 + $0x80] sm:$0xff] %v1267
          %1364 = vst [vmem:[%s211 + $0x88] sm:$0xff] %v1268
          %1365 = vst [vmem:[%s211 + $0x90] sm:$0xff] %v1269
          %1366 = vst [vmem:[%s211 + $0x98] sm:$0xff] %v1270
          %1367 = vst [vmem:[%s211 + $0xa0] sm:$0xff] %v1271
          %1368 = vst [vmem:[%s211 + $0xa8] sm:$0xff] %v1272
          %1369 = vst [vmem:[%s211 + $0xb0] sm:$0xff] %v1273
          %1370 = vst [vmem:[%s211 + $0xb8] sm:$0xff] %v1274
          %1371 = vst [vmem:[%s211 + $0xc0] sm:$0xff] %v1275
          %1372 = vst [vmem:[%s211 + $0xc8] sm:$0xff] %v1276
          %1373 = vst [vmem:[%s211 + $0xd0] sm:$0xff] %v1277
          %1374 = vst [vmem:[%s211 + $0xd8] sm:$0xff] %v1278
          %1375 = vst [vmem:[%s211 + $0xe0] sm:$0xff] %v1279
          %1376 = vst [vmem:[%s211 + $0xe8] sm:$0xff] %v1280
          %1377 = vst [vmem:[%s211 + $0xf0] sm:$0xff] %v1281
          %1378 = vst [vmem:[%s211 + $0xf8] sm:$0xff] %v1282
          %1379 = vst [vmem:[%s211 + $0x100] sm:$0xff] %v1283
          %1380 = vst [vmem:[%s211 + $0x108] sm:$0xff] %v1284
          %1381 = vst [vmem:[%s211 + $0x110] sm:$0xff] %v1285
          %1382 = vst [vmem:[%s211 + $0x118] sm:$0xff] %v1286
          %1383 = vst [vmem:[%s211 + $0x120] sm:$0xff] %v1287
          %1384 = vst [vmem:[%s211 + $0x128] sm:$0xff] %v1288
          %1385 = vst [vmem:[%s211 + $0x130] sm:$0xff] %v1289
          %1386 = vst [vmem:[%s211 + $0x138] sm:$0xff] %v1290
          %1387 = vst [vmem:[%s211 + $0x140] sm:$0xff] %v1291
          %1388 = vst [vmem:[%s211 + $0x148] sm:$0xff] %v1292
          %1389 = vst [vmem:[%s211 + $0x150] sm:$0xff] %v1293
          %1390 = vst [vmem:[%s211 + $0x158] sm:$0xff] %v1294
          %1391 = vst [vmem:[%s211 + $0x160] sm:$0xff] %v1295
          %1392 = vst [vmem:[%s211 + $0x168] sm:$0xff] %v1296
          %1393 = vst [vmem:[%s211 + $0x170] sm:$0xff] %v1297
          %1394 = vst [vmem:[%s211 + $0x178] sm:$0xff] %v1298
          %1395 = vst [vmem:[%s211 + $0x180] sm:$0xff] %v1299
          %1396 = vst [vmem:[%s211 + $0x188] sm:$0xff] %v1300
          %1397 = vst [vmem:[%s211 + $0x190] sm:$0xff] %v1301
          %1398 = vst [vmem:[%s211 + $0x198] sm:$0xff] %v1302
          %1399 = vst [vmem:[%s211 + $0x1a0] sm:$0xff] %v1303
          %1400 = vst [vmem:[%s211 + $0x1a8] sm:$0xff] %v1304
          %1401 = vst [vmem:[%s211 + $0x1b0] sm:$0xff] %v1305
          %1402 = vst [vmem:[%s211 + $0x1b8] sm:$0xff] %v1306
          %1403 = vst [vmem:[%s211 + $0x1c0] sm:$0xff] %v1307
          %1404 = vst [vmem:[%s211 + $0x1c8] sm:$0xff] %v1308
          %1405 = vst [vmem:[%s211 + $0x1d0] sm:$0xff] %v1309
          %1406 = vst [vmem:[%s211 + $0x1d8] sm:$0xff] %v1310
          %1407 = vst [vmem:[%s211 + $0x1e0] sm:$0xff] %v1311
          %1408 = vst [vmem:[%s211 + $0x1e8] sm:$0xff] %v1312
          %1409 = vst [vmem:[%s211 + $0x1f0] sm:$0xff] %v1313
          %1410 = vst [vmem:[%s211 + $0x1f8] sm:$0xff] %v1314
          %1411 = vst [vmem:[%s211 + $0x200] sm:$0xff] %v1315
          %1412 = vst [vmem:[%s211 + $0x208] sm:$0xff] %v1316
          %1413 = vst [vmem:[%s211 + $0x210] sm:$0xff] %v1317
          %1414 = vst [vmem:[%s211 + $0x218] sm:$0xff] %v1318
          %1415 = vst [vmem:[%s211 + $0x220] sm:$0xff] %v1319
          %1416 = vst [vmem:[%s211 + $0x228] sm:$0xff] %v1320
          %1417 = vst [vmem:[%s211 + $0x230] sm:$0xff] %v1321
          %1418 = vst [vmem:[%s211 + $0x238] sm:$0xff] %v1322
          %1419 = vst [vmem:[%s211 + $0x240] sm:$0xff] %v1323
          %1420 = vst [vmem:[%s211 + $0x248] sm:$0xff] %v1324
          %1421 = vst [vmem:[%s211 + $0x250] sm:$0xff] %v1325
          %1422 = vst [vmem:[%s211 + $0x258] sm:$0xff] %v1326
          %1423 = vst [vmem:[%s211 + $0x260] sm:$0xff] %v1327
          %1424 = vst [vmem:[%s211 + $0x268] sm:$0xff] %v1328
          %1425 = vst [vmem:[%s211 + $0x270] sm:$0xff] %v1329
          %1426 = vst [vmem:[%s211 + $0x278] sm:$0xff] %v1330
          %1427 = vst [vmem:[%s211 + $0x280] sm:$0xff] %v1331
          %1428 = vst [vmem:[%s211 + $0x288] sm:$0xff] %v1332
          %1429 = vst [vmem:[%s211 + $0x290] sm:$0xff] %v1333
          %1430 = vst [vmem:[%s211 + $0x298] sm:$0xff] %v1334
          %1431 = vst [vmem:[%s211 + $0x2a0] sm:$0xff] %v1335
          %1432 = vst [vmem:[%s211 + $0x2a8] sm:$0xff] %v1336
          %1433 = vst [vmem:[%s211 + $0x2b0] sm:$0xff] %v1337
          %1434 = vst [vmem:[%s211 + $0x2b8] sm:$0xff] %v1338
          %1435 = vst [vmem:[%s211 + $0x2c0] sm:$0xff] %v1339
          %1436 = vst [vmem:[%s211 + $0x2c8] sm:$0xff] %v1340
          %1437 = vst [vmem:[%s211 + $0x2d0] sm:$0xff] %v1341
          %1438 = vst [vmem:[%s211 + $0x2d8] sm:$0xff] %v1342
          %1439 = vst [vmem:[%s211 + $0x2e0] sm:$0xff] %v1343
          %1440 = vst [vmem:[%s211 + $0x2e8] sm:$0xff] %v1344
          %1441 = vst [vmem:[%s211 + $0x2f0] sm:$0xff] %v1345
          %1442 = vst [vmem:[%s211 + $0x2f8] sm:$0xff] %v1346
        $region44: #{attention_forward.3} parent=27 // pred_fallthru
          _
        %s1443 = sand.u32 %s102, 1
        %s1444 = sand.u32 %s102, 1
        %s1445 = smul.addr %s1444, 768
        %s1446 = scalar_lea.vmem [#allocation7], %s1445
        // Predicated region
        $region45: #{attention_forward.3} parent=27 // pred_check
          %p1447 = pneg %p112
        $region46: #{attention_forward.3} parent=27 // pred_check_branch
          %1449 = sbr.rel (%p1447) target = $region48
        $region47: #{attention_forward.3} parent=27 // pred_region
          %s1450 = smul.u32 32, %s22
          %s1451 = smul.u32 3, %s23
          %s1452 = smul.addr %s1450, 6
          %s1453 = sadd.s32 %s1451, %s1452
          %s1454 = smul.addr %s1453, 8
          %s1455 = scalar_lea.vmem %s2, %s1454
          // Predicated region
          $region49: #{attention_forward.3} parent=47 // pred_check
            _
          $region50: #{attention_forward.3} parent=47 // pred_check_branch
            %1457 = sbr.rel (0) target = $region52
          $region51: #{attention_forward.3} parent=47 // pred_region
            // Predicated region
            $region53: #{attention_forward.3} parent=51 // pred_check
              _
            $region54: #{attention_forward.3} parent=51 // pred_check_branch
              %1459 = sbr.rel (0) target = $region56
            $region55: #{attention_forward.3} parent=51 // pred_region
              loop: start=0, step=1, limit=1
              $region57: #{attention_forward.3} parent=55 // loop_pre_header
                _
              $region58: #{attention_forward.3} parent=55 // loop_header
                %s1461 = sphi 0, %s1465
                %p1462 = scmp.ge.s32.totalorder %s1461, 1
                %s1466 = sphi %s1446, %s1446
                %s1467 = sphi %s1455, %s1455
              $region59: #{attention_forward.3} parent=55 // loop_header_branch
                %1464 = sbr.rel (%p1462) target = $region63
              $region60: #{attention_forward.3} parent=55 // loop_body
                %v1468 = vld [vmem:[%s1466] sm:$0xff]
                %1469 = vst [vmem:[%s1467] sm:$0xff] %v1468
                %v1470 = vld [vmem:[%s1466 + $0x8] sm:$0xff]
                %1471 = vst [vmem:[%s1467 + $0x8] sm:$0xff] %v1470
                %v1472 = vld [vmem:[%s1466 + $0x10] sm:$0xff]
                %1473 = vst [vmem:[%s1467 + $0x10] sm:$0xff] %v1472
                %v1474 = vld [vmem:[%s1466 + $0x18] sm:$0xff]
                %1475 = vst [vmem:[%s1467 + $0x30] sm:$0xff] %v1474
                %v1476 = vld [vmem:[%s1466 + $0x20] sm:$0xff]
                %1477 = vst [vmem:[%s1467 + $0x38] sm:$0xff] %v1476
                %v1478 = vld [vmem:[%s1466 + $0x28] sm:$0xff]
                %1479 = vst [vmem:[%s1467 + $0x40] sm:$0xff] %v1478
                %v1480 = vld [vmem:[%s1466 + $0x30] sm:$0xff]
                %1481 = vst [vmem:[%s1467 + $0x60] sm:$0xff] %v1480
                %v1482 = vld [vmem:[%s1466 + $0x38] sm:$0xff]
                %1483 = vst [vmem:[%s1467 + $0x68] sm:$0xff] %v1482
                %v1484 = vld [vmem:[%s1466 + $0x40] sm:$0xff]
                %1485 = vst [vmem:[%s1467 + $0x70] sm:$0xff] %v1484
                %v1486 = vld [vmem:[%s1466 + $0x48] sm:$0xff]
                %1487 = vst [vmem:[%s1467 + $0x90] sm:$0xff] %v1486
                %v1488 = vld [vmem:[%s1466 + $0x50] sm:$0xff]
                %1489 = vst [vmem:[%s1467 + $0x98] sm:$0xff] %v1488
                %v1490 = vld [vmem:[%s1466 + $0x58] sm:$0xff]
                %1491 = vst [vmem:[%s1467 + $0xa0] sm:$0xff] %v1490
                %v1492 = vld [vmem:[%s1466 + $0x60] sm:$0xff]
                %1493 = vst [vmem:[%s1467 + $0xc0] sm:$0xff] %v1492
                %v1494 = vld [vmem:[%s1466 + $0x68] sm:$0xff]
                %1495 = vst [vmem:[%s1467 + $0xc8] sm:$0xff] %v1494
                %v1496 = vld [vmem:[%s1466 + $0x70] sm:$0xff]
                %1497 = vst [vmem:[%s1467 + $0xd0] sm:$0xff] %v1496
                %v1498 = vld [vmem:[%s1466 + $0x78] sm:$0xff]
                %1499 = vst [vmem:[%s1467 + $0xf0] sm:$0xff] %v1498
                %v1500 = vld [vmem:[%s1466 + $0x80] sm:$0xff]
                %1501 = vst [vmem:[%s1467 + $0xf8] sm:$0xff] %v1500
                %v1502 = vld [vmem:[%s1466 + $0x88] sm:$0xff]
                %1503 = vst [vmem:[%s1467 + $0x100] sm:$0xff] %v1502
                %v1504 = vld [vmem:[%s1466 + $0x90] sm:$0xff]
                %1505 = vst [vmem:[%s1467 + $0x120] sm:$0xff] %v1504
                %v1506 = vld [vmem:[%s1466 + $0x98] sm:$0xff]
                %1507 = vst [vmem:[%s1467 + $0x128] sm:$0xff] %v1506
                %v1508 = vld [vmem:[%s1466 + $0xa0] sm:$0xff]
                %1509 = vst [vmem:[%s1467 + $0x130] sm:$0xff] %v1508
                %v1510 = vld [vmem:[%s1466 + $0xa8] sm:$0xff]
                %1511 = vst [vmem:[%s1467 + $0x150] sm:$0xff] %v1510
                %v1512 = vld [vmem:[%s1466 + $0xb0] sm:$0xff]
                %1513 = vst [vmem:[%s1467 + $0x158] sm:$0xff] %v1512
                %v1514 = vld [vmem:[%s1466 + $0xb8] sm:$0xff]
                %1515 = vst [vmem:[%s1467 + $0x160] sm:$0xff] %v1514
                %v1516 = vld [vmem:[%s1466 + $0xc0] sm:$0xff]
                %1517 = vst [vmem:[%s1467 + $0x180] sm:$0xff] %v1516
                %v1518 = vld [vmem:[%s1466 + $0xc8] sm:$0xff]
                %1519 = vst [vmem:[%s1467 + $0x188] sm:$0xff] %v1518
                %v1520 = vld [vmem:[%s1466 + $0xd0] sm:$0xff]
                %1521 = vst [vmem:[%s1467 + $0x190] sm:$0xff] %v1520
                %v1522 = vld [vmem:[%s1466 + $0xd8] sm:$0xff]
                %1523 = vst [vmem:[%s1467 + $0x1b0] sm:$0xff] %v1522
                %v1524 = vld [vmem:[%s1466 + $0xe0] sm:$0xff]
                %1525 = vst [vmem:[%s1467 + $0x1b8] sm:$0xff] %v1524
                %v1526 = vld [vmem:[%s1466 + $0xe8] sm:$0xff]
                %1527 = vst [vmem:[%s1467 + $0x1c0] sm:$0xff] %v1526
                %v1528 = vld [vmem:[%s1466 + $0xf0] sm:$0xff]
                %1529 = vst [vmem:[%s1467 + $0x1e0] sm:$0xff] %v1528
                %v1530 = vld [vmem:[%s1466 + $0xf8] sm:$0xff]
                %1531 = vst [vmem:[%s1467 + $0x1e8] sm:$0xff] %v1530
                %v1532 = vld [vmem:[%s1466 + $0x100] sm:$0xff]
                %1533 = vst [vmem:[%s1467 + $0x1f0] sm:$0xff] %v1532
                %v1534 = vld [vmem:[%s1466 + $0x108] sm:$0xff]
                %1535 = vst [vmem:[%s1467 + $0x210] sm:$0xff] %v1534
                %v1536 = vld [vmem:[%s1466 + $0x110] sm:$0xff]
                %1537 = vst [vmem:[%s1467 + $0x218] sm:$0xff] %v1536
                %v1538 = vld [vmem:[%s1466 + $0x118] sm:$0xff]
                %1539 = vst [vmem:[%s1467 + $0x220] sm:$0xff] %v1538
                %v1540 = vld [vmem:[%s1466 + $0x120] sm:$0xff]
                %1541 = vst [vmem:[%s1467 + $0x240] sm:$0xff] %v1540
                %v1542 = vld [vmem:[%s1466 + $0x128] sm:$0xff]
                %1543 = vst [vmem:[%s1467 + $0x248] sm:$0xff] %v1542
                %v1544 = vld [vmem:[%s1466 + $0x130] sm:$0xff]
                %1545 = vst [vmem:[%s1467 + $0x250] sm:$0xff] %v1544
                %v1546 = vld [vmem:[%s1466 + $0x138] sm:$0xff]
                %1547 = vst [vmem:[%s1467 + $0x270] sm:$0xff] %v1546
                %v1548 = vld [vmem:[%s1466 + $0x140] sm:$0xff]
                %1549 = vst [vmem:[%s1467 + $0x278] sm:$0xff] %v1548
                %v1550 = vld [vmem:[%s1466 + $0x148] sm:$0xff]
                %1551 = vst [vmem:[%s1467 + $0x280] sm:$0xff] %v1550
                %v1552 = vld [vmem:[%s1466 + $0x150] sm:$0xff]
                %1553 = vst [vmem:[%s1467 + $0x2a0] sm:$0xff] %v1552
                %v1554 = vld [vmem:[%s1466 + $0x158] sm:$0xff]
                %1555 = vst [vmem:[%s1467 + $0x2a8] sm:$0xff] %v1554
                %v1556 = vld [vmem:[%s1466 + $0x160] sm:$0xff]
                %1557 = vst [vmem:[%s1467 + $0x2b0] sm:$0xff] %v1556
                %v1558 = vld [vmem:[%s1466 + $0x168] sm:$0xff]
                %1559 = vst [vmem:[%s1467 + $0x2d0] sm:$0xff] %v1558
                %v1560 = vld [vmem:[%s1466 + $0x170] sm:$0xff]
                %1561 = vst [vmem:[%s1467 + $0x2d8] sm:$0xff] %v1560
                %v1562 = vld [vmem:[%s1466 + $0x178] sm:$0xff]
                %1563 = vst [vmem:[%s1467 + $0x2e0] sm:$0xff] %v1562
                %v1564 = vld [vmem:[%s1466 + $0x180] sm:$0xff]
                %1565 = vst [vmem:[%s1467 + $0x300] sm:$0xff] %v1564
                %v1566 = vld [vmem:[%s1466 + $0x188] sm:$0xff]
                %1567 = vst [vmem:[%s1467 + $0x308] sm:$0xff] %v1566
                %v1568 = vld [vmem:[%s1466 + $0x190] sm:$0xff]
                %1569 = vst [vmem:[%s1467 + $0x310] sm:$0xff] %v1568
                %v1570 = vld [vmem:[%s1466 + $0x198] sm:$0xff]
                %1571 = vst [vmem:[%s1467 + $0x330] sm:$0xff] %v1570
                %v1572 = vld [vmem:[%s1466 + $0x1a0] sm:$0xff]
                %1573 = vst [vmem:[%s1467 + $0x338] sm:$0xff] %v1572
                %v1574 = vld [vmem:[%s1466 + $0x1a8] sm:$0xff]
                %1575 = vst [vmem:[%s1467 + $0x340] sm:$0xff] %v1574
                %v1576 = vld [vmem:[%s1466 + $0x1b0] sm:$0xff]
                %1577 = vst [vmem:[%s1467 + $0x360] sm:$0xff] %v1576
                %v1578 = vld [vmem:[%s1466 + $0x1b8] sm:$0xff]
                %1579 = vst [vmem:[%s1467 + $0x368] sm:$0xff] %v1578
                %v1580 = vld [vmem:[%s1466 + $0x1c0] sm:$0xff]
                %1581 = vst [vmem:[%s1467 + $0x370] sm:$0xff] %v1580
                %v1582 = vld [vmem:[%s1466 + $0x1c8] sm:$0xff]
                %1583 = vst [vmem:[%s1467 + $0x390] sm:$0xff] %v1582
                %v1584 = vld [vmem:[%s1466 + $0x1d0] sm:$0xff]
                %1585 = vst [vmem:[%s1467 + $0x398] sm:$0xff] %v1584
                %v1586 = vld [vmem:[%s1466 + $0x1d8] sm:$0xff]
                %1587 = vst [vmem:[%s1467 + $0x3a0] sm:$0xff] %v1586
                %v1588 = vld [vmem:[%s1466 + $0x1e0] sm:$0xff]
                %1589 = vst [vmem:[%s1467 + $0x3c0] sm:$0xff] %v1588
                %v1590 = vld [vmem:[%s1466 + $0x1e8] sm:$0xff]
                %1591 = vst [vmem:[%s1467 + $0x3c8] sm:$0xff] %v1590
                %v1592 = vld [vmem:[%s1466 + $0x1f0] sm:$0xff]
                %1593 = vst [vmem:[%s1467 + $0x3d0] sm:$0xff] %v1592
                %v1594 = vld [vmem:[%s1466 + $0x1f8] sm:$0xff]
                %1595 = vst [vmem:[%s1467 + $0x3f0] sm:$0xff] %v1594
                %v1596 = vld [vmem:[%s1466 + $0x200] sm:$0xff]
                %1597 = vst [vmem:[%s1467 + $0x3f8] sm:$0xff] %v1596
                %v1598 = vld [vmem:[%s1466 + $0x208] sm:$0xff]
                %1599 = vst [vmem:[%s1467 + $0x400] sm:$0xff] %v1598
                %v1600 = vld [vmem:[%s1466 + $0x210] sm:$0xff]
                %1601 = vst [vmem:[%s1467 + $0x420] sm:$0xff] %v1600
                %v1602 = vld [vmem:[%s1466 + $0x218] sm:$0xff]
                %1603 = vst [vmem:[%s1467 + $0x428] sm:$0xff] %v1602
                %v1604 = vld [vmem:[%s1466 + $0x220] sm:$0xff]
                %1605 = vst [vmem:[%s1467 + $0x430] sm:$0xff] %v1604
                %v1606 = vld [vmem:[%s1466 + $0x228] sm:$0xff]
                %1607 = vst [vmem:[%s1467 + $0x450] sm:$0xff] %v1606
                %v1608 = vld [vmem:[%s1466 + $0x230] sm:$0xff]
                %1609 = vst [vmem:[%s1467 + $0x458] sm:$0xff] %v1608
                %v1610 = vld [vmem:[%s1466 + $0x238] sm:$0xff]
                %1611 = vst [vmem:[%s1467 + $0x460] sm:$0xff] %v1610
                %v1612 = vld [vmem:[%s1466 + $0x240] sm:$0xff]
                %1613 = vst [vmem:[%s1467 + $0x480] sm:$0xff] %v1612
                %v1614 = vld [vmem:[%s1466 + $0x248] sm:$0xff]
                %1615 = vst [vmem:[%s1467 + $0x488] sm:$0xff] %v1614
                %v1616 = vld [vmem:[%s1466 + $0x250] sm:$0xff]
                %1617 = vst [vmem:[%s1467 + $0x490] sm:$0xff] %v1616
                %v1618 = vld [vmem:[%s1466 + $0x258] sm:$0xff]
                %1619 = vst [vmem:[%s1467 + $0x4b0] sm:$0xff] %v1618
                %v1620 = vld [vmem:[%s1466 + $0x260] sm:$0xff]
                %1621 = vst [vmem:[%s1467 + $0x4b8] sm:$0xff] %v1620
                %v1622 = vld [vmem:[%s1466 + $0x268] sm:$0xff]
                %1623 = vst [vmem:[%s1467 + $0x4c0] sm:$0xff] %v1622
                %v1624 = vld [vmem:[%s1466 + $0x270] sm:$0xff]
                %1625 = vst [vmem:[%s1467 + $0x4e0] sm:$0xff] %v1624
                %v1626 = vld [vmem:[%s1466 + $0x278] sm:$0xff]
                %1627 = vst [vmem:[%s1467 + $0x4e8] sm:$0xff] %v1626
                %v1628 = vld [vmem:[%s1466 + $0x280] sm:$0xff]
                %1629 = vst [vmem:[%s1467 + $0x4f0] sm:$0xff] %v1628
                %v1630 = vld [vmem:[%s1466 + $0x288] sm:$0xff]
                %1631 = vst [vmem:[%s1467 + $0x510] sm:$0xff] %v1630
                %v1632 = vld [vmem:[%s1466 + $0x290] sm:$0xff]
                %1633 = vst [vmem:[%s1467 + $0x518] sm:$0xff] %v1632
                %v1634 = vld [vmem:[%s1466 + $0x298] sm:$0xff]
                %1635 = vst [vmem:[%s1467 + $0x520] sm:$0xff] %v1634
                %v1636 = vld [vmem:[%s1466 + $0x2a0] sm:$0xff]
                %1637 = vst [vmem:[%s1467 + $0x540] sm:$0xff] %v1636
                %v1638 = vld [vmem:[%s1466 + $0x2a8] sm:$0xff]
                %1639 = vst [vmem:[%s1467 + $0x548] sm:$0xff] %v1638
                %v1640 = vld [vmem:[%s1466 + $0x2b0] sm:$0xff]
                %1641 = vst [vmem:[%s1467 + $0x550] sm:$0xff] %v1640
                %v1642 = vld [vmem:[%s1466 + $0x2b8] sm:$0xff]
                %1643 = vst [vmem:[%s1467 + $0x570] sm:$0xff] %v1642
                %v1644 = vld [vmem:[%s1466 + $0x2c0] sm:$0xff]
                %1645 = vst [vmem:[%s1467 + $0x578] sm:$0xff] %v1644
                %v1646 = vld [vmem:[%s1466 + $0x2c8] sm:$0xff]
                %1647 = vst [vmem:[%s1467 + $0x580] sm:$0xff] %v1646
                %v1648 = vld [vmem:[%s1466 + $0x2d0] sm:$0xff]
                %1649 = vst [vmem:[%s1467 + $0x5a0] sm:$0xff] %v1648
                %v1650 = vld [vmem:[%s1466 + $0x2d8] sm:$0xff]
                %1651 = vst [vmem:[%s1467 + $0x5a8] sm:$0xff] %v1650
                %v1652 = vld [vmem:[%s1466 + $0x2e0] sm:$0xff]
                %1653 = vst [vmem:[%s1467 + $0x5b0] sm:$0xff] %v1652
                %v1654 = vld [vmem:[%s1466 + $0x2e8] sm:$0xff]
                %1655 = vst [vmem:[%s1467 + $0x5d0] sm:$0xff] %v1654
                %v1656 = vld [vmem:[%s1466 + $0x2f0] sm:$0xff]
                %1657 = vst [vmem:[%s1467 + $0x5d8] sm:$0xff] %v1656
                %v1658 = vld [vmem:[%s1466 + $0x2f8] sm:$0xff]
                %1659 = vst [vmem:[%s1467 + $0x5e0] sm:$0xff] %v1658
              $region61: #{attention_forward.3} parent=55 // loop_footer
                %s1465 = sadd.s32 1, %s1461
              $region62: #{attention_forward.3} parent=55 // loop_footer_branch
                %1460 = sbr.rel target = $region58
              $region63: #{attention_forward.3} parent=55 // loop_exit
                _
            $region56: #{attention_forward.3} parent=51 // pred_fallthru
              _
            // Predicated region
            $region64: #{attention_forward.3} parent=51 // pred_check
              _
            $region65: #{attention_forward.3} parent=51 // pred_check_branch
              %1661 = sbr.rel target = $region67
            $region66: #{attention_forward.3} parent=51 // pred_region
              _
            $region67: #{attention_forward.3} parent=51 // pred_fallthru
              _
          $region52: #{attention_forward.3} parent=47 // pred_fallthru
            _
          %1662 = vnop
        $region48: #{attention_forward.3} parent=27 // pred_fallthru
          _
      $region28: #{attention_forward.3} parent=5 // pred_fallthru
        _
      %p1663 = scmp.le.s32.totalorder 2, %s12
      // Predicated region
      $region68: #{attention_forward.3} parent=5 // pred_check
        %p1664 = pneg %p1663
      $region69: #{attention_forward.3} parent=5 // pred_check_branch
        %1666 = sbr.rel (%p1664) target = $region71
      $region70: #{attention_forward.3} parent=5 // pred_region
        %s1667 = ssub.s32 %s12, 2
        // Predicated region
        $region72: #{attention_forward.3} parent=70 // pred_check
          %p1668 = pneg %p118
        $region73: #{attention_forward.3} parent=70 // pred_check_branch
          %1670 = sbr.rel (%p1668) target = $region75
        $region74: #{attention_forward.3} parent=70 // pred_region
          %s1671 = sand.u32 %s103, 1
          %s1672 = sand.u32 %s103, 1
          %s1673 = smul.addr %s1672, 768
          %s1674 = scalar_lea.vmem [#allocation7], %s1673
        $region75: #{attention_forward.3} parent=70 // pred_fallthru
          _
      $region71: #{attention_forward.3} parent=5 // pred_fallthru
        _
    $region6: #{attention_forward.3} parent=1 // loop_footer
      %s16 = sadd.s32 1, %s12
    $region7: #{attention_forward.3} parent=1 // loop_footer_branch
      %11 = sbr.rel target = $region3
    $region8: #{attention_forward.3} parent=1 // loop_exit
      _
    %1675 = vsyncpa [#allocation4], 1
    %s1676 = scalar_lea.sflag [#allocation4], 1
    %1677 = vsyncpa %s1676, 1
    %1678 = vsyncpa [#allocation6], 1
    %s1679 = scalar_lea.sflag [#allocation6], 1
    %1680 = vsyncpa %s1679, 1

</llo_original>
